<compile_context>
chip_gen: v6e
topology: v6e:2x2x1
jax: 0.10.0
libtpu: 0.0.40
codegen_flags: <defaults>
</compile_context>

<pallas_src>
import functools
import math

import jax
import jax.numpy as jnp
from jax.experimental import pallas as pl
from jax.experimental.pallas import tpu as pltpu

LN_EPS = 1e-5
_VMEM = pl.BlockSpec(memory_space=pltpu.MemorySpace.VMEM)
_SMEM = pl.BlockSpec(memory_space=pltpu.MemorySpace.SMEM)


# ------------------------------ kernel helpers ------------------------------ #

def _dot(a, b):
    return jnp.dot(a, b, preferred_element_type=jnp.float32)


def _layernorm(y, g, b):
    mu = jnp.mean(y, axis=-1, keepdims=True)
    var = jnp.mean((y - mu) ** 2, axis=-1, keepdims=True)
    return (y - mu) * jax.lax.rsqrt(var + LN_EPS) * g + b


def _gelu_exact(y):
    return 0.5 * y * (1.0 + jax.lax.erf(y * (1.0 / math.sqrt(2.0))))


def _softmax(z):
    m = jnp.max(z, axis=-1, keepdims=True)
    e = jnp.exp(z - m)
    return e / jnp.sum(e, axis=-1, keepdims=True)


def _encoder_fwd(x, seg, enc_w, enc_b, enc_g, enc_beta, cls1_w, cls1_b, cls2_w, cls2_b):
    """Fused MarketConditionEncoder: 4 heads merged into one matmul.

    seg is a [64,64] block-diagonal 1/16 matrix so the per-16-feature LayerNorm
    statistics are computed with two MXU dots (no lane concat / reshape).
    """
    y = jnp.maximum(_dot(x, enc_w) + enc_b, 0.0)          # [B, 64]  Linear+ReLU (x4 heads fused)
    mu = _dot(y, seg)                                      # per-segment mean, broadcast back
    var = _dot(y * y, seg) - mu * mu                       # biased variance (LayerNorm default)
    mf = (y - mu) * jax.lax.rsqrt(var + LN_EPS) * enc_g + enc_beta   # market_features [B, 64]
    h = jnp.maximum(_dot(mf, cls1_w) + cls1_b, 0.0)        # regime classifier hidden [B, 32]
    rp = _softmax(_dot(h, cls2_w) + cls2_b)                # regime_probs [B, 4]
    return mf, rp


# ------------------------------ Pallas kernels ------------------------------ #

def switch_kernel(x_ref, w1_ref, b1_ref, w2_ref, b2_ref, o_ref):
    h = jnp.maximum(_dot(x_ref[...], w1_ref[...]) + b1_ref[...], 0.0)
    o_ref[...] = jax.nn.sigmoid(_dot(h, w2_ref[...]) + b2_ref[...])


def dense_gate_kernel(x_ref, seg_ref,
                      enc_w_ref, enc_b_ref, enc_g_ref, enc_beta_ref,
                      cls1_w_ref, cls1_b_ref, cls2_w_ref, cls2_b_ref,
                      l1_wx_ref, l1_wm_ref, l1_wr_ref, l1_b_ref, ln1_g_ref, ln1_b_ref,
                      l2_w_ref, l2_b_ref, ln2_g_ref, ln2_b_ref,
                      l3_w_ref, l3_b_ref, aff_ref,
                      temp_ref,
                      w_ref):
    x = x_ref[...]
    mf, rp = _encoder_fwd(x, seg_ref[...], enc_w_ref[...], enc_b_ref[...], enc_g_ref[...],
                          enc_beta_ref[...], cls1_w_ref[...], cls1_b_ref[...],
                          cls2_w_ref[...], cls2_b_ref[...])
    # gating_input = concat([x, mf, rp]) realised as a sum of row-split matmuls.
    h = _dot(x, l1_wx_ref[...]) + _dot(mf, l1_wm_ref[...]) + _dot(rp, l1_wr_ref[...]) + l1_b_ref[...]
    h = _gelu_exact(_layernorm(h, ln1_g_ref[...], ln1_b_ref[...]))
    h = _gelu_exact(_layernorm(_dot(h, l2_w_ref[...]) + l2_b_ref[...],
                               ln2_g_ref[...], ln2_b_ref[...]))
    logits = _dot(h, l3_w_ref[...]) + l3_b_ref[...] + _dot(rp, aff_ref[...])
    t = jnp.clip(temp_ref[0, 0], 0.1, 5.0)
    w_ref[...] = _softmax(logits / t)


def sparse_gate_kernel(x_ref, seg_ref,
                       enc_w_ref, enc_b_ref, enc_g_ref, enc_beta_ref,
                       cls1_w_ref, cls1_b_ref, cls2_w_ref, cls2_b_ref,
                       ns1_w_ref, ns1_b_ref, ns2_w_ref, ns2_b_ref,
                       l1_wx_ref, l1_wm_ref, l1_wr_ref, l1_b_ref, ln1_g_ref, ln1_b_ref,
                       l2_w_ref, l2_b_ref, ln2_g_ref, ln2_b_ref,
                       l3_w_ref, l3_b_ref, spec_ref,
                       noise_ref,
                       noisy_ref, gates_ref, *, base_noise_std):
    x = x_ref[...]
    mf, rp = _encoder_fwd(x, seg_ref[...], enc_w_ref[...], enc_b_ref[...], enc_g_ref[...],
                          enc_beta_ref[...], cls1_w_ref[...], cls1_b_ref[...],
                          cls2_w_ref[...], cls2_b_ref[...])
    # adaptive noise scale from regime probs (kept entirely in vregs)
    nh = jnp.maximum(_dot(rp, ns1_w_ref[...]) + ns1_b_ref[...], 0.0)
    noise_scale = jax.nn.sigmoid(_dot(nh, ns2_w_ref[...]) + ns2_b_ref[...]) * base_noise_std  # [B,1]
    h = _dot(x, l1_wx_ref[...]) + _dot(mf, l1_wm_ref[...]) + _dot(rp, l1_wr_ref[...]) + l1_b_ref[...]
    h = _gelu_exact(_layernorm(h, ln1_g_ref[...], ln1_b_ref[...]))
    h = _gelu_exact(_layernorm(_dot(h, l2_w_ref[...]) + l2_b_ref[...],
                               ln2_g_ref[...], ln2_b_ref[...]))
    clean = _dot(h, l3_w_ref[...]) + l3_b_ref[...] + _dot(rp, spec_ref[...])
    # TODO(synk): PyTorch's `noise_scale.unsqueeze(1)` broadcasts [B,1]->[B,1,1] against
    # [B,E] (a latent [B,B,E] shape bug); we implement the intended per-sample scaling.
    noisy_ref[...] = clean + noise_ref[...] * noise_scale
    gates_ref[...] = _softmax(clean)          # clean-logit softmax (matches PyTorch aux losses)


# ------------------------------ pallas wrappers ------------------------------ #

def switch_fwd(x, params):
    B = x.shape[0]
    return pl.pallas_call(
        switch_kernel,
        out_shape=jax.ShapeDtypeStruct((B, 1), jnp.float32),
        in_specs=[_VMEM] * 5,
        out_specs=_VMEM,
    )(x, params["sw1_w"], params["sw1_b"], params["sw2_w"], params["sw2_b"])


def dense_gate_fwd(x, P):
    B, E = x.shape[0], P["l3_w"].shape[1]
    args = (x, P["seg"],
            P["enc_w"], P["enc_b"], P["enc_g"], P["enc_beta"],
            P["cls1_w"], P["cls1_b"], P["cls2_w"], P["cls2_b"],
            P["l1_wx"], P["l1_wm"], P["l1_wr"], P["l1_b"], P["ln1_g"], P["ln1_b"],
            P["l2_w"], P["l2_b"], P["ln2_g"], P["ln2_b"],
            P["l3_w"], P["l3_b"], P["affinity"],
            P["temperature"])
    return pl.pallas_call(
        dense_gate_kernel,
        out_shape=jax.ShapeDtypeStruct((B, E), jnp.float32),
        in_specs=[_VMEM] * 23 + [_SMEM],
        out_specs=_VMEM,
    )(*args)


def sparse_gate_fwd(x, P, noise):
    B, E = x.shape[0], P["l3_w"].shape[1]
    args = (x, P["seg"],
            P["enc_w"], P["enc_b"], P["enc_g"], P["enc_beta"],
            P["cls1_w"], P["cls1_b"], P["cls2_w"], P["cls2_b"],
            P["ns1_w"], P["ns1_b"], P["ns2_w"], P["ns2_b"],
            P["l1_wx"], P["l1_wm"], P["l1_wr"], P["l1_b"], P["ln1_g"], P["ln1_b"],
            P["l2_w"], P["l2_b"], P["ln2_g"], P["ln2_b"],
            P["l3_w"], P["l3_b"], P["spec_t"],
            noise)
    return pl.pallas_call(
        functools.partial(sparse_gate_kernel, base_noise_std=1.0),
        out_shape=(jax.ShapeDtypeStruct((B, E), jnp.float32),   # noisy logits
                   jax.ShapeDtypeStruct((B, E), jnp.float32)),  # clean-logit softmax
        in_specs=[_VMEM] * 28,
        out_specs=(_VMEM, _VMEM),
    )(*args)


# ------------------------- model forward (JAX glue) ------------------------- #

def adaptive_gate_fwd(params, x, noise_key, *, k=2, switch_threshold=0.7):
    B = x.shape[0]
    E = params["dense"]["l3_w"].shape[1]

    switch_prob = switch_fwd(x, params)                          # [B, 1]
    any_sparse = jnp.any(switch_prob[:, 0] > switch_threshold)   # use_sparse.any()

    def _sparse_branch(xx):
        # TODO(synk): noise is drawn with jax.random.normal outside the kernel (only on this
        # lax.cond path); an in-kernel pltpu.prng_* Box-Muller would drop one tiny input DMA.
        noise = jax.random.normal(noise_key, (B, E), jnp.float32)
        noisy_logits, gates_softmax = sparse_gate_fwd(xx, params["sparse"], noise)
        topk_logits, topk_idx = jax.lax.top_k(noisy_logits, k)
        topk_w = jax.nn.softmax(topk_logits, axis=-1)
        rows = jnp.arange(B)[:, None]
        weights = jnp.zeros((B, E), jnp.float32).at[rows, topk_idx].set(topk_w)
        # auxiliary load-balancing / importance losses (tiny reductions in plain JAX)
        prob_expert = gates_softmax.mean(axis=0)
        one_hot = jnp.zeros((B, E), jnp.float32).at[rows, topk_idx].set(1.0)
        load_expert = one_hot.mean(axis=0)
        load_loss = E * jnp.sum(prob_expert * load_expert)
        importance = gates_softmax.sum(axis=0)
        importance_loss = jnp.var(importance, ddof=1) / jnp.mean(importance)  # torch.var unbiased
        loss_aux = 0.01 * load_loss + 0.01 * importance_loss
        return weights, topk_idx, loss_aux.astype(jnp.float32)

    def _dense_branch(xx):
        w = dense_gate_fwd(xx, params["dense"])
        _, idx = jax.lax.top_k(w, k)
        return w, idx, jnp.zeros((), jnp.float32)

    weights, idx, loss = jax.lax.cond(any_sparse, _sparse_branch, _dense_branch, x)
    return weights, idx, loss, switch_prob


# --------------------------- deterministic params --------------------------- #

def _linear_init(key, fan_in, fan_out):
    kw, kb = jax.random.split(key)
    bound = 1.0 / math.sqrt(fan_in)
    w = jax.random.uniform(kw, (fan_in, fan_out), jnp.float32, -bound, bound)
    b = jax.random.uniform(kb, (fan_out,), jnp.float32, -bound, bound)
    return w, b


def _segment_mean_matrix(hidden_dim, n_seg=4):
    q = hidden_dim // n_seg
    idx = jnp.arange(hidden_dim) // q
    return (idx[:, None] == idx[None, :]).astype(jnp.float32) / q


def _init_encoder(key, input_dim, hidden_dim=64):
    q = hidden_dim // 4
    keys = jax.random.split(key, 6)
    ws, bs = [], []
    for i in range(4):                       # vol / trend / momentum / regime heads
        w, b = _linear_init(keys[i], input_dim, q)
        ws.append(w)
        bs.append(b)
    enc = {
        "seg": _segment_mean_matrix(hidden_dim),
        "enc_w": jnp.concatenate(ws, axis=1),                       # [D, 64]
        "enc_b": jnp.concatenate(bs).reshape(1, hidden_dim),
        "enc_g": jnp.ones((1, hidden_dim), jnp.float32),
        "enc_beta": jnp.zeros((1, hidden_dim), jnp.float32),
    }
    cls1_w, cls1_b = _linear_init(keys[4], hidden_dim, 32)
    cls2_w, cls2_b = _linear_init(keys[5], 32, 4)
    enc["cls1_w"], enc["cls1_b"] = cls1_w, cls1_b.reshape(1, 32)
    enc["cls2_w"], enc["cls2_b"] = cls2_w, cls2_b.reshape(1, 4)
    return enc


def _split_l1(w, input_dim):
    return w[:input_dim], w[input_dim:input_dim + 64], w[input_dim + 64:]


def _init_dense_gate(key, input_dim, num_experts):
    hidden = max(input_dim, 128)
    total = input_dim + 64 + 4
    k = jax.random.split(key, 5)
    P = dict(_init_encoder(k[0], input_dim))
    l1_w, l1_b = _linear_init(k[1], total, hidden)
    P["l1_wx"], P["l1_wm"], P["l1_wr"] = _split_l1(l1_w, input_dim)
    P["l1_b"] = l1_b.reshape(1, hidden)
    P["ln1_g"], P["ln1_b"] = jnp.ones((1, hidden), jnp.float32), jnp.zeros((1, hidden), jnp.float32)
    l2_w, l2_b = _linear_init(k[2], hidden, hidden)
    P["l2_w"], P["l2_b"] = l2_w, l2_b.reshape(1, hidden)
    P["ln2_g"], P["ln2_b"] = jnp.ones((1, hidden), jnp.float32), jnp.zeros((1, hidden), jnp.float32)
    l3_w, l3_b = _linear_init(k[3], hidden, num_experts)
    P["l3_w"], P["l3_b"] = l3_w, l3_b.reshape(1, num_experts)
    P["affinity"] = jax.random.normal(k[4], (4, num_experts), jnp.float32) * 0.1
    P["temperature"] = jnp.ones((1, 1), jnp.float32)
    return P


def _init_sparse_gate(key, input_dim, num_experts):
    gdim = input_dim + 64 + 4
    k = jax.random.split(key, 7)
    P = dict(_init_encoder(k[0], input_dim))
    l1_w, l1_b = _linear_init(k[1], gdim, gdim * 2)
    P["l1_wx"], P["l1_wm"], P["l1_wr"] = _split_l1(l1_w, input_dim)
    P["l1_b"] = l1_b.reshape(1, gdim * 2)
    P["ln1_g"] = jnp.ones((1, gdim * 2), jnp.float32)
    P["ln1_b"] = jnp.zeros((1, gdim * 2), jnp.float32)
    l2_w, l2_b = _linear_init(k[2], gdim * 2, gdim)
    P["l2_w"], P["l2_b"] = l2_w, l2_b.reshape(1, gdim)
    P["ln2_g"], P["ln2_b"] = jnp.ones((1, gdim), jnp.float32), jnp.zeros((1, gdim), jnp.float32)
    l3_w, l3_b = _linear_init(k[3], gdim, num_experts)
    P["l3_w"], P["l3_b"] = l3_w, l3_b.reshape(1, num_experts)
    ns1_w, ns1_b = _linear_init(k[4], 4, 16)
    ns2_w, ns2_b = _linear_init(k[5], 16, 1)
    P["ns1_w"], P["ns1_b"] = ns1_w, ns1_b.reshape(1, 16)
    P["ns2_w"], P["ns2_b"] = ns2_w, ns2_b.reshape(1, 1)
    P["spec_t"] = (jax.random.normal(k[6], (num_experts, 4), jnp.float32) * 0.1).T   # [4, E]
    return P


def init_adaptive_gate(key, input_dim, num_experts):
    k = jax.random.split(key, 4)
    params = {
        "sparse": _init_sparse_gate(k[0], input_dim, num_experts),
        "dense": _init_dense_gate(k[1], input_dim, num_experts),
    }
    sw1_w, sw1_b = _linear_init(k[2], input_dim, 32)
    sw2_w, sw2_b = _linear_init(k[3], 32, 1)
    params["sw1_w"], params["sw1_b"] = sw1_w, sw1_b.reshape(1, 32)
    params["sw2_w"], params["sw2_b"] = sw2_w, sw2_b.reshape(1, 1)
    return params


# ---------------------------------- main ------------------------------------ #

if __name__ == "__main__":
    B, D, E, K = 2, 32, 8, 2
    key = jax.random.PRNGKey(0)
    pkey, xkey, nkey = jax.random.split(key, 3)

    params = init_adaptive_gate(pkey, D, E)
    x = jax.random.normal(xkey, (B, D), jnp.float32)

    fwd = jax.jit(functools.partial(adaptive_gate_fwd, k=K, switch_threshold=0.7))
    weights, idx, loss, switch_prob = fwd(params, x, nkey)
    jax.block_until_ready((weights, idx, loss, switch_prob))

    assert weights.shape == (B, E) and idx.shape == (B, K) and switch_prob.shape == (B, 1)
    print("KERNEL_OK")
</pallas_src>

<mosaic_0001>
module attributes {stable_mosaic.version = 11 : i64} {
  func.func @switch_kernel(%arg0: memref<2x32xf32, #tpu.memory_space<vmem>>, %arg1: memref<32x32xf32, #tpu.memory_space<vmem>>, %arg2: memref<1x32xf32, #tpu.memory_space<vmem>>, %arg3: memref<32x1xf32, #tpu.memory_space<vmem>>, %arg4: memref<1x1xf32, #tpu.memory_space<vmem>>, %arg5: memref<2x1xf32, #tpu.memory_space<vmem>>) attributes {dimension_semantics = [], scalar_prefetch = 0 : i64, scratch_operands = 0 : i64, tpu.core_type = #tpu.core_type<tc>} {
    %c0 = arith.constant 0 : index
    %c0_0 = arith.constant 0 : index
    %0 = vector.load %arg0[%c0, %c0_0] : memref<2x32xf32, #tpu.memory_space<vmem>>, vector<2x32xf32>
    %c0_1 = arith.constant 0 : index
    %c0_2 = arith.constant 0 : index
    %1 = vector.load %arg1[%c0_1, %c0_2] : memref<32x32xf32, #tpu.memory_space<vmem>>, vector<32x32xf32>
    %cst = arith.constant dense<0.000000e+00> : vector<2x32xf32>
    %2 = tpu.matmul %0, %1, %cst {dimension_numbers = #tpu.dot_dimension_numbers<[1], [0], [0], [1], [0, 0, 1, 1], [], []>} : vector<2x32xf32>, vector<32x32xf32>, vector<2x32xf32> -> vector<2x32xf32>
    %c0_3 = arith.constant 0 : index
    %c0_4 = arith.constant 0 : index
    %3 = vector.load %arg2[%c0_3, %c0_4] : memref<1x32xf32, #tpu.memory_space<vmem>>, vector<1x32xf32>
    %4 = vector.broadcast %3 : vector<1x32xf32> to vector<2x32xf32>
    %5 = arith.addf %2, %4 : vector<2x32xf32>
    %cst_5 = arith.constant 0.000000e+00 : f32
    %6 = vector.broadcast %cst_5 : f32 to vector<2x32xf32>
    %7 = arith.maximumf %5, %6 : vector<2x32xf32>
    %c0_6 = arith.constant 0 : index
    %c0_7 = arith.constant 0 : index
    %8 = vector.load %arg3[%c0_6, %c0_7] : memref<32x1xf32, #tpu.memory_space<vmem>>, vector<32x1xf32>
    %cst_8 = arith.constant dense<0.000000e+00> : vector<2x1xf32>
    %9 = tpu.matmul %7, %8, %cst_8 {dimension_numbers = #tpu.dot_dimension_numbers<[1], [0], [0], [1], [0, 0, 1, 1], [], []>} : vector<2x32xf32>, vector<32x1xf32>, vector<2x1xf32> -> vector<2x1xf32>
    %c0_9 = arith.constant 0 : index
    %c0_10 = arith.constant 0 : index
    %10 = vector.load %arg4[%c0_9, %c0_10] : memref<1x1xf32, #tpu.memory_space<vmem>>, vector<1x1xf32>
    %11 = vector.broadcast %10 : vector<1x1xf32> to vector<2x1xf32>
    %12 = arith.addf %9, %11 : vector<2x1xf32>
    %13 = arith.negf %12 : vector<2x1xf32>
    %14 = math.exp %13 : vector<2x1xf32>
    %cst_11 = arith.constant 1.000000e+00 : f32
    %15 = vector.broadcast %cst_11 : f32 to vector<2x1xf32>
    %16 = arith.addf %15, %14 : vector<2x1xf32>
    %17 = arith.divf %15, %16 : vector<2x1xf32>
    %c0_12 = arith.constant 0 : index
    %c0_13 = arith.constant 0 : index
    %18 = vector.load %arg5[%c0_12, %c0_13] : memref<2x1xf32, #tpu.memory_space<vmem>>, vector<2x1xf32>
    tpu.vector_store %arg5[%c0_12, %c0_13], %17 {strides = array<i32>} : memref<2x1xf32, #tpu.memory_space<vmem>>, vector<2x1xf32>,
    return
  }
}

module attributes {stable_mosaic.version = 11 : i64} {
  func.func @dense_gate_kernel(%arg0: memref<2x32xf32, #tpu.memory_space<vmem>>, %arg1: memref<64x64xf32, #tpu.memory_space<vmem>>, %arg2: memref<32x64xf32, #tpu.memory_space<vmem>>, %arg3: memref<1x64xf32, #tpu.memory_space<vmem>>, %arg4: memref<1x64xf32, #tpu.memory_space<vmem>>, %arg5: memref<1x64xf32, #tpu.memory_space<vmem>>, %arg6: memref<64x32xf32, #tpu.memory_space<vmem>>, %arg7: memref<1x32xf32, #tpu.memory_space<vmem>>, %arg8: memref<32x4xf32, #tpu.memory_space<vmem>>, %arg9: memref<1x4xf32, #tpu.memory_space<vmem>>, %arg10: memref<32x128xf32, #tpu.memory_space<vmem>>, %arg11: memref<64x128xf32, #tpu.memory_space<vmem>>, %arg12: memref<4x128xf32, #tpu.memory_space<vmem>>, %arg13: memref<1x128xf32, #tpu.memory_space<vmem>>, %arg14: memref<1x128xf32, #tpu.memory_space<vmem>>, %arg15: memref<1x128xf32, #tpu.memory_space<vmem>>, %arg16: memref<128x128xf32, #tpu.memory_space<vmem>>, %arg17: memref<1x128xf32, #tpu.memory_space<vmem>>, %arg18: memref<1x128xf32, #tpu.memory_space<vmem>>, %arg19: memref<1x128xf32, #tpu.memory_space<vmem>>, %arg20: memref<128x8xf32, #tpu.memory_space<vmem>>, %arg21: memref<1x8xf32, #tpu.memory_space<vmem>>, %arg22: memref<4x8xf32, #tpu.memory_space<vmem>>, %arg23: memref<1x1xf32, #tpu.memory_space<smem>>, %arg24: memref<2x8xf32, #tpu.memory_space<vmem>>) attributes {dimension_semantics = [], scalar_prefetch = 0 : i64, scratch_operands = 0 : i64, tpu.core_type = #tpu.core_type<tc>} {
    %c0 = arith.constant 0 : index
    %c0_0 = arith.constant 0 : index
    %0 = vector.load %arg0[%c0, %c0_0] : memref<2x32xf32, #tpu.memory_space<vmem>>, vector<2x32xf32>
    %c0_1 = arith.constant 0 : index
    %c0_2 = arith.constant 0 : index
    %1 = vector.load %arg1[%c0_1, %c0_2] : memref<64x64xf32, #tpu.memory_space<vmem>>, vector<64x64xf32>
    %c0_3 = arith.constant 0 : index
    %c0_4 = arith.constant 0 : index
    %2 = vector.load %arg2[%c0_3, %c0_4] : memref<32x64xf32, #tpu.memory_space<vmem>>, vector<32x64xf32>
    %c0_5 = arith.constant 0 : index
    %c0_6 = arith.constant 0 : index
    %3 = vector.load %arg3[%c0_5, %c0_6] : memref<1x64xf32, #tpu.memory_space<vmem>>, vector<1x64xf32>
    %c0_7 = arith.constant 0 : index
    %c0_8 = arith.constant 0 : index
    %4 = vector.load %arg4[%c0_7, %c0_8] : memref<1x64xf32, #tpu.memory_space<vmem>>, vector<1x64xf32>
    %c0_9 = arith.constant 0 : index
    %c0_10 = arith.constant 0 : index
    %5 = vector.load %arg5[%c0_9, %c0_10] : memref<1x64xf32, #tpu.memory_space<vmem>>, vector<1x64xf32>
    %c0_11 = arith.constant 0 : index
    %c0_12 = arith.constant 0 : index
    %6 = vector.load %arg6[%c0_11, %c0_12] : memref<64x32xf32, #tpu.memory_space<vmem>>, vector<64x32xf32>
    %c0_13 = arith.constant 0 : index
    %c0_14 = arith.constant 0 : index
    %7 = vector.load %arg7[%c0_13, %c0_14] : memref<1x32xf32, #tpu.memory_space<vmem>>, vector<1x32xf32>
    %c0_15 = arith.constant 0 : index
    %c0_16 = arith.constant 0 : index
    %8 = vector.load %arg8[%c0_15, %c0_16] : memref<32x4xf32, #tpu.memory_space<vmem>>, vector<32x4xf32>
    %c0_17 = arith.constant 0 : index
    %c0_18 = arith.constant 0 : index
    %9 = vector.load %arg9[%c0_17, %c0_18] : memref<1x4xf32, #tpu.memory_space<vmem>>, vector<1x4xf32>
    %cst = arith.constant dense<0.000000e+00> : vector<2x64xf32>
    %10 = tpu.matmul %0, %2, %cst {dimension_numbers = #tpu.dot_dimension_numbers<[1], [0], [0], [1], [0, 0, 1, 1], [], []>} : vector<2x32xf32>, vector<32x64xf32>, vector<2x64xf32> -> vector<2x64xf32>
    %11 = vector.broadcast %3 : vector<1x64xf32> to vector<2x64xf32>
    %12 = arith.addf %10, %11 : vector<2x64xf32>
    %cst_19 = arith.constant 0.000000e+00 : f32
    %13 = vector.broadcast %cst_19 : f32 to vector<2x64xf32>
    %14 = arith.maximumf %12, %13 : vector<2x64xf32>
    %cst_20 = arith.constant dense<0.000000e+00> : vector<2x64xf32>
    %15 = tpu.matmul %14, %1, %cst_20 {dimension_numbers = #tpu.dot_dimension_numbers<[1], [0], [0], [1], [0, 0, 1, 1], [], []>} : vector<2x64xf32>, vector<64x64xf32>, vector<2x64xf32> -> vector<2x64xf32>
    %16 = arith.mulf %14, %14 : vector<2x64xf32>
    %cst_21 = arith.constant dense<0.000000e+00> : vector<2x64xf32>
    %17 = tpu.matmul %16, %1, %cst_21 {dimension_numbers = #tpu.dot_dimension_numbers<[1], [0], [0], [1], [0, 0, 1, 1], [], []>} : vector<2x64xf32>, vector<64x64xf32>, vector<2x64xf32> -> vector<2x64xf32>
    %18 = arith.mulf %15, %15 : vector<2x64xf32>
    %19 = arith.subf %17, %18 : vector<2x64xf32>
    %20 = arith.subf %14, %15 : vector<2x64xf32>
    %cst_22 = arith.constant 9.99999974E-6 : f32
    %21 = vector.broadcast %cst_22 : f32 to vector<2x64xf32>
    %22 = arith.addf %19, %21 : vector<2x64xf32>
    %23 = math.rsqrt %22 : vector<2x64xf32>
    %24 = arith.mulf %20, %23 : vector<2x64xf32>
    %25 = vector.broadcast %4 : vector<1x64xf32> to vector<2x64xf32>
    %26 = arith.mulf %24, %25 : vector<2x64xf32>
    %27 = vector.broadcast %5 : vector<1x64xf32> to vector<2x64xf32>
    %28 = arith.addf %26, %27 : vector<2x64xf32>
    %cst_23 = arith.constant dense<0.000000e+00> : vector<2x32xf32>
    %29 = tpu.matmul %28, %6, %cst_23 {dimension_numbers = #tpu.dot_dimension_numbers<[1], [0], [0], [1], [0, 0, 1, 1], [], []>} : vector<2x64xf32>, vector<64x32xf32>, vector<2x32xf32> -> vector<2x32xf32>
    %30 = vector.broadcast %7 : vector<1x32xf32> to vector<2x32xf32>
    %31 = arith.addf %29, %30 : vector<2x32xf32>
    %cst_24 = arith.constant 0.000000e+00 : f32
    %32 = vector.broadcast %cst_24 : f32 to vector<2x32xf32>
    %33 = arith.maximumf %31, %32 : vector<2x32xf32>
    %cst_25 = arith.constant dense<0.000000e+00> : vector<2x4xf32>
    %34 = tpu.matmul %33, %8, %cst_25 {dimension_numbers = #tpu.dot_dimension_numbers<[1], [0], [0], [1], [0, 0, 1, 1], [], []>} : vector<2x32xf32>, vector<32x4xf32>, vector<2x4xf32> -> vector<2x4xf32>
    %35 = vector.broadcast %9 : vector<1x4xf32> to vector<2x4xf32>
    %36 = arith.addf %34, %35 : vector<2x4xf32>
    %cst_26 = arith.constant dense<0xFF800000> : vector<2xf32>
    %37 = vector.multi_reduction <maximumf>, %36, %cst_26 [1] : vector<2x4xf32> to vector<2xf32>
    %38 = vector.shape_cast %37 : vector<2xf32> to vector<2x1xf32>
    %39 = vector.broadcast %38 : vector<2x1xf32> to vector<2x4xf32>
    %40 = arith.subf %36, %39 : vector<2x4xf32>
    %41 = math.exp %40 : vector<2x4xf32>
    %cst_27 = arith.constant dense<0.000000e+00> : vector<2xf32>
    %42 = vector.multi_reduction <add>, %41, %cst_27 [1] : vector<2x4xf32> to vector<2xf32>
    %43 = vector.shape_cast %42 : vector<2xf32> to vector<2x1xf32>
    %44 = vector.broadcast %43 : vector<2x1xf32> to vector<2x4xf32>
    %45 = arith.divf %41, %44 : vector<2x4xf32>
    %c0_28 = arith.constant 0 : index
    %c0_29 = arith.constant 0 : index
    %46 = vector.load %arg10[%c0_28, %c0_29] : memref<32x128xf32, #tpu.memory_space<vmem>>, vector<32x128xf32>
    %cst_30 = arith.constant dense<0.000000e+00> : vector<2x128xf32>
    %47 = tpu.matmul %0, %46, %cst_30 {dimension_numbers = #tpu.dot_dimension_numbers<[1], [0], [0], [1], [0, 0, 1, 1], [], []>} : vector<2x32xf32>, vector<32x128xf32>, vector<2x128xf32> -> vector<2x128xf32>
    %c0_31 = arith.constant 0 : index
    %c0_32 = arith.constant 0 : index
    %48 = vector.load %arg11[%c0_31, %c0_32] : memref<64x128xf32, #tpu.memory_space<vmem>>, vector<64x128xf32>
    %cst_33 = arith.constant dense<0.000000e+00> : vector<2x128xf32>
    %49 = tpu.matmul %28, %48, %cst_33 {dimension_numbers = #tpu.dot_dimension_numbers<[1], [0], [0], [1], [0, 0, 1, 1], [], []>} : vector<2x64xf32>, vector<64x128xf32>, vector<2x128xf32> -> vector<2x128xf32>
    %50 = arith.addf %47, %49 : vector<2x128xf32>
    %c0_34 = arith.constant 0 : index
    %c0_35 = arith.constant 0 : index
    %51 = vector.load %arg12[%c0_34, %c0_35] : memref<4x128xf32, #tpu.memory_space<vmem>>, vector<4x128xf32>
    %cst_36 = arith.constant dense<0.000000e+00> : vector<2x128xf32>
    %52 = tpu.matmul %45, %51, %cst_36 {dimension_numbers = #tpu.dot_dimension_numbers<[1], [0], [0], [1], [0, 0, 1, 1], [], []>} : vector<2x4xf32>, vector<4x128xf32>, vector<2x128xf32> -> vector<2x128xf32>
    %53 = arith.addf %50, %52 : vector<2x128xf32>
    %c0_37 = arith.constant 0 : index
    %c0_38 = arith.constant 0 : index
    %54 = vector.load %arg13[%c0_37, %c0_38] : memref<1x128xf32, #tpu.memory_space<vmem>>, vector<1x128xf32>
    %55 = vector.broadcast %54 : vector<1x128xf32> to vector<2x128xf32>
    %56 = arith.addf %53, %55 : vector<2x128xf32>
    %c0_39 = arith.constant 0 : index
    %c0_40 = arith.constant 0 : index
    %57 = vector.load %arg14[%c0_39, %c0_40] : memref<1x128xf32, #tpu.memory_space<vmem>>, vector<1x128xf32>
    %c0_41 = arith.constant 0 : index
    %c0_42 = arith.constant 0 : index
    %58 = vector.load %arg15[%c0_41, %c0_42] : memref<1x128xf32, #tpu.memory_space<vmem>>, vector<1x128xf32>
    %cst_43 = arith.constant dense<0.000000e+00> : vector<2xf32>
    %59 = vector.multi_reduction <add>, %56, %cst_43 [1] : vector<2x128xf32> to vector<2xf32>
    %60 = vector.shape_cast %59 : vector<2xf32> to vector<2x1xf32>
    %cst_44 = arith.constant 1.280000e+02 : f32
    %61 = vector.broadcast %cst_44 : f32 to vector<2x1xf32>
    %62 = arith.divf %60, %61 : vector<2x1xf32>
    %63 = vector.broadcast %62 : vector<2x1xf32> to vector<2x128xf32>
    %64 = arith.subf %56, %63 : vector<2x128xf32>
    %65 = arith.mulf %64, %64 : vector<2x128xf32>
    %cst_45 = arith.constant dense<0.000000e+00> : vector<2xf32>
    %66 = vector.multi_reduction <add>, %65, %cst_45 [1] : vector<2x128xf32> to vector<2xf32>
    %67 = vector.shape_cast %66 : vector<2xf32> to vector<2x1xf32>
    %cst_46 = arith.constant 1.280000e+02 : f32
    %68 = vector.broadcast %cst_46 : f32 to vector<2x1xf32>
    %69 = arith.divf %67, %68 : vector<2x1xf32>
    %70 = vector.broadcast %62 : vector<2x1xf32> to vector<2x128xf32>
    %71 = arith.subf %56, %70 : vector<2x128xf32>
    %cst_47 = arith.constant 9.99999974E-6 : f32
    %72 = vector.broadcast %cst_47 : f32 to vector<2x1xf32>
    %73 = arith.addf %69, %72 : vector<2x1xf32>
    %74 = math.rsqrt %73 : vector<2x1xf32>
    %75 = vector.broadcast %74 : vector<2x1xf32> to vector<2x128xf32>
    %76 = arith.mulf %71, %75 : vector<2x128xf32>
    %77 = vector.broadcast %57 : vector<1x128xf32> to vector<2x128xf32>
    %78 = arith.mulf %76, %77 : vector<2x128xf32>
    %79 = vector.broadcast %58 : vector<1x128xf32> to vector<2x128xf32>
    %80 = arith.addf %78, %79 : vector<2x128xf32>
    %cst_48 = arith.constant 5.000000e-01 : f32
    %81 = vector.broadcast %cst_48 : f32 to vector<2x128xf32>
    %82 = arith.mulf %81, %80 : vector<2x128xf32>
    %cst_49 = arith.constant 0.707106769 : f32
    %83 = vector.broadcast %cst_49 : f32 to vector<2x128xf32>
    %84 = arith.mulf %80, %83 : vector<2x128xf32>
    %85 = math.erf %84 : vector<2x128xf32>
    %cst_50 = arith.constant 1.000000e+00 : f32
    %86 = vector.broadcast %cst_50 : f32 to vector<2x128xf32>
    %87 = arith.addf %86, %85 : vector<2x128xf32>
    %88 = arith.mulf %82, %87 : vector<2x128xf32>
    %c0_51 = arith.constant 0 : index
    %c0_52 = arith.constant 0 : index
    %89 = vector.load %arg16[%c0_51, %c0_52] : memref<128x128xf32, #tpu.memory_space<vmem>>, vector<128x128xf32>
    %cst_53 = arith.constant dense<0.000000e+00> : vector<2x128xf32>
    %90 = tpu.matmul %88, %89, %cst_53 {dimension_numbers = #tpu.dot_dimension_numbers<[1], [0], [0], [1], [0, 0, 1, 1], [], []>} : vector<2x128xf32>, vector<128x128xf32>, vector<2x128xf32> -> vector<2x128xf32>
    %c0_54 = arith.constant 0 : index
    %c0_55 = arith.constant 0 : index
    %91 = vector.load %arg17[%c0_54, %c0_55] : memref<1x128xf32, #tpu.memory_space<vmem>>, vector<1x128xf32>
    %92 = vector.broadcast %91 : vector<1x128xf32> to vector<2x128xf32>
    %93 = arith.addf %90, %92 : vector<2x128xf32>
    %c0_56 = arith.constant 0 : index
    %c0_57 = arith.constant 0 : index
    %94 = vector.load %arg18[%c0_56, %c0_57] : memref<1x128xf32, #tpu.memory_space<vmem>>, vector<1x128xf32>
    %c0_58 = arith.constant 0 : index
    %c0_59 = arith.constant 0 : index
    %95 = vector.load %arg19[%c0_58, %c0_59] : memref<1x128xf32, #tpu.memory_space<vmem>>, vector<1x128xf32>
    %cst_60 = arith.constant dense<0.000000e+00> : vector<2xf32>
    %96 = vector.multi_reduction <add>, %93, %cst_60 [1] : vector<2x128xf32> to vector<2xf32>
    %97 = vector.shape_cast %96 : vector<2xf32> to vector<2x1xf32>
    %cst_61 = arith.constant 1.280000e+02 : f32
    %98 = vector.broadcast %cst_61 : f32 to vector<2x1xf32>
    %99 = arith.divf %97, %98 : vector<2x1xf32>
    %100 = vector.broadcast %99 : vector<2x1xf32> to vector<2x128xf32>
    %101 = arith.subf %93, %100 : vector<2x128xf32>
    %102 = arith.mulf %101, %101 : vector<2x128xf32>
    %cst_62 = arith.constant dense<0.000000e+00> : vector<2xf32>
    %103 = vector.multi_reduction <add>, %102, %cst_62 [1] : vector<2x128xf32> to vector<2xf32>
    %104 = vector.shape_cast %103 : vector<2xf32> to vector<2x1xf32>
    %cst_63 = arith.constant 1.280000e+02 : f32
    %105 = vector.broadcast %cst_63 : f32 to vector<2x1xf32>
    %106 = arith.divf %104, %105 : vector<2x1xf32>
    %107 = vector.broadcast %99 : vector<2x1xf32> to vector<2x128xf32>
    %108 = arith.subf %93, %107 : vector<2x128xf32>
    %cst_64 = arith.constant 9.99999974E-6 : f32
    %109 = vector.broadcast %cst_64 : f32 to vector<2x1xf32>
    %110 = arith.addf %106, %109 : vector<2x1xf32>
    %111 = math.rsqrt %110 : vector<2x1xf32>
    %112 = vector.broadcast %111 : vector<2x1xf32> to vector<2x128xf32>
    %113 = arith.mulf %108, %112 : vector<2x128xf32>
    %114 = vector.broadcast %94 : vector<1x128xf32> to vector<2x128xf32>
    %115 = arith.mulf %113, %114 : vector<2x128xf32>
    %116 = vector.broadcast %95 : vector<1x128xf32> to vector<2x128xf32>
    %117 = arith.addf %115, %116 : vector<2x128xf32>
    %cst_65 = arith.constant 5.000000e-01 : f32
    %118 = vector.broadcast %cst_65 : f32 to vector<2x128xf32>
    %119 = arith.mulf %118, %117 : vector<2x128xf32>
    %cst_66 = arith.constant 0.707106769 : f32
    %120 = vector.broadcast %cst_66 : f32 to vector<2x128xf32>
    %121 = arith.mulf %117, %120 : vector<2x128xf32>
    %122 = math.erf %121 : vector<2x128xf32>
    %cst_67 = arith.constant 1.000000e+00 : f32
    %123 = vector.broadcast %cst_67 : f32 to vector<2x128xf32>
    %124 = arith.addf %123, %122 : vector<2x128xf32>
    %125 = arith.mulf %119, %124 : vector<2x128xf32>
    %c0_68 = arith.constant 0 : index
    %c0_69 = arith.constant 0 : index
    %126 = vector.load %arg20[%c0_68, %c0_69] : memref<128x8xf32, #tpu.memory_space<vmem>>, vector<128x8xf32>
    %cst_70 = arith.constant dense<0.000000e+00> : vector<2x8xf32>
    %127 = tpu.matmul %125, %126, %cst_70 {dimension_numbers = #tpu.dot_dimension_numbers<[1], [0], [0], [1], [0, 0, 1, 1], [], []>} : vector<2x128xf32>, vector<128x8xf32>, vector<2x8xf32> -> vector<2x8xf32>
    %c0_71 = arith.constant 0 : index
    %c0_72 = arith.constant 0 : index
    %128 = vector.load %arg21[%c0_71, %c0_72] : memref<1x8xf32, #tpu.memory_space<vmem>>, vector<1x8xf32>
    %129 = vector.broadcast %128 : vector<1x8xf32> to vector<2x8xf32>
    %130 = arith.addf %127, %129 : vector<2x8xf32>
    %c0_73 = arith.constant 0 : index
    %c0_74 = arith.constant 0 : index
    %131 = vector.load %arg22[%c0_73, %c0_74] : memref<4x8xf32, #tpu.memory_space<vmem>>, vector<4x8xf32>
    %cst_75 = arith.constant dense<0.000000e+00> : vector<2x8xf32>
    %132 = tpu.matmul %45, %131, %cst_75 {dimension_numbers = #tpu.dot_dimension_numbers<[1], [0], [0], [1], [0, 0, 1, 1], [], []>} : vector<2x4xf32>, vector<4x8xf32>, vector<2x8xf32> -> vector<2x8xf32>
    %133 = arith.addf %130, %132 : vector<2x8xf32>
    %c0_76 = arith.constant 0 : index
    %c0_77 = arith.constant 0 : index
    %134 = memref.load %arg23[%c0_76, %c0_77] : memref<1x1xf32, #tpu.memory_space<smem>>
    %cst_78 = arith.constant 1.000000e-01 : f32
    %cst_79 = arith.constant 5.000000e+00 : f32
    %135 = arith.maximumf %cst_78, %134 : f32
    %136 = arith.minimumf %cst_79, %135 : f32
    %137 = vector.broadcast %136 : f32 to vector<2x8xf32>
    %138 = arith.divf %133, %137 : vector<2x8xf32>
    %cst_80 = arith.constant dense<0xFF800000> : vector<2xf32>
    %139 = vector.multi_reduction <maximumf>, %138, %cst_80 [1] : vector<2x8xf32> to vector<2xf32>
    %140 = vector.shape_cast %139 : vector<2xf32> to vector<2x1xf32>
    %141 = vector.broadcast %140 : vector<2x1xf32> to vector<2x8xf32>
    %142 = arith.subf %138, %141 : vector<2x8xf32>
    %143 = math.exp %142 : vector<2x8xf32>
    %cst_81 = arith.constant dense<0.000000e+00> : vector<2xf32>
    %144 = vector.multi_reduction <add>, %143, %cst_81 [1] : vector<2x8xf32> to vector<2xf32>
    %145 = vector.shape_cast %144 : vector<2xf32> to vector<2x1xf32>
    %146 = vector.broadcast %145 : vector<2x1xf32> to vector<2x8xf32>
    %147 = arith.divf %143, %146 : vector<2x8xf32>
    %c0_82 = arith.constant 0 : index
    %c0_83 = arith.constant 0 : index
    %148 = vector.load %arg24[%c0_82, %c0_83] : memref<2x8xf32, #tpu.memory_space<vmem>>, vector<2x8xf32>
    tpu.vector_store %arg24[%c0_82, %c0_83], %147 {strides = array<i32>} : memref<2x8xf32, #tpu.memory_space<vmem>>, vector<2x8xf32>,
    return
  }
}

module attributes {stable_mosaic.version = 11 : i64} {
  func.func @sparse_gate_kernel(%arg0: memref<2x32xf32, #tpu.memory_space<vmem>>, %arg1: memref<64x64xf32, #tpu.memory_space<vmem>>, %arg2: memref<32x64xf32, #tpu.memory_space<vmem>>, %arg3: memref<1x64xf32, #tpu.memory_space<vmem>>, %arg4: memref<1x64xf32, #tpu.memory_space<vmem>>, %arg5: memref<1x64xf32, #tpu.memory_space<vmem>>, %arg6: memref<64x32xf32, #tpu.memory_space<vmem>>, %arg7: memref<1x32xf32, #tpu.memory_space<vmem>>, %arg8: memref<32x4xf32, #tpu.memory_space<vmem>>, %arg9: memref<1x4xf32, #tpu.memory_space<vmem>>, %arg10: memref<4x16xf32, #tpu.memory_space<vmem>>, %arg11: memref<1x16xf32, #tpu.memory_space<vmem>>, %arg12: memref<16x1xf32, #tpu.memory_space<vmem>>, %arg13: memref<1x1xf32, #tpu.memory_space<vmem>>, %arg14: memref<32x200xf32, #tpu.memory_space<vmem>>, %arg15: memref<64x200xf32, #tpu.memory_space<vmem>>, %arg16: memref<4x200xf32, #tpu.memory_space<vmem>>, %arg17: memref<1x200xf32, #tpu.memory_space<vmem>>, %arg18: memref<1x200xf32, #tpu.memory_space<vmem>>, %arg19: memref<1x200xf32, #tpu.memory_space<vmem>>, %arg20: memref<200x100xf32, #tpu.memory_space<vmem>>, %arg21: memref<1x100xf32, #tpu.memory_space<vmem>>, %arg22: memref<1x100xf32, #tpu.memory_space<vmem>>, %arg23: memref<1x100xf32, #tpu.memory_space<vmem>>, %arg24: memref<100x8xf32, #tpu.memory_space<vmem>>, %arg25: memref<1x8xf32, #tpu.memory_space<vmem>>, %arg26: memref<4x8xf32, #tpu.memory_space<vmem>>, %arg27: memref<2x8xf32, #tpu.memory_space<vmem>>, %arg28: memref<2x8xf32, #tpu.memory_space<vmem>>, %arg29: memref<2x8xf32, #tpu.memory_space<vmem>>) attributes {dimension_semantics = [], scalar_prefetch = 0 : i64, scratch_operands = 0 : i64, tpu.core_type = #tpu.core_type<tc>} {
    %c0 = arith.constant 0 : index
    %c0_0 = arith.constant 0 : index
    %0 = vector.load %arg0[%c0, %c0_0] : memref<2x32xf32, #tpu.memory_space<vmem>>, vector<2x32xf32>
    %c0_1 = arith.constant 0 : index
    %c0_2 = arith.constant 0 : index
    %1 = vector.load %arg1[%c0_1, %c0_2] : memref<64x64xf32, #tpu.memory_space<vmem>>, vector<64x64xf32>
    %c0_3 = arith.constant 0 : index
    %c0_4 = arith.constant 0 : index
    %2 = vector.load %arg2[%c0_3, %c0_4] : memref<32x64xf32, #tpu.memory_space<vmem>>, vector<32x64xf32>
    %c0_5 = arith.constant 0 : index
    %c0_6 = arith.constant 0 : index
    %3 = vector.load %arg3[%c0_5, %c0_6] : memref<1x64xf32, #tpu.memory_space<vmem>>, vector<1x64xf32>
    %c0_7 = arith.constant 0 : index
    %c0_8 = arith.constant 0 : index
    %4 = vector.load %arg4[%c0_7, %c0_8] : memref<1x64xf32, #tpu.memory_space<vmem>>, vector<1x64xf32>
    %c0_9 = arith.constant 0 : index
    %c0_10 = arith.constant 0 : index
    %5 = vector.load %arg5[%c0_9, %c0_10] : memref<1x64xf32, #tpu.memory_space<vmem>>, vector<1x64xf32>
    %c0_11 = arith.constant 0 : index
    %c0_12 = arith.constant 0 : index
    %6 = vector.load %arg6[%c0_11, %c0_12] : memref<64x32xf32, #tpu.memory_space<vmem>>, vector<64x32xf32>
    %c0_13 = arith.constant 0 : index
    %c0_14 = arith.constant 0 : index
    %7 = vector.load %arg7[%c0_13, %c0_14] : memref<1x32xf32, #tpu.memory_space<vmem>>, vector<1x32xf32>
    %c0_15 = arith.constant 0 : index
    %c0_16 = arith.constant 0 : index
    %8 = vector.load %arg8[%c0_15, %c0_16] : memref<32x4xf32, #tpu.memory_space<vmem>>, vector<32x4xf32>
    %c0_17 = arith.constant 0 : index
    %c0_18 = arith.constant 0 : index
    %9 = vector.load %arg9[%c0_17, %c0_18] : memref<1x4xf32, #tpu.memory_space<vmem>>, vector<1x4xf32>
    %cst = arith.constant dense<0.000000e+00> : vector<2x64xf32>
    %10 = tpu.matmul %0, %2, %cst {dimension_numbers = #tpu.dot_dimension_numbers<[1], [0], [0], [1], [0, 0, 1, 1], [], []>} : vector<2x32xf32>, vector<32x64xf32>, vector<2x64xf32> -> vector<2x64xf32>
    %11 = vector.broadcast %3 : vector<1x64xf32> to vector<2x64xf32>
    %12 = arith.addf %10, %11 : vector<2x64xf32>
    %cst_19 = arith.constant 0.000000e+00 : f32
    %13 = vector.broadcast %cst_19 : f32 to vector<2x64xf32>
    %14 = arith.maximumf %12, %13 : vector<2x64xf32>
    %cst_20 = arith.constant dense<0.000000e+00> : vector<2x64xf32>
    %15 = tpu.matmul %14, %1, %cst_20 {dimension_numbers = #tpu.dot_dimension_numbers<[1], [0], [0], [1], [0, 0, 1, 1], [], []>} : vector<2x64xf32>, vector<64x64xf32>, vector<2x64xf32> -> vector<2x64xf32>
    %16 = arith.mulf %14, %14 : vector<2x64xf32>
    %cst_21 = arith.constant dense<0.000000e+00> : vector<2x64xf32>
    %17 = tpu.matmul %16, %1, %cst_21 {dimension_numbers = #tpu.dot_dimension_numbers<[1], [0], [0], [1], [0, 0, 1, 1], [], []>} : vector<2x64xf32>, vector<64x64xf32>, vector<2x64xf32> -> vector<2x64xf32>
    %18 = arith.mulf %15, %15 : vector<2x64xf32>
    %19 = arith.subf %17, %18 : vector<2x64xf32>
    %20 = arith.subf %14, %15 : vector<2x64xf32>
    %cst_22 = arith.constant 9.99999974E-6 : f32
    %21 = vector.broadcast %cst_22 : f32 to vector<2x64xf32>
    %22 = arith.addf %19, %21 : vector<2x64xf32>
    %23 = math.rsqrt %22 : vector<2x64xf32>
    %24 = arith.mulf %20, %23 : vector<2x64xf32>
    %25 = vector.broadcast %4 : vector<1x64xf32> to vector<2x64xf32>
    %26 = arith.mulf %24, %25 : vector<2x64xf32>
    %27 = vector.broadcast %5 : vector<1x64xf32> to vector<2x64xf32>
    %28 = arith.addf %26, %27 : vector<2x64xf32>
    %cst_23 = arith.constant dense<0.000000e+00> : vector<2x32xf32>
    %29 = tpu.matmul %28, %6, %cst_23 {dimension_numbers = #tpu.dot_dimension_numbers<[1], [0], [0], [1], [0, 0, 1, 1], [], []>} : vector<2x64xf32>, vector<64x32xf32>, vector<2x32xf32> -> vector<2x32xf32>
    %30 = vector.broadcast %7 : vector<1x32xf32> to vector<2x32xf32>
    %31 = arith.addf %29, %30 : vector<2x32xf32>
    %cst_24 = arith.constant 0.000000e+00 : f32
    %32 = vector.broadcast %cst_24 : f32 to vector<2x32xf32>
    %33 = arith.maximumf %31, %32 : vector<2x32xf32>
    %cst_25 = arith.constant dense<0.000000e+00> : vector<2x4xf32>
    %34 = tpu.matmul %33, %8, %cst_25 {dimension_numbers = #tpu.dot_dimension_numbers<[1], [0], [0], [1], [0, 0, 1, 1], [], []>} : vector<2x32xf32>, vector<32x4xf32>, vector<2x4xf32> -> vector<2x4xf32>
    %35 = vector.broadcast %9 : vector<1x4xf32> to vector<2x4xf32>
    %36 = arith.addf %34, %35 : vector<2x4xf32>
    %cst_26 = arith.constant dense<0xFF800000> : vector<2xf32>
    %37 = vector.multi_reduction <maximumf>, %36, %cst_26 [1] : vector<2x4xf32> to vector<2xf32>
    %38 = vector.shape_cast %37 : vector<2xf32> to vector<2x1xf32>
    %39 = vector.broadcast %38 : vector<2x1xf32> to vector<2x4xf32>
    %40 = arith.subf %36, %39 : vector<2x4xf32>
    %41 = math.exp %40 : vector<2x4xf32>
    %cst_27 = arith.constant dense<0.000000e+00> : vector<2xf32>
    %42 = vector.multi_reduction <add>, %41, %cst_27 [1] : vector<2x4xf32> to vector<2xf32>
    %43 = vector.shape_cast %42 : vector<2xf32> to vector<2x1xf32>
    %44 = vector.broadcast %43 : vector<2x1xf32> to vector<2x4xf32>
    %45 = arith.divf %41, %44 : vector<2x4xf32>
    %c0_28 = arith.constant 0 : index
    %c0_29 = arith.constant 0 : index
    %46 = vector.load %arg10[%c0_28, %c0_29] : memref<4x16xf32, #tpu.memory_space<vmem>>, vector<4x16xf32>
    %cst_30 = arith.constant dense<0.000000e+00> : vector<2x16xf32>
    %47 = tpu.matmul %45, %46, %cst_30 {dimension_numbers = #tpu.dot_dimension_numbers<[1], [0], [0], [1], [0, 0, 1, 1], [], []>} : vector<2x4xf32>, vector<4x16xf32>, vector<2x16xf32> -> vector<2x16xf32>
    %c0_31 = arith.constant 0 : index
    %c0_32 = arith.constant 0 : index
    %48 = vector.load %arg11[%c0_31, %c0_32] : memref<1x16xf32, #tpu.memory_space<vmem>>, vector<1x16xf32>
    %49 = vector.broadcast %48 : vector<1x16xf32> to vector<2x16xf32>
    %50 = arith.addf %47, %49 : vector<2x16xf32>
    %cst_33 = arith.constant 0.000000e+00 : f32
    %51 = vector.broadcast %cst_33 : f32 to vector<2x16xf32>
    %52 = arith.maximumf %50, %51 : vector<2x16xf32>
    %c0_34 = arith.constant 0 : index
    %c0_35 = arith.constant 0 : index
    %53 = vector.load %arg12[%c0_34, %c0_35] : memref<16x1xf32, #tpu.memory_space<vmem>>, vector<16x1xf32>
    %cst_36 = arith.constant dense<0.000000e+00> : vector<2x1xf32>
    %54 = tpu.matmul %52, %53, %cst_36 {dimension_numbers = #tpu.dot_dimension_numbers<[1], [0], [0], [1], [0, 0, 1, 1], [], []>} : vector<2x16xf32>, vector<16x1xf32>, vector<2x1xf32> -> vector<2x1xf32>
    %c0_37 = arith.constant 0 : index
    %c0_38 = arith.constant 0 : index
    %55 = vector.load %arg13[%c0_37, %c0_38] : memref<1x1xf32, #tpu.memory_space<vmem>>, vector<1x1xf32>
    %56 = vector.broadcast %55 : vector<1x1xf32> to vector<2x1xf32>
    %57 = arith.addf %54, %56 : vector<2x1xf32>
    %58 = arith.negf %57 : vector<2x1xf32>
    %59 = math.exp %58 : vector<2x1xf32>
    %cst_39 = arith.constant 1.000000e+00 : f32
    %60 = vector.broadcast %cst_39 : f32 to vector<2x1xf32>
    %61 = arith.addf %60, %59 : vector<2x1xf32>
    %62 = arith.divf %60, %61 : vector<2x1xf32>
    %cst_40 = arith.constant 1.000000e+00 : f32
    %63 = vector.broadcast %cst_40 : f32 to vector<2x1xf32>
    %64 = arith.mulf %62, %63 : vector<2x1xf32>
    %c0_41 = arith.constant 0 : index
    %c0_42 = arith.constant 0 : index
    %65 = vector.load %arg14[%c0_41, %c0_42] : memref<32x200xf32, #tpu.memory_space<vmem>>, vector<32x200xf32>
    %cst_43 = arith.constant dense<0.000000e+00> : vector<2x200xf32>
    %66 = tpu.matmul %0, %65, %cst_43 {dimension_numbers = #tpu.dot_dimension_numbers<[1], [0], [0], [1], [0, 0, 1, 1], [], []>} : vector<2x32xf32>, vector<32x200xf32>, vector<2x200xf32> -> vector<2x200xf32>
    %c0_44 = arith.constant 0 : index
    %c0_45 = arith.constant 0 : index
    %67 = vector.load %arg15[%c0_44, %c0_45] : memref<64x200xf32, #tpu.memory_space<vmem>>, vector<64x200xf32>
    %cst_46 = arith.constant dense<0.000000e+00> : vector<2x200xf32>
    %68 = tpu.matmul %28, %67, %cst_46 {dimension_numbers = #tpu.dot_dimension_numbers<[1], [0], [0], [1], [0, 0, 1, 1], [], []>} : vector<2x64xf32>, vector<64x200xf32>, vector<2x200xf32> -> vector<2x200xf32>
    %69 = arith.addf %66, %68 : vector<2x200xf32>
    %c0_47 = arith.constant 0 : index
    %c0_48 = arith.constant 0 : index
    %70 = vector.load %arg16[%c0_47, %c0_48] : memref<4x200xf32, #tpu.memory_space<vmem>>, vector<4x200xf32>
    %cst_49 = arith.constant dense<0.000000e+00> : vector<2x200xf32>
    %71 = tpu.matmul %45, %70, %cst_49 {dimension_numbers = #tpu.dot_dimension_numbers<[1], [0], [0], [1], [0, 0, 1, 1], [], []>} : vector<2x4xf32>, vector<4x200xf32>, vector<2x200xf32> -> vector<2x200xf32>
    %72 = arith.addf %69, %71 : vector<2x200xf32>
    %c0_50 = arith.constant 0 : index
    %c0_51 = arith.constant 0 : index
    %73 = vector.load %arg17[%c0_50, %c0_51] : memref<1x200xf32, #tpu.memory_space<vmem>>, vector<1x200xf32>
    %74 = vector.broadcast %73 : vector<1x200xf32> to vector<2x200xf32>
    %75 = arith.addf %72, %74 : vector<2x200xf32>
    %c0_52 = arith.constant 0 : index
    %c0_53 = arith.constant 0 : index
    %76 = vector.load %arg18[%c0_52, %c0_53] : memref<1x200xf32, #tpu.memory_space<vmem>>, vector<1x200xf32>
    %c0_54 = arith.constant 0 : index
    %c0_55 = arith.constant 0 : index
    %77 = vector.load %arg19[%c0_54, %c0_55] : memref<1x200xf32, #tpu.memory_space<vmem>>, vector<1x200xf32>
    %cst_56 = arith.constant dense<0.000000e+00> : vector<2xf32>
    %78 = vector.multi_reduction <add>, %75, %cst_56 [1] : vector<2x200xf32> to vector<2xf32>
    %79 = vector.shape_cast %78 : vector<2xf32> to vector<2x1xf32>
    %cst_57 = arith.constant 2.000000e+02 : f32
    %80 = vector.broadcast %cst_57 : f32 to vector<2x1xf32>
    %81 = arith.divf %79, %80 : vector<2x1xf32>
    %82 = vector.broadcast %81 : vector<2x1xf32> to vector<2x200xf32>
    %83 = arith.subf %75, %82 : vector<2x200xf32>
    %84 = arith.mulf %83, %83 : vector<2x200xf32>
    %cst_58 = arith.constant dense<0.000000e+00> : vector<2xf32>
    %85 = vector.multi_reduction <add>, %84, %cst_58 [1] : vector<2x200xf32> to vector<2xf32>
    %86 = vector.shape_cast %85 : vector<2xf32> to vector<2x1xf32>
    %cst_59 = arith.constant 2.000000e+02 : f32
    %87 = vector.broadcast %cst_59 : f32 to vector<2x1xf32>
    %88 = arith.divf %86, %87 : vector<2x1xf32>
    %89 = vector.broadcast %81 : vector<2x1xf32> to vector<2x200xf32>
    %90 = arith.subf %75, %89 : vector<2x200xf32>
    %cst_60 = arith.constant 9.99999974E-6 : f32
    %91 = vector.broadcast %cst_60 : f32 to vector<2x1xf32>
    %92 = arith.addf %88, %91 : vector<2x1xf32>
    %93 = math.rsqrt %92 : vector<2x1xf32>
    %94 = vector.broadcast %93 : vector<2x1xf32> to vector<2x200xf32>
    %95 = arith.mulf %90, %94 : vector<2x200xf32>
    %96 = vector.broadcast %76 : vector<1x200xf32> to vector<2x200xf32>
    %97 = arith.mulf %95, %96 : vector<2x200xf32>
    %98 = vector.broadcast %77 : vector<1x200xf32> to vector<2x200xf32>
    %99 = arith.addf %97, %98 : vector<2x200xf32>
    %cst_61 = arith.constant 5.000000e-01 : f32
    %100 = vector.broadcast %cst_61 : f32 to vector<2x200xf32>
    %101 = arith.mulf %100, %99 : vector<2x200xf32>
    %cst_62 = arith.constant 0.707106769 : f32
    %102 = vector.broadcast %cst_62 : f32 to vector<2x200xf32>
    %103 = arith.mulf %99, %102 : vector<2x200xf32>
    %104 = math.erf %103 : vector<2x200xf32>
    %cst_63 = arith.constant 1.000000e+00 : f32
    %105 = vector.broadcast %cst_63 : f32 to vector<2x200xf32>
    %106 = arith.addf %105, %104 : vector<2x200xf32>
    %107 = arith.mulf %101, %106 : vector<2x200xf32>
    %c0_64 = arith.constant 0 : index
    %c0_65 = arith.constant 0 : index
    %108 = vector.load %arg20[%c0_64, %c0_65] : memref<200x100xf32, #tpu.memory_space<vmem>>, vector<200x100xf32>
    %cst_66 = arith.constant dense<0.000000e+00> : vector<2x100xf32>
    %109 = tpu.matmul %107, %108, %cst_66 {dimension_numbers = #tpu.dot_dimension_numbers<[1], [0], [0], [1], [0, 0, 1, 1], [], []>} : vector<2x200xf32>, vector<200x100xf32>, vector<2x100xf32> -> vector<2x100xf32>
    %c0_67 = arith.constant 0 : index
    %c0_68 = arith.constant 0 : index
    %110 = vector.load %arg21[%c0_67, %c0_68] : memref<1x100xf32, #tpu.memory_space<vmem>>, vector<1x100xf32>
    %111 = vector.broadcast %110 : vector<1x100xf32> to vector<2x100xf32>
    %112 = arith.addf %109, %111 : vector<2x100xf32>
    %c0_69 = arith.constant 0 : index
    %c0_70 = arith.constant 0 : index
    %113 = vector.load %arg22[%c0_69, %c0_70] : memref<1x100xf32, #tpu.memory_space<vmem>>, vector<1x100xf32>
    %c0_71 = arith.constant 0 : index
    %c0_72 = arith.constant 0 : index
    %114 = vector.load %arg23[%c0_71, %c0_72] : memref<1x100xf32, #tpu.memory_space<vmem>>, vector<1x100xf32>
    %cst_73 = arith.constant dense<0.000000e+00> : vector<2xf32>
    %115 = vector.multi_reduction <add>, %112, %cst_73 [1] : vector<2x100xf32> to vector<2xf32>
    %116 = vector.shape_cast %115 : vector<2xf32> to vector<2x1xf32>
    %cst_74 = arith.constant 1.000000e+02 : f32
    %117 = vector.broadcast %cst_74 : f32 to vector<2x1xf32>
    %118 = arith.divf %116, %117 : vector<2x1xf32>
    %119 = vector.broadcast %118 : vector<2x1xf32> to vector<2x100xf32>
    %120 = arith.subf %112, %119 : vector<2x100xf32>
    %121 = arith.mulf %120, %120 : vector<2x100xf32>
    %cst_75 = arith.constant dense<0.000000e+00> : vector<2xf32>
    %122 = vector.multi_reduction <add>, %121, %cst_75 [1] : vector<2x100xf32> to vector<2xf32>
    %123 = vector.shape_cast %122 : vector<2xf32> to vector<2x1xf32>
    %cst_76 = arith.constant 1.000000e+02 : f32
    %124 = vector.broadcast %cst_76 : f32 to vector<2x1xf32>
    %125 = arith.divf %123, %124 : vector<2x1xf32>
    %126 = vector.broadcast %118 : vector<2x1xf32> to vector<2x100xf32>
    %127 = arith.subf %112, %126 : vector<2x100xf32>
    %cst_77 = arith.constant 9.99999974E-6 : f32
    %128 = vector.broadcast %cst_77 : f32 to vector<2x1xf32>
    %129 = arith.addf %125, %128 : vector<2x1xf32>
    %130 = math.rsqrt %129 : vector<2x1xf32>
    %131 = vector.broadcast %130 : vector<2x1xf32> to vector<2x100xf32>
    %132 = arith.mulf %127, %131 : vector<2x100xf32>
    %133 = vector.broadcast %113 : vector<1x100xf32> to vector<2x100xf32>
    %134 = arith.mulf %132, %133 : vector<2x100xf32>
    %135 = vector.broadcast %114 : vector<1x100xf32> to vector<2x100xf32>
    %136 = arith.addf %134, %135 : vector<2x100xf32>
    %cst_78 = arith.constant 5.000000e-01 : f32
    %137 = vector.broadcast %cst_78 : f32 to vector<2x100xf32>
    %138 = arith.mulf %137, %136 : vector<2x100xf32>
    %cst_79 = arith.constant 0.707106769 : f32
    %139 = vector.broadcast %cst_79 : f32 to vector<2x100xf32>
    %140 = arith.mulf %136, %139 : vector<2x100xf32>
    %141 = math.erf %140 : vector<2x100xf32>
    %cst_80 = arith.constant 1.000000e+00 : f32
    %142 = vector.broadcast %cst_80 : f32 to vector<2x100xf32>
    %143 = arith.addf %142, %141 : vector<2x100xf32>
    %144 = arith.mulf %138, %143 : vector<2x100xf32>
    %c0_81 = arith.constant 0 : index
    %c0_82 = arith.constant 0 : index
    %145 = vector.load %arg24[%c0_81, %c0_82] : memref<100x8xf32, #tpu.memory_space<vmem>>, vector<100x8xf32>
    %cst_83 = arith.constant dense<0.000000e+00> : vector<2x8xf32>
    %146 = tpu.matmul %144, %145, %cst_83 {dimension_numbers = #tpu.dot_dimension_numbers<[1], [0], [0], [1], [0, 0, 1, 1], [], []>} : vector<2x100xf32>, vector<100x8xf32>, vector<2x8xf32> -> vector<2x8xf32>
    %c0_84 = arith.constant 0 : index
    %c0_85 = arith.constant 0 : index
    %147 = vector.load %arg25[%c0_84, %c0_85] : memref<1x8xf32, #tpu.memory_space<vmem>>, vector<1x8xf32>
    %148 = vector.broadcast %147 : vector<1x8xf32> to vector<2x8xf32>
    %149 = arith.addf %146, %148 : vector<2x8xf32>
    %c0_86 = arith.constant 0 : index
    %c0_87 = arith.constant 0 : index
    %150 = vector.load %arg26[%c0_86, %c0_87] : memref<4x8xf32, #tpu.memory_space<vmem>>, vector<4x8xf32>
    %cst_88 = arith.constant dense<0.000000e+00> : vector<2x8xf32>
    %151 = tpu.matmul %45, %150, %cst_88 {dimension_numbers = #tpu.dot_dimension_numbers<[1], [0], [0], [1], [0, 0, 1, 1], [], []>} : vector<2x4xf32>, vector<4x8xf32>, vector<2x8xf32> -> vector<2x8xf32>
    %152 = arith.addf %149, %151 : vector<2x8xf32>
    %c0_89 = arith.constant 0 : index
    %c0_90 = arith.constant 0 : index
    %153 = vector.load %arg27[%c0_89, %c0_90] : memref<2x8xf32, #tpu.memory_space<vmem>>, vector<2x8xf32>
    %154 = vector.broadcast %64 : vector<2x1xf32> to vector<2x8xf32>
    %155 = arith.mulf %153, %154 : vector<2x8xf32>
    %156 = arith.addf %152, %155 : vector<2x8xf32>
    %c0_91 = arith.constant 0 : index
    %c0_92 = arith.constant 0 : index
    %157 = vector.load %arg28[%c0_91, %c0_92] : memref<2x8xf32, #tpu.memory_space<vmem>>, vector<2x8xf32>
    tpu.vector_store %arg28[%c0_91, %c0_92], %156 {strides = array<i32>} : memref<2x8xf32, #tpu.memory_space<vmem>>, vector<2x8xf32>,
    %cst_93 = arith.constant dense<0xFF800000> : vector<2xf32>
    %158 = vector.multi_reduction <maximumf>, %152, %cst_93 [1] : vector<2x8xf32> to vector<2xf32>
    %159 = vector.shape_cast %158 : vector<2xf32> to vector<2x1xf32>
    %160 = vector.broadcast %159 : vector<2x1xf32> to vector<2x8xf32>
    %161 = arith.subf %152, %160 : vector<2x8xf32>
    %162 = math.exp %161 : vector<2x8xf32>
    %cst_94 = arith.constant dense<0.000000e+00> : vector<2xf32>
    %163 = vector.multi_reduction <add>, %162, %cst_94 [1] : vector<2x8xf32> to vector<2xf32>
    %164 = vector.shape_cast %163 : vector<2xf32> to vector<2x1xf32>
    %165 = vector.broadcast %164 : vector<2x1xf32> to vector<2x8xf32>
    %166 = arith.divf %162, %165 : vector<2x8xf32>
    %c0_95 = arith.constant 0 : index
    %c0_96 = arith.constant 0 : index
    %167 = vector.load %arg29[%c0_95, %c0_96] : memref<2x8xf32, #tpu.memory_space<vmem>>, vector<2x8xf32>
    tpu.vector_store %arg29[%c0_95, %c0_96], %166 {strides = array<i32>} : memref<2x8xf32, #tpu.memory_space<vmem>>, vector<2x8xf32>,
    return
  }
}

</mosaic_0001>

<llo_original>
// kernel: adaptive_gate_fwd.1
$region0: #{adaptive_gate_fwd.1}
  #allocation0 [shape = 'u32[]', space=smem, size = 0x4, offset = 0x4, fixed_abs, tag = 'smem constant byte address 0x4 - core index']
  #allocation1 [shape = 'u32[144,128]{1,0:T(1,128)}', space=vmem, size = 0x12000, scoped, tag = 'internal scratch']
  #allocation2 [shape = 'f32[1,1]{1,0:T(1,128)S(1)}', space=vmem, size = 0x200, scoped, tag = 'scoped memory for adaptive_gate_fwd.1']
  %s0 = inlined_call_operand.vmem [shape: f32[2,32], index: 0, kind: input, shape index: {}]
  %s1 = inlined_call_operand.vmem [shape: f32[32,32], index: 1, kind: input, shape index: {}]
  %s2 = inlined_call_operand.vmem [shape: f32[1,32], index: 2, kind: input, shape index: {}]
  %s3 = inlined_call_operand.vmem [shape: f32[32,1], index: 3, kind: input, shape index: {}]
  %s4 = inlined_call_operand.<no memory space> [shape: f32[1,1], index: 4, kind: input, shape index: {}]
  %s5 = inlined_call_operand.vmem [shape: f32[2,1], index: 5, kind: output, shape index: {}]
  %s6 = sld [smem:[#allocation0]]
  $region30: #{adaptive_gate_fwd.1} parent=0
    _
  %s8 = ssub.s32 1, %s6
  %s9 = scalar_select 0, %s8, %s6
  %v10 = vstv %s4
  %11 = vst [vmem:[#allocation2] sm:$0x1] %v10
  // Predicated region
  $region2: #{adaptive_gate_fwd.1} parent=0 // pred_check
    _
  $region3: #{adaptive_gate_fwd.1} parent=0 // pred_check_branch
    %13 = sbr.rel (0) target = $region5
  $region4: #{adaptive_gate_fwd.1} parent=0 // pred_region
    _
  $region5: #{adaptive_gate_fwd.1} parent=0 // pred_fallthru
    _
  // Predicated region
  $region6: #{adaptive_gate_fwd.1} parent=0 // pred_check
    _
  $region7: #{adaptive_gate_fwd.1} parent=0 // pred_check_branch
    %15 = sbr.rel (0) target = $region9
  $region8: #{adaptive_gate_fwd.1} parent=0 // pred_region
    _
  $region9: #{adaptive_gate_fwd.1} parent=0 // pred_fallthru
    _
  // Predicated region
  $region10: #{adaptive_gate_fwd.1} parent=0 // pred_check
    _
  $region11: #{adaptive_gate_fwd.1} parent=0 // pred_check_branch
    %17 = sbr.rel (0) target = $region13
  $region12: #{adaptive_gate_fwd.1} parent=0 // pred_region
    _
  $region13: #{adaptive_gate_fwd.1} parent=0 // pred_fallthru
    _
  // Predicated region
  $region14: #{adaptive_gate_fwd.1} parent=0 // pred_check
    _
  $region15: #{adaptive_gate_fwd.1} parent=0 // pred_check_branch
    %19 = sbr.rel (0) target = $region17
  $region16: #{adaptive_gate_fwd.1} parent=0 // pred_region
    _
  $region17: #{adaptive_gate_fwd.1} parent=0 // pred_fallthru
    _
  // Predicated region
  $region18: #{adaptive_gate_fwd.1} parent=0 // pred_check
    _
  $region19: #{adaptive_gate_fwd.1} parent=0 // pred_check_branch
    %21 = sbr.rel (0) target = $region21
  $region20: #{adaptive_gate_fwd.1} parent=0 // pred_region
    _
  $region21: #{adaptive_gate_fwd.1} parent=0 // pred_fallthru
    _
  %v22 = vld [vmem:[%s0] sm:$0x3]
  %v23 = vld [vmem:[%s1] sm:$0xff]
  %v24 = vld [vmem:[%s1 + $0x8] sm:$0xff]
  %v25 = vld [vmem:[%s1 + $0x10] sm:$0xff]
  %v26 = vld [vmem:[%s1 + $0x18] sm:$0xff]
  %v27 = vld [vmem:[%s2] sm:$0x1]
  %v29 = vlaneseq
  %v30 = vshrl.u32 %v29, 7
  %v31 = vsub.s32 0, %v30
  %v32 = vrot.slane %v27, %v31
  %vm34 = vcmask 261120
  %v36 = vsel %vm34, %v22, 0
  %38 = vmatprep.subr.mxu0 0.0
  %39 = vmatpush1.msra.mxu0 0.0
  %40 = vmatprep.subr.mxu0 0.0
  %41 = vmatpush1.msra.mxu0 0.0
  %42 = vmatprep.subr.mxu0 0.0
  %43 = vmatpush1.msra.mxu0 0.0
  %44 = vmatprep.subr.mxu0 0.0
  %45 = vmatpush1.msra.mxu0 0.0
  %46 = vmatprep.subr.mxu0 0.0
  %47 = vmatpush1.msra.mxu0 0.0
  %48 = vmatprep.subr.mxu0 0.0
  %49 = vmatpush1.msra.mxu0 0.0
  %50 = vmatprep.subr.mxu0 0.0
  %51 = vmatpush1.msra.mxu0 0.0
  %52 = vmatprep.subr.mxu0 0.0
  %53 = vmatpush1.msra.mxu0 0.0
  %54 = vmatprep.subr.mxu0 0.0
  %55 = vmatpush1.msra.mxu0 0.0
  %56 = vmatprep.subr.mxu0 0.0
  %57 = vmatpush1.msra.mxu0 0.0
  %58 = vmatprep.subr.mxu0 0.0
  %59 = vmatpush1.msra.mxu0 0.0
  %60 = vmatprep.subr.mxu0 0.0
  %61 = vmatpush1.msra.mxu0 0.0
  %62 = vmatprep.subr.mxu0 0.0
  %63 = vmatpush1.msra.mxu0 %v26
  %64 = vmatprep.subr.mxu0 0.0
  %65 = vmatpush1.msra.mxu0 %v25
  %66 = vmatprep.subr.mxu0 0.0
  %67 = vmatpush1.msra.mxu0 %v24
  %68 = vmatprep.subr.mxu0 0.0
  %69 = vmatpush1.msra.mxu0 %v23
  %70 = vmatprep.subr.mxu0 0.0
  %71 = vmatpush2.msra.mxu0 0.0
  %72 = vmatprep.subr.mxu0 0.0
  %73 = vmatpush2.msra.mxu0 0.0
  %74 = vmatprep.subr.mxu0 0.0
  %75 = vmatpush2.msra.mxu0 0.0
  %76 = vmatprep.subr.mxu0 0.0
  %77 = vmatpush2.msra.mxu0 0.0
  %78 = vmatprep.subr.mxu0 0.0
  %79 = vmatpush2.msra.mxu0 0.0
  %80 = vmatprep.subr.mxu0 0.0
  %81 = vmatpush2.msra.mxu0 0.0
  %82 = vmatprep.subr.mxu0 0.0
  %83 = vmatpush2.msra.mxu0 0.0
  %84 = vmatprep.subr.mxu0 0.0
  %85 = vmatpush2.msra.mxu0 0.0
  %86 = vmatprep.subr.mxu0 0.0
  %87 = vmatpush2.msra.mxu0 0.0
  %88 = vmatprep.subr.mxu0 0.0
  %89 = vmatpush2.msra.mxu0 0.0
  %90 = vmatprep.subr.mxu0 0.0
  %91 = vmatpush2.msra.mxu0 0.0
  %92 = vmatprep.subr.mxu0 0.0
  %93 = vmatpush2.msra.mxu0 0.0
  %94 = vmatprep.subr.mxu0 0.0
  %95 = vmatpush2.msra.mxu0 0.0
  %96 = vmatprep.subr.mxu0 0.0
  %97 = vmatpush2.msra.mxu0 0.0
  %98 = vmatprep.subr.mxu0 0.0
  %99 = vmatpush2.msra.mxu0 0.0
  %100 = vmatprep.subr.mxu0 0.0
  %101 = vmatpush2.msra.mxu0 0.0
  %102 = vmatprep.mubr.f32.mxu0 0.0
  %103 = vmatmul.mubr.f32.gmra.mxu0 %v36
  %v104 = vpop.f32.mrf.mxu0
  %v105 = vadd.f32 %v32, %v104
  %v106 = vpop.f32.mrf.mxu0
  %107 = vdwg.mxu0
  %v108 = vmax.f32 %v105, 0.0
  %v109 = vld [vmem:[%s3] sm:$0xff]
  %v110 = vld [vmem:[%s3 + $0x8] sm:$0xff]
  %v111 = vld [vmem:[%s3 + $0x10] sm:$0xff]
  %v112 = vld [vmem:[%s3 + $0x18] sm:$0xff]
  %v113 = vld [vmem:[#allocation2] sm:$0x1]
  %v115 = vlaneseq
  %v116 = vshrl.u32 %v115, 7
  %v117 = vsub.s32 0, %v116
  %v118 = vrot.slane %v113, %v117
  %v121 = vsel %vm34, %v108, 0
  %123 = vmatprep.subr.mxu0 0.0
  %124 = vmatpush1.msra.mxu0 0.0
  %125 = vmatprep.subr.mxu0 0.0
  %126 = vmatpush1.msra.mxu0 0.0
  %127 = vmatprep.subr.mxu0 0.0
  %128 = vmatpush1.msra.mxu0 0.0
  %129 = vmatprep.subr.mxu0 0.0
  %130 = vmatpush1.msra.mxu0 0.0
  %131 = vmatprep.subr.mxu0 0.0
  %132 = vmatpush1.msra.mxu0 0.0
  %133 = vmatprep.subr.mxu0 0.0
  %134 = vmatpush1.msra.mxu0 0.0
  %135 = vmatprep.subr.mxu0 0.0
  %136 = vmatpush1.msra.mxu0 0.0
  %137 = vmatprep.subr.mxu0 0.0
  %138 = vmatpush1.msra.mxu0 0.0
  %139 = vmatprep.subr.mxu0 0.0
  %140 = vmatpush1.msra.mxu0 0.0
  %141 = vmatprep.subr.mxu0 0.0
  %142 = vmatpush1.msra.mxu0 0.0
  %143 = vmatprep.subr.mxu0 0.0
  %144 = vmatpush1.msra.mxu0 0.0
  %145 = vmatprep.subr.mxu0 0.0
  %146 = vmatpush1.msra.mxu0 0.0
  %147 = vmatprep.subr.mxu0 0.0
  %148 = vmatpush1.msra.mxu0 %v112
  %149 = vmatprep.subr.mxu0 0.0
  %150 = vmatpush1.msra.mxu0 %v111
  %151 = vmatprep.subr.mxu0 0.0
  %152 = vmatpush1.msra.mxu0 %v110
  %153 = vmatprep.subr.mxu0 0.0
  %154 = vmatpush1.msra.mxu0 %v109
  %155 = vmatprep.subr.mxu0 0.0
  %156 = vmatpush2.msra.mxu0 0.0
  %157 = vmatprep.subr.mxu0 0.0
  %158 = vmatpush2.msra.mxu0 0.0
  %159 = vmatprep.subr.mxu0 0.0
  %160 = vmatpush2.msra.mxu0 0.0
  %161 = vmatprep.subr.mxu0 0.0
  %162 = vmatpush2.msra.mxu0 0.0
  %163 = vmatprep.subr.mxu0 0.0
  %164 = vmatpush2.msra.mxu0 0.0
  %165 = vmatprep.subr.mxu0 0.0
  %166 = vmatpush2.msra.mxu0 0.0
  %167 = vmatprep.subr.mxu0 0.0
  %168 = vmatpush2.msra.mxu0 0.0
  %169 = vmatprep.subr.mxu0 0.0
  %170 = vmatpush2.msra.mxu0 0.0
  %171 = vmatprep.subr.mxu0 0.0
  %172 = vmatpush2.msra.mxu0 0.0
  %173 = vmatprep.subr.mxu0 0.0
  %174 = vmatpush2.msra.mxu0 0.0
  %175 = vmatprep.subr.mxu0 0.0
  %176 = vmatpush2.msra.mxu0 0.0
  %177 = vmatprep.subr.mxu0 0.0
  %178 = vmatpush2.msra.mxu0 0.0
  %179 = vmatprep.subr.mxu0 0.0
  %180 = vmatpush2.msra.mxu0 0.0
  %181 = vmatprep.subr.mxu0 0.0
  %182 = vmatpush2.msra.mxu0 0.0
  %183 = vmatprep.subr.mxu0 0.0
  %184 = vmatpush2.msra.mxu0 0.0
  %185 = vmatprep.subr.mxu0 0.0
  %186 = vmatpush2.msra.mxu0 0.0
  %187 = vmatprep.mubr.f32.mxu0 0.0
  %188 = vmatmul.mubr.f32.gmra.mxu0 %v121
  %v189 = vpop.f32.mrf.mxu0
  %v190 = vadd.f32 %v118, %v189
  %v191 = vpop.f32.mrf.mxu0
  %192 = vdwg.mxu0
  %v193 = vxor.u32 %v190, 2147483648
  %v194 = vmul.f32 %v193, 1.442695
  %v195 = vpow.pop %v194
  %v196 = vadd.f32 %v195, 1.0
  %v197 = vrcp.pop %v196
  %v198 = vmul.f32 1.0, %v197
  %vm199 = vcmask 1024
  %200 = vst.msk [vmem:[%s5] sm:$0x3] %vm199, %v198
  // Predicated region
  $region22: #{adaptive_gate_fwd.1} parent=0 // pred_check
    _
  $region23: #{adaptive_gate_fwd.1} parent=0 // pred_check_branch
    %202 = sbr.rel (0) target = $region25
  $region24: #{adaptive_gate_fwd.1} parent=0 // pred_region
    _
  $region25: #{adaptive_gate_fwd.1} parent=0 // pred_fallthru
    _
  // Predicated region
  $region26: #{adaptive_gate_fwd.1} parent=0 // pred_check
    _
  $region27: #{adaptive_gate_fwd.1} parent=0 // pred_check_branch
    %204 = sbr.rel (0) target = $region29
  $region28: #{adaptive_gate_fwd.1} parent=0 // pred_region
    _
  $region29: #{adaptive_gate_fwd.1} parent=0 // pred_fallthru
    _

// kernel: branch_0_fun.1
$region0: #{branch_0_fun.1}
  #allocation0 [shape = 'u32[]', space=smem, size = 0x4, offset = 0x4, fixed_abs, tag = 'smem constant byte address 0x4 - core index']
  #allocation1 [shape = 'u32[144,128]{1,0:T(1,128)}', space=vmem, size = 0x12000, scoped, tag = 'internal scratch']
  #allocation2 [shape = 'f32[1,1]{1,0:T(1,128)S(6)}', space=smem, size = 0x200, scoped, tag = 'scoped memory for branch_0_fun.1']
  %s0 = inlined_call_operand.vmem [shape: f32[2,32], index: 0, kind: input, shape index: {}]
  %s1 = inlined_call_operand.vmem [shape: f32[64,64], index: 1, kind: input, shape index: {}]
  %s2 = inlined_call_operand.hbm [shape: f32[32,64], index: 2, kind: input, shape index: {}]
  %s3 = inlined_call_operand.vmem [shape: f32[1,64], index: 3, kind: input, shape index: {}]
  %s4 = inlined_call_operand.vmem [shape: f32[1,64], index: 4, kind: input, shape index: {}]
  %s5 = inlined_call_operand.vmem [shape: f32[1,64], index: 5, kind: input, shape index: {}]
  %s6 = inlined_call_operand.vmem [shape: f32[64,32], index: 6, kind: input, shape index: {}]
  %s7 = inlined_call_operand.vmem [shape: f32[1,32], index: 7, kind: input, shape index: {}]
  %s8 = inlined_call_operand.vmem [shape: f32[32,4], index: 8, kind: input, shape index: {}]
  %s9 = inlined_call_operand.vmem [shape: f32[1,4], index: 9, kind: input, shape index: {}]
  %s10 = inlined_call_operand.hbm [shape: f32[32,128], index: 10, kind: input, shape index: {}]
  %s11 = inlined_call_operand.vmem [shape: f32[64,128], index: 11, kind: input, shape index: {}]
  %s12 = inlined_call_operand.vmem [shape: f32[4,128], index: 12, kind: input, shape index: {}]
  %s13 = inlined_call_operand.vmem [shape: f32[1,128], index: 13, kind: input, shape index: {}]
  %s14 = inlined_call_operand.vmem [shape: f32[1,128], index: 14, kind: input, shape index: {}]
  %s15 = inlined_call_operand.vmem [shape: f32[1,128], index: 15, kind: input, shape index: {}]
  %s16 = inlined_call_operand.vmem [shape: f32[128,128], index: 16, kind: input, shape index: {}]
  %s17 = inlined_call_operand.vmem [shape: f32[1,128], index: 17, kind: input, shape index: {}]
  %s18 = inlined_call_operand.vmem [shape: f32[1,128], index: 18, kind: input, shape index: {}]
  %s19 = inlined_call_operand.vmem [shape: f32[1,128], index: 19, kind: input, shape index: {}]
  %s20 = inlined_call_operand.vmem [shape: f32[128,8], index: 20, kind: input, shape index: {}]
  %s21 = inlined_call_operand.hbm [shape: f32[1,8], index: 21, kind: input, shape index: {}]
  %s22 = inlined_call_operand.vmem [shape: f32[4,8], index: 22, kind: input, shape index: {}]
  %s23 = inlined_call_operand.<no memory space> [shape: f32[1,1], index: 23, kind: input, shape index: {}]
  %s24 = inlined_call_operand.vmem [shape: f32[2,8], index: 24, kind: output, shape index: {}]
  %s25 = sld [smem:[#allocation0]]
  $region118: #{branch_0_fun.1} parent=0
    _
  %s27 = ssub.s32 1, %s25
  %s28 = scalar_select 0, %s27, %s25
  %29 = sst [smem:[#allocation2]] %s23
  $region1: #{branch_0_fun.1} parent=0
    #allocation3 [shape = 'u8[16384]{0}', space=vmem, size = 0x4000, scoped, tag = 'input window, operand 2, single buffered']
    #allocation4 [shape = 's32[1]{0}', space=sflag, size = 0x4, scoped, tag = 'scoped memory for branch_0_fun.1']
    #allocation5 [shape = 'u8[16384]{0}', space=vmem, size = 0x4000, scoped, tag = 'input window, operand 10, single buffered']
    #allocation6 [shape = 's32[1]{0}', space=sflag, size = 0x4, scoped, tag = 'scoped memory for branch_0_fun.1']
    #allocation7 [shape = 'u8[512]{0}', space=vmem, size = 0x400, scoped, tag = 'input window, operand 21, single buffered']
    %30 = vsyncpa [#allocation4], 0
    %31 = vsyncpa [#allocation6], 0
    // Predicated region
    $region2: #{branch_0_fun.1} parent=1 // pred_check
      _
    $region3: #{branch_0_fun.1} parent=1 // pred_check_branch
      %33 = sbr.rel (0) target = $region5
    $region4: #{branch_0_fun.1} parent=1 // pred_region
      _
    $region5: #{branch_0_fun.1} parent=1 // pred_fallthru
      _
    // Predicated region
    $region6: #{branch_0_fun.1} parent=1 // pred_check
      _
    $region7: #{branch_0_fun.1} parent=1 // pred_check_branch
      %35 = sbr.rel (0) target = $region9
    $region8: #{branch_0_fun.1} parent=1 // pred_region
      _
    $region9: #{branch_0_fun.1} parent=1 // pred_fallthru
      _
    // Predicated region
    $region10: #{branch_0_fun.1} parent=1 // pred_check
      _
    $region11: #{branch_0_fun.1} parent=1 // pred_check_branch
      %37 = sbr.rel (0) target = $region13
    $region12: #{branch_0_fun.1} parent=1 // pred_region
      %s39 = ssub.s32 512, 512
      %40 = vsyncadd [#allocation4], %s39
      %s41 = sshll.u32 [#allocation3], 4
      %s42 = int_to_ptr.vmem [resolvable:$true] %s41
      %47 = dma.hbm_to_vmem [thread:$0]  %s2, 512, %s42, [#allocation4], 128, 128, 8
    $region13: #{branch_0_fun.1} parent=1 // pred_fallthru
      _
    // Predicated region
    $region14: #{branch_0_fun.1} parent=1 // pred_check
      _
    $region15: #{branch_0_fun.1} parent=1 // pred_check_branch
      %49 = sbr.rel (0) target = $region17
    $region16: #{branch_0_fun.1} parent=1 // pred_region
      _
    $region17: #{branch_0_fun.1} parent=1 // pred_fallthru
      _
    // Predicated region
    $region18: #{branch_0_fun.1} parent=1 // pred_check
      _
    $region19: #{branch_0_fun.1} parent=1 // pred_check_branch
      %51 = sbr.rel (0) target = $region21
    $region20: #{branch_0_fun.1} parent=1 // pred_region
      _
    $region21: #{branch_0_fun.1} parent=1 // pred_fallthru
      _
    // Predicated region
    $region22: #{branch_0_fun.1} parent=1 // pred_check
      _
    $region23: #{branch_0_fun.1} parent=1 // pred_check_branch
      %53 = sbr.rel (0) target = $region25
    $region24: #{branch_0_fun.1} parent=1 // pred_region
      _
    $region25: #{branch_0_fun.1} parent=1 // pred_fallthru
      _
    // Predicated region
    $region26: #{branch_0_fun.1} parent=1 // pred_check
      _
    $region27: #{branch_0_fun.1} parent=1 // pred_check_branch
      %55 = sbr.rel (0) target = $region29
    $region28: #{branch_0_fun.1} parent=1 // pred_region
      _
    $region29: #{branch_0_fun.1} parent=1 // pred_fallthru
      _
    // Predicated region
    $region30: #{branch_0_fun.1} parent=1 // pred_check
      _
    $region31: #{branch_0_fun.1} parent=1 // pred_check_branch
      %57 = sbr.rel (0) target = $region33
    $region32: #{branch_0_fun.1} parent=1 // pred_region
      _
    $region33: #{branch_0_fun.1} parent=1 // pred_fallthru
      _
    // Predicated region
    $region34: #{branch_0_fun.1} parent=1 // pred_check
      _
    $region35: #{branch_0_fun.1} parent=1 // pred_check_branch
      %59 = sbr.rel (0) target = $region37
    $region36: #{branch_0_fun.1} parent=1 // pred_region
      _
    $region37: #{branch_0_fun.1} parent=1 // pred_fallthru
      _
    // Predicated region
    $region38: #{branch_0_fun.1} parent=1 // pred_check
      _
    $region39: #{branch_0_fun.1} parent=1 // pred_check_branch
      %61 = sbr.rel (0) target = $region41
    $region40: #{branch_0_fun.1} parent=1 // pred_region
      _
    $region41: #{branch_0_fun.1} parent=1 // pred_fallthru
      _
    // Predicated region
    $region42: #{branch_0_fun.1} parent=1 // pred_check
      _
    $region43: #{branch_0_fun.1} parent=1 // pred_check_branch
      %63 = sbr.rel (0) target = $region45
    $region44: #{branch_0_fun.1} parent=1 // pred_region
      %s65 = ssub.s32 512, 512
      %66 = vsyncadd [#allocation6], %s65
      %s67 = sshll.u32 [#allocation5], 4
      %s68 = int_to_ptr.vmem [resolvable:$true] %s67
      %73 = dma.hbm_to_vmem [thread:$0]  %s10, 512, %s68, [#allocation6], 128, 128, 8
    $region45: #{branch_0_fun.1} parent=1 // pred_fallthru
      _
    // Predicated region
    $region46: #{branch_0_fun.1} parent=1 // pred_check
      _
    $region47: #{branch_0_fun.1} parent=1 // pred_check_branch
      %75 = sbr.rel (0) target = $region49
    $region48: #{branch_0_fun.1} parent=1 // pred_region
      _
    $region49: #{branch_0_fun.1} parent=1 // pred_fallthru
      _
    // Predicated region
    $region50: #{branch_0_fun.1} parent=1 // pred_check
      _
    $region51: #{branch_0_fun.1} parent=1 // pred_check_branch
      %77 = sbr.rel (0) target = $region53
    $region52: #{branch_0_fun.1} parent=1 // pred_region
      _
    $region53: #{branch_0_fun.1} parent=1 // pred_fallthru
      _
    // Predicated region
    $region54: #{branch_0_fun.1} parent=1 // pred_check
      _
    $region55: #{branch_0_fun.1} parent=1 // pred_check_branch
      %79 = sbr.rel (0) target = $region57
    $region56: #{branch_0_fun.1} parent=1 // pred_region
      _
    $region57: #{branch_0_fun.1} parent=1 // pred_fallthru
      _
    // Predicated region
    $region58: #{branch_0_fun.1} parent=1 // pred_check
      _
    $region59: #{branch_0_fun.1} parent=1 // pred_check_branch
      %81 = sbr.rel (0) target = $region61
    $region60: #{branch_0_fun.1} parent=1 // pred_region
      _
    $region61: #{branch_0_fun.1} parent=1 // pred_fallthru
      _
    // Predicated region
    $region62: #{branch_0_fun.1} parent=1 // pred_check
      _
    $region63: #{branch_0_fun.1} parent=1 // pred_check_branch
      %83 = sbr.rel (0) target = $region65
    $region64: #{branch_0_fun.1} parent=1 // pred_region
      _
    $region65: #{branch_0_fun.1} parent=1 // pred_fallthru
      _
    // Predicated region
    $region66: #{branch_0_fun.1} parent=1 // pred_check
      _
    $region67: #{branch_0_fun.1} parent=1 // pred_check_branch
      %85 = sbr.rel (0) target = $region69
    $region68: #{branch_0_fun.1} parent=1 // pred_region
      _
    $region69: #{branch_0_fun.1} parent=1 // pred_fallthru
      _
    // Predicated region
    $region70: #{branch_0_fun.1} parent=1 // pred_check
      _
    $region71: #{branch_0_fun.1} parent=1 // pred_check_branch
      %87 = sbr.rel (0) target = $region73
    $region72: #{branch_0_fun.1} parent=1 // pred_region
      _
    $region73: #{branch_0_fun.1} parent=1 // pred_fallthru
      _
    // Predicated region
    $region74: #{branch_0_fun.1} parent=1 // pred_check
      _
    $region75: #{branch_0_fun.1} parent=1 // pred_check_branch
      %89 = sbr.rel (0) target = $region77
    $region76: #{branch_0_fun.1} parent=1 // pred_region
      _
    $region77: #{branch_0_fun.1} parent=1 // pred_fallthru
      _
    // Predicated region
    $region78: #{branch_0_fun.1} parent=1 // pred_check
      _
    $region79: #{branch_0_fun.1} parent=1 // pred_check_branch
      %91 = sbr.rel (0) target = $region81
    $region80: #{branch_0_fun.1} parent=1 // pred_region
      _
    $region81: #{branch_0_fun.1} parent=1 // pred_fallthru
      _
    // Predicated region
    $region82: #{branch_0_fun.1} parent=1 // pred_check
      _
    $region83: #{branch_0_fun.1} parent=1 // pred_check_branch
      %93 = sbr.rel (0) target = $region85
    $region84: #{branch_0_fun.1} parent=1 // pred_region
      _
    $region85: #{branch_0_fun.1} parent=1 // pred_fallthru
      _
    // Predicated region
    $region86: #{branch_0_fun.1} parent=1 // pred_check
      _
    $region87: #{branch_0_fun.1} parent=1 // pred_check_branch
      %95 = sbr.rel (0) target = $region89
    $region88: #{branch_0_fun.1} parent=1 // pred_region
      %s97 = ssub.s32 16, 16
      %98 = vsyncadd [#allocation6], %s97
      %s100 = sshll.u32 [#allocation7], 4
      %s101 = int_to_ptr.vmem [resolvable:$true] %s100
      %103 = dma.hbm_to_vmem [thread:$0]  %s21, 16, %s101, [#allocation6]
    $region89: #{branch_0_fun.1} parent=1 // pred_fallthru
      _
    // Predicated region
    $region90: #{branch_0_fun.1} parent=1 // pred_check
      _
    $region91: #{branch_0_fun.1} parent=1 // pred_check_branch
      %105 = sbr.rel (0) target = $region93
    $region92: #{branch_0_fun.1} parent=1 // pred_region
      _
    $region93: #{branch_0_fun.1} parent=1 // pred_fallthru
      _
    // Predicated region
    $region94: #{branch_0_fun.1} parent=1 // pred_check
      _
    $region95: #{branch_0_fun.1} parent=1 // pred_check_branch
      %107 = sbr.rel (0) target = $region97
    $region96: #{branch_0_fun.1} parent=1 // pred_region
      _
    $region97: #{branch_0_fun.1} parent=1 // pred_fallthru
      _
    // Predicated region
    $region98: #{branch_0_fun.1} parent=1 // pred_check
      _
    $region99: #{branch_0_fun.1} parent=1 // pred_check_branch
      %109 = sbr.rel (0) target = $region101
    $region100: #{branch_0_fun.1} parent=1 // pred_region
      %110 = dma.done [#allocation4], 512
    $region101: #{branch_0_fun.1} parent=1 // pred_fallthru
      _
    // Predicated region
    $region102: #{branch_0_fun.1} parent=1 // pred_check
      _
    $region103: #{branch_0_fun.1} parent=1 // pred_check_branch
      %112 = sbr.rel (0) target = $region105
    $region104: #{branch_0_fun.1} parent=1 // pred_region
      %113 = dma.done [#allocation6], 512
    $region105: #{branch_0_fun.1} parent=1 // pred_fallthru
      _
    // Predicated region
    $region106: #{branch_0_fun.1} parent=1 // pred_check
      _
    $region107: #{branch_0_fun.1} parent=1 // pred_check_branch
      %115 = sbr.rel (0) target = $region109
    $region108: #{branch_0_fun.1} parent=1 // pred_region
      %116 = dma.done [#allocation6], 16
    $region109: #{branch_0_fun.1} parent=1 // pred_fallthru
      _
    %v117 = vld [vmem:[%s0] sm:$0x3]
    %v118 = vld [vmem:[%s1] sm:$0xff]
    %v119 = vld [vmem:[%s1 + $0x8] sm:$0xff]
    %v120 = vld [vmem:[%s1 + $0x10] sm:$0xff]
    %v121 = vld [vmem:[%s1 + $0x18] sm:$0xff]
    %v122 = vld [vmem:[%s1 + $0x20] sm:$0xff]
    %v123 = vld [vmem:[%s1 + $0x28] sm:$0xff]
    %v124 = vld [vmem:[%s1 + $0x30] sm:$0xff]
    %v125 = vld [vmem:[%s1 + $0x38] sm:$0xff]
    %v126 = vld [vmem:[#allocation3] sm:$0xff]
    %v127 = vld [vmem:[#allocation3 + $0x8] sm:$0xff]
    %v128 = vld [vmem:[#allocation3 + $0x10] sm:$0xff]
    %v129 = vld [vmem:[#allocation3 + $0x18] sm:$0xff]
    %v130 = vld [vmem:[%s3] sm:$0x1]
    %v131 = vld [vmem:[%s4] sm:$0x1]
    %v132 = vld [vmem:[%s5] sm:$0x1]
    %v133 = vld [vmem:[%s6] sm:$0xff]
    %v134 = vld [vmem:[%s6 + $0x8] sm:$0xff]
    %v135 = vld [vmem:[%s6 + $0x10] sm:$0xff]
    %v136 = vld [vmem:[%s6 + $0x18] sm:$0xff]
    %v137 = vld [vmem:[%s6 + $0x20] sm:$0xff]
    %v138 = vld [vmem:[%s6 + $0x28] sm:$0xff]
    %v139 = vld [vmem:[%s6 + $0x30] sm:$0xff]
    %v140 = vld [vmem:[%s6 + $0x38] sm:$0xff]
    %v141 = vld [vmem:[%s7] sm:$0x1]
    %v142 = vld [vmem:[%s8] sm:$0xff]
    %v143 = vld [vmem:[%s8 + $0x8] sm:$0xff]
    %v144 = vld [vmem:[%s8 + $0x10] sm:$0xff]
    %v145 = vld [vmem:[%s8 + $0x18] sm:$0xff]
    %v146 = vld [vmem:[%s9] sm:$0x1]
    %v148 = vlaneseq
    %v149 = vshrl.u32 %v148, 7
    %v150 = vsub.s32 0, %v149
    %v151 = vrot.slane %v130, %v150
    %vm153 = vcmask 261120
    %v155 = vsel %vm153, %v117, 0
    %157 = vmatprep.subr.mxu0 0.0
    %158 = vmatpush1.msra.mxu0 0.0
    %159 = vmatprep.subr.mxu0 0.0
    %160 = vmatpush1.msra.mxu0 0.0
    %161 = vmatprep.subr.mxu0 0.0
    %162 = vmatpush1.msra.mxu0 0.0
    %163 = vmatprep.subr.mxu0 0.0
    %164 = vmatpush1.msra.mxu0 0.0
    %165 = vmatprep.subr.mxu0 0.0
    %166 = vmatpush1.msra.mxu0 0.0
    %167 = vmatprep.subr.mxu0 0.0
    %168 = vmatpush1.msra.mxu0 0.0
    %169 = vmatprep.subr.mxu0 0.0
    %170 = vmatpush1.msra.mxu0 0.0
    %171 = vmatprep.subr.mxu0 0.0
    %172 = vmatpush1.msra.mxu0 0.0
    %173 = vmatprep.subr.mxu0 0.0
    %174 = vmatpush1.msra.mxu0 0.0
    %175 = vmatprep.subr.mxu0 0.0
    %176 = vmatpush1.msra.mxu0 0.0
    %177 = vmatprep.subr.mxu0 0.0
    %178 = vmatpush1.msra.mxu0 0.0
    %179 = vmatprep.subr.mxu0 0.0
    %180 = vmatpush1.msra.mxu0 0.0
    %181 = vmatprep.subr.mxu0 0.0
    %182 = vmatpush1.msra.mxu0 %v129
    %183 = vmatprep.subr.mxu0 0.0
    %184 = vmatpush1.msra.mxu0 %v128
    %185 = vmatprep.subr.mxu0 0.0
    %186 = vmatpush1.msra.mxu0 %v127
    %187 = vmatprep.subr.mxu0 0.0
    %188 = vmatpush1.msra.mxu0 %v126
    %189 = vmatprep.subr.mxu0 0.0
    %190 = vmatpush2.msra.mxu0 0.0
    %191 = vmatprep.subr.mxu0 0.0
    %192 = vmatpush2.msra.mxu0 0.0
    %193 = vmatprep.subr.mxu0 0.0
    %194 = vmatpush2.msra.mxu0 0.0
    %195 = vmatprep.subr.mxu0 0.0
    %196 = vmatpush2.msra.mxu0 0.0
    %197 = vmatprep.subr.mxu0 0.0
    %198 = vmatpush2.msra.mxu0 0.0
    %199 = vmatprep.subr.mxu0 0.0
    %200 = vmatpush2.msra.mxu0 0.0
    %201 = vmatprep.subr.mxu0 0.0
    %202 = vmatpush2.msra.mxu0 0.0
    %203 = vmatprep.subr.mxu0 0.0
    %204 = vmatpush2.msra.mxu0 0.0
    %205 = vmatprep.subr.mxu0 0.0
    %206 = vmatpush2.msra.mxu0 0.0
    %207 = vmatprep.subr.mxu0 0.0
    %208 = vmatpush2.msra.mxu0 0.0
    %209 = vmatprep.subr.mxu0 0.0
    %210 = vmatpush2.msra.mxu0 0.0
    %211 = vmatprep.subr.mxu0 0.0
    %212 = vmatpush2.msra.mxu0 0.0
    %213 = vmatprep.subr.mxu0 0.0
    %214 = vmatpush2.msra.mxu0 0.0
    %215 = vmatprep.subr.mxu0 0.0
    %216 = vmatpush2.msra.mxu0 0.0
    %217 = vmatprep.subr.mxu0 0.0
    %218 = vmatpush2.msra.mxu0 0.0
    %219 = vmatprep.subr.mxu0 0.0
    %220 = vmatpush2.msra.mxu0 0.0
    %221 = vmatprep.mubr.f32.mxu0 0.0
    %222 = vmatmul.mubr.f32.gmra.mxu0 %v155
    %v223 = vpop.f32.mrf.mxu0
    %v224 = vadd.f32 %v151, %v223
    %v225 = vpop.f32.mrf.mxu0
    %226 = vdwg.mxu0
    %v227 = vmax.f32 %v224, 0.0
    %vm228 = vcmask 523264
    %v230 = vsel %vm228, %v227, 0
    %232 = vmatprep.subr.mxu0 0.0
    %233 = vmatpush1.msra.mxu0 0.0
    %234 = vmatprep.subr.mxu0 0.0
    %235 = vmatpush1.msra.mxu0 0.0
    %236 = vmatprep.subr.mxu0 0.0
    %237 = vmatpush1.msra.mxu0 0.0
    %238 = vmatprep.subr.mxu0 0.0
    %239 = vmatpush1.msra.mxu0 0.0
    %240 = vmatprep.subr.mxu0 0.0
    %241 = vmatpush1.msra.mxu0 0.0
    %242 = vmatprep.subr.mxu0 0.0
    %243 = vmatpush1.msra.mxu0 0.0
    %244 = vmatprep.subr.mxu0 0.0
    %245 = vmatpush1.msra.mxu0 0.0
    %246 = vmatprep.subr.mxu0 0.0
    %247 = vmatpush1.msra.mxu0 0.0
    %248 = vmatprep.subr.mxu0 0.0
    %249 = vmatpush1.msra.mxu0 %v125
    %250 = vmatprep.subr.mxu0 0.0
    %251 = vmatpush1.msra.mxu0 %v124
    %252 = vmatprep.subr.mxu0 0.0
    %253 = vmatpush1.msra.mxu0 %v123
    %254 = vmatprep.subr.mxu0 0.0
    %255 = vmatpush1.msra.mxu0 %v122
    %256 = vmatprep.subr.mxu0 0.0
    %257 = vmatpush1.msra.mxu0 %v121
    %258 = vmatprep.subr.mxu0 0.0
    %259 = vmatpush1.msra.mxu0 %v120
    %260 = vmatprep.subr.mxu0 0.0
    %261 = vmatpush1.msra.mxu0 %v119
    %262 = vmatprep.subr.mxu0 0.0
    %263 = vmatpush1.msra.mxu0 %v118
    %264 = vmatprep.subr.mxu0 0.0
    %265 = vmatpush2.msra.mxu0 0.0
    %266 = vmatprep.subr.mxu0 0.0
    %267 = vmatpush2.msra.mxu0 0.0
    %268 = vmatprep.subr.mxu0 0.0
    %269 = vmatpush2.msra.mxu0 0.0
    %270 = vmatprep.subr.mxu0 0.0
    %271 = vmatpush2.msra.mxu0 0.0
    %272 = vmatprep.subr.mxu0 0.0
    %273 = vmatpush2.msra.mxu0 0.0
    %274 = vmatprep.subr.mxu0 0.0
    %275 = vmatpush2.msra.mxu0 0.0
    %276 = vmatprep.subr.mxu0 0.0
    %277 = vmatpush2.msra.mxu0 0.0
    %278 = vmatprep.subr.mxu0 0.0
    %279 = vmatpush2.msra.mxu0 0.0
    %280 = vmatprep.subr.mxu0 0.0
    %281 = vmatpush2.msra.mxu0 0.0
    %282 = vmatprep.subr.mxu0 0.0
    %283 = vmatpush2.msra.mxu0 0.0
    %284 = vmatprep.subr.mxu0 0.0
    %285 = vmatpush2.msra.mxu0 0.0
    %286 = vmatprep.subr.mxu0 0.0
    %287 = vmatpush2.msra.mxu0 0.0
    %288 = vmatprep.subr.mxu0 0.0
    %289 = vmatpush2.msra.mxu0 0.0
    %290 = vmatprep.subr.mxu0 0.0
    %291 = vmatpush2.msra.mxu0 0.0
    %292 = vmatprep.subr.mxu0 0.0
    %293 = vmatpush2.msra.mxu0 0.0
    %294 = vmatprep.subr.mxu0 0.0
    %295 = vmatpush2.msra.mxu0 0.0
    %296 = vmatprep.mubr.f32.mxu0 0.0
    %297 = vmatmul.mubr.f32.gmra.mxu0 %v230
    %v298 = vpop.f32.mrf.mxu0
    %v299 = vadd.f32 0.0, %v298
    %v300 = vpop.f32.mrf.mxu0
    %301 = vdwg.mxu0
    %v302 = vmul.f32 %v227, %v227
    %v304 = vsel %vm228, %v302, 0
    %306 = vmatprep.subr.mxu0 0.0
    %307 = vmatpush1.msra.mxu0 0.0
    %308 = vmatprep.subr.mxu0 0.0
    %309 = vmatpush1.msra.mxu0 0.0
    %310 = vmatprep.subr.mxu0 0.0
    %311 = vmatpush1.msra.mxu0 0.0
    %312 = vmatprep.subr.mxu0 0.0
    %313 = vmatpush1.msra.mxu0 0.0
    %314 = vmatprep.subr.mxu0 0.0
    %315 = vmatpush1.msra.mxu0 0.0
    %316 = vmatprep.subr.mxu0 0.0
    %317 = vmatpush1.msra.mxu0 0.0
    %318 = vmatprep.subr.mxu0 0.0
    %319 = vmatpush1.msra.mxu0 0.0
    %320 = vmatprep.subr.mxu0 0.0
    %321 = vmatpush1.msra.mxu0 0.0
    %322 = vmatprep.subr.mxu0 0.0
    %323 = vmatpush1.msra.mxu0 %v125
    %324 = vmatprep.subr.mxu0 0.0
    %325 = vmatpush1.msra.mxu0 %v124
    %326 = vmatprep.subr.mxu0 0.0
    %327 = vmatpush1.msra.mxu0 %v123
    %328 = vmatprep.subr.mxu0 0.0
    %329 = vmatpush1.msra.mxu0 %v122
    %330 = vmatprep.subr.mxu0 0.0
    %331 = vmatpush1.msra.mxu0 %v121
    %332 = vmatprep.subr.mxu0 0.0
    %333 = vmatpush1.msra.mxu0 %v120
    %334 = vmatprep.subr.mxu0 0.0
    %335 = vmatpush1.msra.mxu0 %v119
    %336 = vmatprep.subr.mxu0 0.0
    %337 = vmatpush1.msra.mxu0 %v118
    %338 = vmatprep.subr.mxu0 0.0
    %339 = vmatpush2.msra.mxu0 0.0
    %340 = vmatprep.subr.mxu0 0.0
    %341 = vmatpush2.msra.mxu0 0.0
    %342 = vmatprep.subr.mxu0 0.0
    %343 = vmatpush2.msra.mxu0 0.0
    %344 = vmatprep.subr.mxu0 0.0
    %345 = vmatpush2.msra.mxu0 0.0
    %346 = vmatprep.subr.mxu0 0.0
    %347 = vmatpush2.msra.mxu0 0.0
    %348 = vmatprep.subr.mxu0 0.0
    %349 = vmatpush2.msra.mxu0 0.0
    %350 = vmatprep.subr.mxu0 0.0
    %351 = vmatpush2.msra.mxu0 0.0
    %352 = vmatprep.subr.mxu0 0.0
    %353 = vmatpush2.msra.mxu0 0.0
    %354 = vmatprep.subr.mxu0 0.0
    %355 = vmatpush2.msra.mxu0 0.0
    %356 = vmatprep.subr.mxu0 0.0
    %357 = vmatpush2.msra.mxu0 0.0
    %358 = vmatprep.subr.mxu0 0.0
    %359 = vmatpush2.msra.mxu0 0.0
    %360 = vmatprep.subr.mxu0 0.0
    %361 = vmatpush2.msra.mxu0 0.0
    %362 = vmatprep.subr.mxu0 0.0
    %363 = vmatpush2.msra.mxu0 0.0
    %364 = vmatprep.subr.mxu0 0.0
    %365 = vmatpush2.msra.mxu0 0.0
    %366 = vmatprep.subr.mxu0 0.0
    %367 = vmatpush2.msra.mxu0 0.0
    %368 = vmatprep.subr.mxu0 0.0
    %369 = vmatpush2.msra.mxu0 0.0
    %370 = vmatprep.mubr.f32.mxu0 0.0
    %371 = vmatmul.mubr.f32.gmra.mxu0 %v304
    %v372 = vpop.f32.mrf.mxu0
    %v373 = vadd.f32 0.0, %v372
    %v374 = vpop.f32.mrf.mxu0
    %375 = vdwg.mxu0
    %v376 = vmul.f32 %v299, %v299
    %v377 = vsub.f32 %v373, %v376
    %v378 = vsub.f32 %v227, %v299
    %v379 = vadd.f32 %v377, 1e-05
    %v380 = vrsqrt.pop %v379
    %v381 = vmul.f32 %v378, %v380
    %v383 = vlaneseq
    %v384 = vshrl.u32 %v383, 7
    %v385 = vsub.s32 0, %v384
    %v386 = vrot.slane %v131, %v385
    %v388 = vmul.f32 %v381, %v386
    %v390 = vlaneseq
    %v391 = vshrl.u32 %v390, 7
    %v392 = vsub.s32 0, %v391
    %v393 = vrot.slane %v132, %v392
    %v395 = vadd.f32 %v388, %v393
    %v397 = vlaneseq
    %v398 = vshrl.u32 %v397, 7
    %v399 = vsub.s32 0, %v398
    %v400 = vrot.slane %v141, %v399
    %v403 = vsel %vm228, %v395, 0
    %405 = vmatprep.subr.mxu0 0.0
    %406 = vmatpush1.msra.mxu0 0.0
    %407 = vmatprep.subr.mxu0 0.0
    %408 = vmatpush1.msra.mxu0 0.0
    %409 = vmatprep.subr.mxu0 0.0
    %410 = vmatpush1.msra.mxu0 0.0
    %411 = vmatprep.subr.mxu0 0.0
    %412 = vmatpush1.msra.mxu0 0.0
    %413 = vmatprep.subr.mxu0 0.0
    %414 = vmatpush1.msra.mxu0 0.0
    %415 = vmatprep.subr.mxu0 0.0
    %416 = vmatpush1.msra.mxu0 0.0
    %417 = vmatprep.subr.mxu0 0.0
    %418 = vmatpush1.msra.mxu0 0.0
    %419 = vmatprep.subr.mxu0 0.0
    %420 = vmatpush1.msra.mxu0 0.0
    %421 = vmatprep.subr.mxu0 0.0
    %422 = vmatpush1.msra.mxu0 %v140
    %423 = vmatprep.subr.mxu0 0.0
    %424 = vmatpush1.msra.mxu0 %v139
    %425 = vmatprep.subr.mxu0 0.0
    %426 = vmatpush1.msra.mxu0 %v138
    %427 = vmatprep.subr.mxu0 0.0
    %428 = vmatpush1.msra.mxu0 %v137
    %429 = vmatprep.subr.mxu0 0.0
    %430 = vmatpush1.msra.mxu0 %v136
    %431 = vmatprep.subr.mxu0 0.0
    %432 = vmatpush1.msra.mxu0 %v135
    %433 = vmatprep.subr.mxu0 0.0
    %434 = vmatpush1.msra.mxu0 %v134
    %435 = vmatprep.subr.mxu0 0.0
    %436 = vmatpush1.msra.mxu0 %v133
    %437 = vmatprep.subr.mxu0 0.0
    %438 = vmatpush2.msra.mxu0 0.0
    %439 = vmatprep.subr.mxu0 0.0
    %440 = vmatpush2.msra.mxu0 0.0
    %441 = vmatprep.subr.mxu0 0.0
    %442 = vmatpush2.msra.mxu0 0.0
    %443 = vmatprep.subr.mxu0 0.0
    %444 = vmatpush2.msra.mxu0 0.0
    %445 = vmatprep.subr.mxu0 0.0
    %446 = vmatpush2.msra.mxu0 0.0
    %447 = vmatprep.subr.mxu0 0.0
    %448 = vmatpush2.msra.mxu0 0.0
    %449 = vmatprep.subr.mxu0 0.0
    %450 = vmatpush2.msra.mxu0 0.0
    %451 = vmatprep.subr.mxu0 0.0
    %452 = vmatpush2.msra.mxu0 0.0
    %453 = vmatprep.subr.mxu0 0.0
    %454 = vmatpush2.msra.mxu0 0.0
    %455 = vmatprep.subr.mxu0 0.0
    %456 = vmatpush2.msra.mxu0 0.0
    %457 = vmatprep.subr.mxu0 0.0
    %458 = vmatpush2.msra.mxu0 0.0
    %459 = vmatprep.subr.mxu0 0.0
    %460 = vmatpush2.msra.mxu0 0.0
    %461 = vmatprep.subr.mxu0 0.0
    %462 = vmatpush2.msra.mxu0 0.0
    %463 = vmatprep.subr.mxu0 0.0
    %464 = vmatpush2.msra.mxu0 0.0
    %465 = vmatprep.subr.mxu0 0.0
    %466 = vmatpush2.msra.mxu0 0.0
    %467 = vmatprep.subr.mxu0 0.0
    %468 = vmatpush2.msra.mxu0 0.0
    %469 = vmatprep.mubr.f32.mxu0 0.0
    %470 = vmatmul.mubr.f32.gmra.mxu0 %v403
    %v471 = vpop.f32.mrf.mxu0
    %v472 = vadd.f32 %v400, %v471
    %v473 = vpop.f32.mrf.mxu0
    %474 = vdwg.mxu0
    %v475 = vmax.f32 %v472, 0.0
    %v477 = vlaneseq
    %v478 = vshrl.u32 %v477, 7
    %v479 = vsub.s32 0, %v478
    %v480 = vrot.slane %v146, %v479
    %v483 = vsel %vm153, %v475, 0
    %485 = vmatprep.subr.mxu0 0.0
    %486 = vmatpush1.msra.mxu0 0.0
    %487 = vmatprep.subr.mxu0 0.0
    %488 = vmatpush1.msra.mxu0 0.0
    %489 = vmatprep.subr.mxu0 0.0
    %490 = vmatpush1.msra.mxu0 0.0
    %491 = vmatprep.subr.mxu0 0.0
    %492 = vmatpush1.msra.mxu0 0.0
    %493 = vmatprep.subr.mxu0 0.0
    %494 = vmatpush1.msra.mxu0 0.0
    %495 = vmatprep.subr.mxu0 0.0
    %496 = vmatpush1.msra.mxu0 0.0
    %497 = vmatprep.subr.mxu0 0.0
    %498 = vmatpush1.msra.mxu0 0.0
    %499 = vmatprep.subr.mxu0 0.0
    %500 = vmatpush1.msra.mxu0 0.0
    %501 = vmatprep.subr.mxu0 0.0
    %502 = vmatpush1.msra.mxu0 0.0
    %503 = vmatprep.subr.mxu0 0.0
    %504 = vmatpush1.msra.mxu0 0.0
    %505 = vmatprep.subr.mxu0 0.0
    %506 = vmatpush1.msra.mxu0 0.0
    %507 = vmatprep.subr.mxu0 0.0
    %508 = vmatpush1.msra.mxu0 0.0
    %509 = vmatprep.subr.mxu0 0.0
    %510 = vmatpush1.msra.mxu0 %v145
    %511 = vmatprep.subr.mxu0 0.0
    %512 = vmatpush1.msra.mxu0 %v144
    %513 = vmatprep.subr.mxu0 0.0
    %514 = vmatpush1.msra.mxu0 %v143
    %515 = vmatprep.subr.mxu0 0.0
    %516 = vmatpush1.msra.mxu0 %v142
    %517 = vmatprep.subr.mxu0 0.0
    %518 = vmatpush2.msra.mxu0 0.0
    %519 = vmatprep.subr.mxu0 0.0
    %520 = vmatpush2.msra.mxu0 0.0
    %521 = vmatprep.subr.mxu0 0.0
    %522 = vmatpush2.msra.mxu0 0.0
    %523 = vmatprep.subr.mxu0 0.0
    %524 = vmatpush2.msra.mxu0 0.0
    %525 = vmatprep.subr.mxu0 0.0
    %526 = vmatpush2.msra.mxu0 0.0
    %527 = vmatprep.subr.mxu0 0.0
    %528 = vmatpush2.msra.mxu0 0.0
    %529 = vmatprep.subr.mxu0 0.0
    %530 = vmatpush2.msra.mxu0 0.0
    %531 = vmatprep.subr.mxu0 0.0
    %532 = vmatpush2.msra.mxu0 0.0
    %533 = vmatprep.subr.mxu0 0.0
    %534 = vmatpush2.msra.mxu0 0.0
    %535 = vmatprep.subr.mxu0 0.0
    %536 = vmatpush2.msra.mxu0 0.0
    %537 = vmatprep.subr.mxu0 0.0
    %538 = vmatpush2.msra.mxu0 0.0
    %539 = vmatprep.subr.mxu0 0.0
    %540 = vmatpush2.msra.mxu0 0.0
    %541 = vmatprep.subr.mxu0 0.0
    %542 = vmatpush2.msra.mxu0 0.0
    %543 = vmatprep.subr.mxu0 0.0
    %544 = vmatpush2.msra.mxu0 0.0
    %545 = vmatprep.subr.mxu0 0.0
    %546 = vmatpush2.msra.mxu0 0.0
    %547 = vmatprep.subr.mxu0 0.0
    %548 = vmatpush2.msra.mxu0 0.0
    %549 = vmatprep.mubr.f32.mxu0 0.0
    %550 = vmatmul.mubr.f32.gmra.mxu0 %v483
    %v551 = vpop.f32.mrf.mxu0
    %v552 = vadd.f32 %v480, %v551
    %v553 = vpop.f32.mrf.mxu0
    %554 = vdwg.mxu0
    %vm555 = vcmask 25600
    %v556 = vsel %vm555, %v552, -inf
    %557 = vmax.xlane.f32.xlu0 %v556
    %v558 = vpop.xlane.xlu0 %557
    %v559 = vsub.f32 %v552, %v558
    %v560 = vmul.f32 %v559, 1.442695
    %v561 = vpow.pop %v560
    %v562 = vsel %vm555, %v561, 0.0
    %563 = vadd.xlane.f32.xlu0 %v562
    %v564 = vpop.xlane.xlu0 %563
    %v565 = vrcp.pop %v564
    %v566 = vmul.f32 %v561, %v565
    %v567 = vld [vmem:[#allocation5] sm:$0xff]
    %v568 = vld [vmem:[#allocation5 + $0x8] sm:$0xff]
    %v569 = vld [vmem:[#allocation5 + $0x10] sm:$0xff]
    %v570 = vld [vmem:[#allocation5 + $0x18] sm:$0xff]
    %v571 = vld [vmem:[%s11] sm:$0xff]
    %v572 = vld [vmem:[%s11 + $0x8] sm:$0xff]
    %v573 = vld [vmem:[%s11 + $0x10] sm:$0xff]
    %v574 = vld [vmem:[%s11 + $0x18] sm:$0xff]
    %v575 = vld [vmem:[%s11 + $0x20] sm:$0xff]
    %v576 = vld [vmem:[%s11 + $0x28] sm:$0xff]
    %v577 = vld [vmem:[%s11 + $0x30] sm:$0xff]
    %v578 = vld [vmem:[%s11 + $0x38] sm:$0xff]
    %579 = vmatprep.subr.mxu0 0.0
    %580 = vmatpush1.msra.mxu0 0.0
    %581 = vmatprep.subr.mxu0 0.0
    %582 = vmatpush1.msra.mxu0 0.0
    %583 = vmatprep.subr.mxu0 0.0
    %584 = vmatpush1.msra.mxu0 0.0
    %585 = vmatprep.subr.mxu0 0.0
    %586 = vmatpush1.msra.mxu0 0.0
    %587 = vmatprep.subr.mxu0 0.0
    %588 = vmatpush1.msra.mxu0 0.0
    %589 = vmatprep.subr.mxu0 0.0
    %590 = vmatpush1.msra.mxu0 0.0
    %591 = vmatprep.subr.mxu0 0.0
    %592 = vmatpush1.msra.mxu0 0.0
    %593 = vmatprep.subr.mxu0 0.0
    %594 = vmatpush1.msra.mxu0 0.0
    %595 = vmatprep.subr.mxu0 0.0
    %596 = vmatpush1.msra.mxu0 %v578
    %597 = vmatprep.subr.mxu0 0.0
    %598 = vmatpush1.msra.mxu0 %v577
    %599 = vmatprep.subr.mxu0 0.0
    %600 = vmatpush1.msra.mxu0 %v576
    %601 = vmatprep.subr.mxu0 0.0
    %602 = vmatpush1.msra.mxu0 %v575
    %603 = vmatprep.subr.mxu0 0.0
    %604 = vmatpush1.msra.mxu0 %v574
    %605 = vmatprep.subr.mxu0 0.0
    %606 = vmatpush1.msra.mxu0 %v573
    %607 = vmatprep.subr.mxu0 0.0
    %608 = vmatpush1.msra.mxu0 %v572
    %609 = vmatprep.subr.mxu0 0.0
    %610 = vmatpush1.msra.mxu0 %v571
    %611 = vmatprep.subr.mxu0 0.0
    %612 = vmatpush2.msra.mxu0 0.0
    %613 = vmatprep.subr.mxu0 0.0
    %614 = vmatpush2.msra.mxu0 0.0
    %615 = vmatprep.subr.mxu0 0.0
    %616 = vmatpush2.msra.mxu0 0.0
    %617 = vmatprep.subr.mxu0 0.0
    %618 = vmatpush2.msra.mxu0 0.0
    %619 = vmatprep.subr.mxu0 0.0
    %620 = vmatpush2.msra.mxu0 0.0
    %621 = vmatprep.subr.mxu0 0.0
    %622 = vmatpush2.msra.mxu0 0.0
    %623 = vmatprep.subr.mxu0 0.0
    %624 = vmatpush2.msra.mxu0 0.0
    %625 = vmatprep.subr.mxu0 0.0
    %626 = vmatpush2.msra.mxu0 0.0
    %627 = vmatprep.subr.mxu0 0.0
    %628 = vmatpush2.msra.mxu0 0.0
    %629 = vmatprep.subr.mxu0 0.0
    %630 = vmatpush2.msra.mxu0 0.0
    %631 = vmatprep.subr.mxu0 0.0
    %632 = vmatpush2.msra.mxu0 0.0
    %633 = vmatprep.subr.mxu0 0.0
    %634 = vmatpush2.msra.mxu0 0.0
    %635 = vmatprep.subr.mxu0 0.0
    %636 = vmatpush2.msra.mxu0 0.0
    %637 = vmatprep.subr.mxu0 0.0
    %638 = vmatpush2.msra.mxu0 0.0
    %639 = vmatprep.subr.mxu0 0.0
    %640 = vmatpush2.msra.mxu0 0.0
    %641 = vmatprep.subr.mxu0 0.0
    %642 = vmatpush2.msra.mxu0 0.0
    %643 = vmatprep.mubr.f32.mxu0 0.0
    %644 = vmatmul.mubr.f32.gmra.mxu0 %v403
    %v645 = vpop.f32.mrf.mxu0
    %v646 = vadd.f32 0.0, %v645
    %v647 = vpop.f32.mrf.mxu0
    %648 = vdwg.mxu0
    %649 = vmatprep.subr.mxu0 0.0
    %650 = vmatpush1.msra.mxu0 0.0
    %651 = vmatprep.subr.mxu0 0.0
    %652 = vmatpush1.msra.mxu0 0.0
    %653 = vmatprep.subr.mxu0 0.0
    %654 = vmatpush1.msra.mxu0 0.0
    %655 = vmatprep.subr.mxu0 0.0
    %656 = vmatpush1.msra.mxu0 0.0
    %657 = vmatprep.subr.mxu0 0.0
    %658 = vmatpush1.msra.mxu0 0.0
    %659 = vmatprep.subr.mxu0 0.0
    %660 = vmatpush1.msra.mxu0 0.0
    %661 = vmatprep.subr.mxu0 0.0
    %662 = vmatpush1.msra.mxu0 0.0
    %663 = vmatprep.subr.mxu0 0.0
    %664 = vmatpush1.msra.mxu0 0.0
    %665 = vmatprep.subr.mxu0 0.0
    %666 = vmatpush1.msra.mxu0 0.0
    %667 = vmatprep.subr.mxu0 0.0
    %668 = vmatpush1.msra.mxu0 0.0
    %669 = vmatprep.subr.mxu0 0.0
    %670 = vmatpush1.msra.mxu0 0.0
    %671 = vmatprep.subr.mxu0 0.0
    %672 = vmatpush1.msra.mxu0 0.0
    %673 = vmatprep.subr.mxu0 0.0
    %674 = vmatpush1.msra.mxu0 %v570
    %675 = vmatprep.subr.mxu0 0.0
    %676 = vmatpush1.msra.mxu0 %v569
    %677 = vmatprep.subr.mxu0 0.0
    %678 = vmatpush1.msra.mxu0 %v568
    %679 = vmatprep.subr.mxu0 0.0
    %680 = vmatpush1.msra.mxu0 %v567
    %681 = vmatprep.subr.mxu0 0.0
    %682 = vmatpush2.msra.mxu0 0.0
    %683 = vmatprep.subr.mxu0 0.0
    %684 = vmatpush2.msra.mxu0 0.0
    %685 = vmatprep.subr.mxu0 0.0
    %686 = vmatpush2.msra.mxu0 0.0
    %687 = vmatprep.subr.mxu0 0.0
    %688 = vmatpush2.msra.mxu0 0.0
    %689 = vmatprep.subr.mxu0 0.0
    %690 = vmatpush2.msra.mxu0 0.0
    %691 = vmatprep.subr.mxu0 0.0
    %692 = vmatpush2.msra.mxu0 0.0
    %693 = vmatprep.subr.mxu0 0.0
    %694 = vmatpush2.msra.mxu0 0.0
    %695 = vmatprep.subr.mxu0 0.0
    %696 = vmatpush2.msra.mxu0 0.0
    %697 = vmatprep.subr.mxu0 0.0
    %698 = vmatpush2.msra.mxu0 0.0
    %699 = vmatprep.subr.mxu0 0.0
    %700 = vmatpush2.msra.mxu0 0.0
    %701 = vmatprep.subr.mxu0 0.0
    %702 = vmatpush2.msra.mxu0 0.0
    %703 = vmatprep.subr.mxu0 0.0
    %704 = vmatpush2.msra.mxu0 0.0
    %705 = vmatprep.subr.mxu0 0.0
    %706 = vmatpush2.msra.mxu0 0.0
    %707 = vmatprep.subr.mxu0 0.0
    %708 = vmatpush2.msra.mxu0 0.0
    %709 = vmatprep.subr.mxu0 0.0
    %710 = vmatpush2.msra.mxu0 0.0
    %711 = vmatprep.subr.mxu0 0.0
    %712 = vmatpush2.msra.mxu0 0.0
    %713 = vmatprep.mubr.f32.mxu0 0.0
    %714 = vmatmul.mubr.f32.gmra.mxu0 %v155
    %v715 = vpop.f32.mrf.mxu0
    %v716 = vadd.f32 %v646, %v715
    %v717 = vpop.f32.mrf.mxu0
    %718 = vdwg.mxu0
    %v719 = vld [vmem:[%s12] sm:$0xf]
    %vm720 = vcmask 31744
    %v722 = vsel %vm720, %v566, 0
    %vm724 = vcmask 1043456
    %v726 = vsel %vm724, %v719, 0
    %728 = vmatprep.subr.mxu0 0.0
    %729 = vmatpush1.msra.mxu0 0.0
    %730 = vmatprep.subr.mxu0 0.0
    %731 = vmatpush1.msra.mxu0 0.0
    %732 = vmatprep.subr.mxu0 0.0
    %733 = vmatpush1.msra.mxu0 0.0
    %734 = vmatprep.subr.mxu0 0.0
    %735 = vmatpush1.msra.mxu0 0.0
    %736 = vmatprep.subr.mxu0 0.0
    %737 = vmatpush1.msra.mxu0 0.0
    %738 = vmatprep.subr.mxu0 0.0
    %739 = vmatpush1.msra.mxu0 0.0
    %740 = vmatprep.subr.mxu0 0.0
    %741 = vmatpush1.msra.mxu0 0.0
    %742 = vmatprep.subr.mxu0 0.0
    %743 = vmatpush1.msra.mxu0 0.0
    %744 = vmatprep.subr.mxu0 0.0
    %745 = vmatpush1.msra.mxu0 0.0
    %746 = vmatprep.subr.mxu0 0.0
    %747 = vmatpush1.msra.mxu0 0.0
    %748 = vmatprep.subr.mxu0 0.0
    %749 = vmatpush1.msra.mxu0 0.0
    %750 = vmatprep.subr.mxu0 0.0
    %751 = vmatpush1.msra.mxu0 0.0
    %752 = vmatprep.subr.mxu0 0.0
    %753 = vmatpush1.msra.mxu0 0.0
    %754 = vmatprep.subr.mxu0 0.0
    %755 = vmatpush1.msra.mxu0 0.0
    %756 = vmatprep.subr.mxu0 0.0
    %757 = vmatpush1.msra.mxu0 0.0
    %758 = vmatprep.subr.mxu0 0.0
    %759 = vmatpush1.msra.mxu0 %v726
    %760 = vmatprep.subr.mxu0 0.0
    %761 = vmatpush2.msra.mxu0 0.0
    %762 = vmatprep.subr.mxu0 0.0
    %763 = vmatpush2.msra.mxu0 0.0
    %764 = vmatprep.subr.mxu0 0.0
    %765 = vmatpush2.msra.mxu0 0.0
    %766 = vmatprep.subr.mxu0 0.0
    %767 = vmatpush2.msra.mxu0 0.0
    %768 = vmatprep.subr.mxu0 0.0
    %769 = vmatpush2.msra.mxu0 0.0
    %770 = vmatprep.subr.mxu0 0.0
    %771 = vmatpush2.msra.mxu0 0.0
    %772 = vmatprep.subr.mxu0 0.0
    %773 = vmatpush2.msra.mxu0 0.0
    %774 = vmatprep.subr.mxu0 0.0
    %775 = vmatpush2.msra.mxu0 0.0
    %776 = vmatprep.subr.mxu0 0.0
    %777 = vmatpush2.msra.mxu0 0.0
    %778 = vmatprep.subr.mxu0 0.0
    %779 = vmatpush2.msra.mxu0 0.0
    %780 = vmatprep.subr.mxu0 0.0
    %781 = vmatpush2.msra.mxu0 0.0
    %782 = vmatprep.subr.mxu0 0.0
    %783 = vmatpush2.msra.mxu0 0.0
    %784 = vmatprep.subr.mxu0 0.0
    %785 = vmatpush2.msra.mxu0 0.0
    %786 = vmatprep.subr.mxu0 0.0
    %787 = vmatpush2.msra.mxu0 0.0
    %788 = vmatprep.subr.mxu0 0.0
    %789 = vmatpush2.msra.mxu0 0.0
    %790 = vmatprep.subr.mxu0 0.0
    %791 = vmatpush2.msra.mxu0 0.0
    %792 = vmatprep.mubr.f32.mxu0 0.0
    %793 = vmatmul.mubr.f32.gmra.mxu0 %v722
    %v794 = vpop.f32.mrf.mxu0
    %v795 = vadd.f32 0.0, %v794
    %v796 = vpop.f32.mrf.mxu0
    %797 = vdwg.mxu0
    %v798 = vadd.f32 %v716, %v795
    %v799 = vld [vmem:[%s13] sm:$0x1]
    %v801 = vlaneseq
    %v802 = vshrl.u32 %v801, 7
    %v803 = vsub.s32 0, %v802
    %v804 = vrot.slane %v799, %v803
    %v806 = vadd.f32 %v798, %v804
    %v807 = vld [vmem:[%s14] sm:$0x1]
    %v808 = vld [vmem:[%s15] sm:$0x1]
    %vm809 = vcmask 1041408
    %v810 = vsel %vm809, %v806, 0.0
    %811 = vadd.xlane.f32.xlu0 %v810
    %v812 = vpop.xlane.xlu0 %811
    %v813 = vrcp.pop 128.0
    %v814 = vmul.f32 %v812, %v813
    %v815 = vsub.f32 %v806, %v814
    %v816 = vmul.f32 %v815, %v815
    %v817 = vsel %vm809, %v816, 0.0
    %818 = vadd.xlane.f32.xlu0 %v817
    %v819 = vpop.xlane.xlu0 %818
    %v820 = vmul.f32 %v819, %v813
    %v821 = vadd.f32 %v820, 1e-05
    %v822 = vrsqrt.pop %v821
    %v823 = vmul.f32 %v815, %v822
    %v825 = vlaneseq
    %v826 = vshrl.u32 %v825, 7
    %v827 = vsub.s32 0, %v826
    %v828 = vrot.slane %v807, %v827
    %v830 = vmul.f32 %v823, %v828
    %v832 = vlaneseq
    %v833 = vshrl.u32 %v832, 7
    %v834 = vsub.s32 0, %v833
    %v835 = vrot.slane %v808, %v834
    %v837 = vadd.f32 %v830, %v835
    %v838 = vmul.f32 %v837, 0.5
    %v839 = vmul.f32 %v837, 0.70710677
    %v840 = verf.f32.pop %v839
    %v841 = vadd.f32 %v840, 1.0
    %v842 = vmul.f32 %v838, %v841
    %v843 = vld [vmem:[%s16] sm:$0xff]
    %v844 = vld [vmem:[%s16 + $0x8] sm:$0xff]
    %v845 = vld [vmem:[%s16 + $0x10] sm:$0xff]
    %v846 = vld [vmem:[%s16 + $0x18] sm:$0xff]
    %v847 = vld [vmem:[%s16 + $0x20] sm:$0xff]
    %v848 = vld [vmem:[%s16 + $0x28] sm:$0xff]
    %v849 = vld [vmem:[%s16 + $0x30] sm:$0xff]
    %v850 = vld [vmem:[%s16 + $0x38] sm:$0xff]
    %v851 = vld [vmem:[%s16 + $0x40] sm:$0xff]
    %v852 = vld [vmem:[%s16 + $0x48] sm:$0xff]
    %v853 = vld [vmem:[%s16 + $0x50] sm:$0xff]
    %v854 = vld [vmem:[%s16 + $0x58] sm:$0xff]
    %v855 = vld [vmem:[%s16 + $0x60] sm:$0xff]
    %v856 = vld [vmem:[%s16 + $0x68] sm:$0xff]
    %v857 = vld [vmem:[%s16 + $0x70] sm:$0xff]
    %v858 = vld [vmem:[%s16 + $0x78] sm:$0xff]
    %v859 = vld [vmem:[%s17] sm:$0x1]
    %v861 = vlaneseq
    %v862 = vshrl.u32 %v861, 7
    %v863 = vsub.s32 0, %v862
    %v864 = vrot.slane %v859, %v863
    %866 = vmatprep.subr.mxu0 0.0
    %867 = vmatpush1.msra.mxu0 %v858
    %868 = vmatprep.subr.mxu0 0.0
    %869 = vmatpush1.msra.mxu0 %v857
    %870 = vmatprep.subr.mxu0 0.0
    %871 = vmatpush1.msra.mxu0 %v856
    %872 = vmatprep.subr.mxu0 0.0
    %873 = vmatpush1.msra.mxu0 %v855
    %874 = vmatprep.subr.mxu0 0.0
    %875 = vmatpush1.msra.mxu0 %v854
    %876 = vmatprep.subr.mxu0 0.0
    %877 = vmatpush1.msra.mxu0 %v853
    %878 = vmatprep.subr.mxu0 0.0
    %879 = vmatpush1.msra.mxu0 %v852
    %880 = vmatprep.subr.mxu0 0.0
    %881 = vmatpush1.msra.mxu0 %v851
    %882 = vmatprep.subr.mxu0 0.0
    %883 = vmatpush1.msra.mxu0 %v850
    %884 = vmatprep.subr.mxu0 0.0
    %885 = vmatpush1.msra.mxu0 %v849
    %886 = vmatprep.subr.mxu0 0.0
    %887 = vmatpush1.msra.mxu0 %v848
    %888 = vmatprep.subr.mxu0 0.0
    %889 = vmatpush1.msra.mxu0 %v847
    %890 = vmatprep.subr.mxu0 0.0
    %891 = vmatpush1.msra.mxu0 %v846
    %892 = vmatprep.subr.mxu0 0.0
    %893 = vmatpush1.msra.mxu0 %v845
    %894 = vmatprep.subr.mxu0 0.0
    %895 = vmatpush1.msra.mxu0 %v844
    %896 = vmatprep.subr.mxu0 0.0
    %897 = vmatpush1.msra.mxu0 %v843
    %898 = vmatprep.subr.mxu0 0.0
    %899 = vmatpush2.msra.mxu0 0.0
    %900 = vmatprep.subr.mxu0 0.0
    %901 = vmatpush2.msra.mxu0 0.0
    %902 = vmatprep.subr.mxu0 0.0
    %903 = vmatpush2.msra.mxu0 0.0
    %904 = vmatprep.subr.mxu0 0.0
    %905 = vmatpush2.msra.mxu0 0.0
    %906 = vmatprep.subr.mxu0 0.0
    %907 = vmatpush2.msra.mxu0 0.0
    %908 = vmatprep.subr.mxu0 0.0
    %909 = vmatpush2.msra.mxu0 0.0
    %910 = vmatprep.subr.mxu0 0.0
    %911 = vmatpush2.msra.mxu0 0.0
    %912 = vmatprep.subr.mxu0 0.0
    %913 = vmatpush2.msra.mxu0 0.0
    %914 = vmatprep.subr.mxu0 0.0
    %915 = vmatpush2.msra.mxu0 0.0
    %916 = vmatprep.subr.mxu0 0.0
    %917 = vmatpush2.msra.mxu0 0.0
    %918 = vmatprep.subr.mxu0 0.0
    %919 = vmatpush2.msra.mxu0 0.0
    %920 = vmatprep.subr.mxu0 0.0
    %921 = vmatpush2.msra.mxu0 0.0
    %922 = vmatprep.subr.mxu0 0.0
    %923 = vmatpush2.msra.mxu0 0.0
    %924 = vmatprep.subr.mxu0 0.0
    %925 = vmatpush2.msra.mxu0 0.0
    %926 = vmatprep.subr.mxu0 0.0
    %927 = vmatpush2.msra.mxu0 0.0
    %928 = vmatprep.subr.mxu0 0.0
    %929 = vmatpush2.msra.mxu0 0.0
    %930 = vmatprep.mubr.f32.mxu0 0.0
    %931 = vmatmul.mubr.f32.gmra.mxu0 %v842
    %v932 = vpop.f32.mrf.mxu0
    %v933 = vadd.f32 %v864, %v932
    %v934 = vpop.f32.mrf.mxu0
    %935 = vdwg.mxu0
    %v936 = vld [vmem:[%s18] sm:$0x1]
    %v937 = vld [vmem:[%s19] sm:$0x1]
    %v938 = vsel %vm809, %v933, 0.0
    %939 = vadd.xlane.f32.xlu0 %v938
    %v940 = vpop.xlane.xlu0 %939
    %v941 = vmul.f32 %v940, %v813
    %v942 = vsub.f32 %v933, %v941
    %v943 = vmul.f32 %v942, %v942
    %v944 = vsel %vm809, %v943, 0.0
    %945 = vadd.xlane.f32.xlu0 %v944
    %v946 = vpop.xlane.xlu0 %945
    %v947 = vmul.f32 %v946, %v813
    %v948 = vadd.f32 %v947, 1e-05
    %v949 = vrsqrt.pop %v948
    %v950 = vmul.f32 %v942, %v949
    %v952 = vlaneseq
    %v953 = vshrl.u32 %v952, 7
    %v954 = vsub.s32 0, %v953
    %v955 = vrot.slane %v936, %v954
    %v957 = vmul.f32 %v950, %v955
    %v959 = vlaneseq
    %v960 = vshrl.u32 %v959, 7
    %v961 = vsub.s32 0, %v960
    %v962 = vrot.slane %v937, %v961
    %v964 = vadd.f32 %v957, %v962
    %v965 = vmul.f32 %v964, 0.5
    %v966 = vmul.f32 %v964, 0.70710677
    %v967 = verf.f32.pop %v966
    %v968 = vadd.f32 %v967, 1.0
    %v969 = vmul.f32 %v965, %v968
    %v970 = vld [vmem:[%s20] sm:$0xff]
    %v971 = vld [vmem:[%s20 + $0x8] sm:$0xff]
    %v972 = vld [vmem:[%s20 + $0x10] sm:$0xff]
    %v973 = vld [vmem:[%s20 + $0x18] sm:$0xff]
    %v974 = vld [vmem:[%s20 + $0x20] sm:$0xff]
    %v975 = vld [vmem:[%s20 + $0x28] sm:$0xff]
    %v976 = vld [vmem:[%s20 + $0x30] sm:$0xff]
    %v977 = vld [vmem:[%s20 + $0x38] sm:$0xff]
    %v978 = vld [vmem:[%s20 + $0x40] sm:$0xff]
    %v979 = vld [vmem:[%s20 + $0x48] sm:$0xff]
    %v980 = vld [vmem:[%s20 + $0x50] sm:$0xff]
    %v981 = vld [vmem:[%s20 + $0x58] sm:$0xff]
    %v982 = vld [vmem:[%s20 + $0x60] sm:$0xff]
    %v983 = vld [vmem:[%s20 + $0x68] sm:$0xff]
    %v984 = vld [vmem:[%s20 + $0x70] sm:$0xff]
    %v985 = vld [vmem:[%s20 + $0x78] sm:$0xff]
    %v986 = vld [vmem:[#allocation7] sm:$0x1]
    %v988 = vlaneseq
    %v989 = vshrl.u32 %v988, 7
    %v990 = vsub.s32 0, %v989
    %v991 = vrot.slane %v986, %v990
    %993 = vmatprep.subr.mxu0 0.0
    %994 = vmatpush1.msra.mxu0 %v985
    %995 = vmatprep.subr.mxu0 0.0
    %996 = vmatpush1.msra.mxu0 %v984
    %997 = vmatprep.subr.mxu0 0.0
    %998 = vmatpush1.msra.mxu0 %v983
    %999 = vmatprep.subr.mxu0 0.0
    %1000 = vmatpush1.msra.mxu0 %v982
    %1001 = vmatprep.subr.mxu0 0.0
    %1002 = vmatpush1.msra.mxu0 %v981
    %1003 = vmatprep.subr.mxu0 0.0
    %1004 = vmatpush1.msra.mxu0 %v980
    %1005 = vmatprep.subr.mxu0 0.0
    %1006 = vmatpush1.msra.mxu0 %v979
    %1007 = vmatprep.subr.mxu0 0.0
    %1008 = vmatpush1.msra.mxu0 %v978
    %1009 = vmatprep.subr.mxu0 0.0
    %1010 = vmatpush1.msra.mxu0 %v977
    %1011 = vmatprep.subr.mxu0 0.0
    %1012 = vmatpush1.msra.mxu0 %v976
    %1013 = vmatprep.subr.mxu0 0.0
    %1014 = vmatpush1.msra.mxu0 %v975
    %1015 = vmatprep.subr.mxu0 0.0
    %1016 = vmatpush1.msra.mxu0 %v974
    %1017 = vmatprep.subr.mxu0 0.0
    %1018 = vmatpush1.msra.mxu0 %v973
    %1019 = vmatprep.subr.mxu0 0.0
    %1020 = vmatpush1.msra.mxu0 %v972
    %1021 = vmatprep.subr.mxu0 0.0
    %1022 = vmatpush1.msra.mxu0 %v971
    %1023 = vmatprep.subr.mxu0 0.0
    %1024 = vmatpush1.msra.mxu0 %v970
    %1025 = vmatprep.subr.mxu0 0.0
    %1026 = vmatpush2.msra.mxu0 0.0
    %1027 = vmatprep.subr.mxu0 0.0
    %1028 = vmatpush2.msra.mxu0 0.0
    %1029 = vmatprep.subr.mxu0 0.0
    %1030 = vmatpush2.msra.mxu0 0.0
    %1031 = vmatprep.subr.mxu0 0.0
    %1032 = vmatpush2.msra.mxu0 0.0
    %1033 = vmatprep.subr.mxu0 0.0
    %1034 = vmatpush2.msra.mxu0 0.0
    %1035 = vmatprep.subr.mxu0 0.0
    %1036 = vmatpush2.msra.mxu0 0.0
    %1037 = vmatprep.subr.mxu0 0.0
    %1038 = vmatpush2.msra.mxu0 0.0
    %1039 = vmatprep.subr.mxu0 0.0
    %1040 = vmatpush2.msra.mxu0 0.0
    %1041 = vmatprep.subr.mxu0 0.0
    %1042 = vmatpush2.msra.mxu0 0.0
    %1043 = vmatprep.subr.mxu0 0.0
    %1044 = vmatpush2.msra.mxu0 0.0
    %1045 = vmatprep.subr.mxu0 0.0
    %1046 = vmatpush2.msra.mxu0 0.0
    %1047 = vmatprep.subr.mxu0 0.0
    %1048 = vmatpush2.msra.mxu0 0.0
    %1049 = vmatprep.subr.mxu0 0.0
    %1050 = vmatpush2.msra.mxu0 0.0
    %1051 = vmatprep.subr.mxu0 0.0
    %1052 = vmatpush2.msra.mxu0 0.0
    %1053 = vmatprep.subr.mxu0 0.0
    %1054 = vmatpush2.msra.mxu0 0.0
    %1055 = vmatprep.subr.mxu0 0.0
    %1056 = vmatpush2.msra.mxu0 0.0
    %1057 = vmatprep.mubr.f32.mxu0 0.0
    %1058 = vmatmul.mubr.f32.gmra.mxu0 %v969
    %v1059 = vpop.f32.mrf.mxu0
    %v1060 = vadd.f32 %v991, %v1059
    %v1061 = vpop.f32.mrf.mxu0
    %1062 = vdwg.mxu0
    %v1063 = vld [vmem:[%s22] sm:$0xf]
    %v1065 = vsel %vm724, %v1063, 0
    %1067 = vmatprep.subr.mxu0 0.0
    %1068 = vmatpush1.msra.mxu0 0.0
    %1069 = vmatprep.subr.mxu0 0.0
    %1070 = vmatpush1.msra.mxu0 0.0
    %1071 = vmatprep.subr.mxu0 0.0
    %1072 = vmatpush1.msra.mxu0 0.0
    %1073 = vmatprep.subr.mxu0 0.0
    %1074 = vmatpush1.msra.mxu0 0.0
    %1075 = vmatprep.subr.mxu0 0.0
    %1076 = vmatpush1.msra.mxu0 0.0
    %1077 = vmatprep.subr.mxu0 0.0
    %1078 = vmatpush1.msra.mxu0 0.0
    %1079 = vmatprep.subr.mxu0 0.0
    %1080 = vmatpush1.msra.mxu0 0.0
    %1081 = vmatprep.subr.mxu0 0.0
    %1082 = vmatpush1.msra.mxu0 0.0
    %1083 = vmatprep.subr.mxu0 0.0
    %1084 = vmatpush1.msra.mxu0 0.0
    %1085 = vmatprep.subr.mxu0 0.0
    %1086 = vmatpush1.msra.mxu0 0.0
    %1087 = vmatprep.subr.mxu0 0.0
    %1088 = vmatpush1.msra.mxu0 0.0
    %1089 = vmatprep.subr.mxu0 0.0
    %1090 = vmatpush1.msra.mxu0 0.0
    %1091 = vmatprep.subr.mxu0 0.0
    %1092 = vmatpush1.msra.mxu0 0.0
    %1093 = vmatprep.subr.mxu0 0.0
    %1094 = vmatpush1.msra.mxu0 0.0
    %1095 = vmatprep.subr.mxu0 0.0
    %1096 = vmatpush1.msra.mxu0 0.0
    %1097 = vmatprep.subr.mxu0 0.0
    %1098 = vmatpush1.msra.mxu0 %v1065
    %1099 = vmatprep.subr.mxu0 0.0
    %1100 = vmatpush2.msra.mxu0 0.0
    %1101 = vmatprep.subr.mxu0 0.0
    %1102 = vmatpush2.msra.mxu0 0.0
    %1103 = vmatprep.subr.mxu0 0.0
    %1104 = vmatpush2.msra.mxu0 0.0
    %1105 = vmatprep.subr.mxu0 0.0
    %1106 = vmatpush2.msra.mxu0 0.0
    %1107 = vmatprep.subr.mxu0 0.0
    %1108 = vmatpush2.msra.mxu0 0.0
    %1109 = vmatprep.subr.mxu0 0.0
    %1110 = vmatpush2.msra.mxu0 0.0
    %1111 = vmatprep.subr.mxu0 0.0
    %1112 = vmatpush2.msra.mxu0 0.0
    %1113 = vmatprep.subr.mxu0 0.0
    %1114 = vmatpush2.msra.mxu0 0.0
    %1115 = vmatprep.subr.mxu0 0.0
    %1116 = vmatpush2.msra.mxu0 0.0
    %1117 = vmatprep.subr.mxu0 0.0
    %1118 = vmatpush2.msra.mxu0 0.0
    %1119 = vmatprep.subr.mxu0 0.0
    %1120 = vmatpush2.msra.mxu0 0.0
    %1121 = vmatprep.subr.mxu0 0.0
    %1122 = vmatpush2.msra.mxu0 0.0
    %1123 = vmatprep.subr.mxu0 0.0
    %1124 = vmatpush2.msra.mxu0 0.0
    %1125 = vmatprep.subr.mxu0 0.0
    %1126 = vmatpush2.msra.mxu0 0.0
    %1127 = vmatprep.subr.mxu0 0.0
    %1128 = vmatpush2.msra.mxu0 0.0
    %1129 = vmatprep.subr.mxu0 0.0
    %1130 = vmatpush2.msra.mxu0 0.0
    %1131 = vmatprep.mubr.f32.mxu0 0.0
    %1132 = vmatmul.mubr.f32.gmra.mxu0 %v722
    %v1133 = vpop.f32.mrf.mxu0
    %v1134 = vadd.f32 0.0, %v1133
    %v1135 = vpop.f32.mrf.mxu0
    %1136 = vdwg.mxu0
    %v1137 = vadd.f32 %v1060, %v1134
    %s1138 = sld [smem:[#allocation2]]
    %s1139 = smax.f32 %s1138, 0.1
    %s1140 = smin.f32 %s1139, 5.0
    %v1141 = vstv %s1140
    %v1142 = vrcp.pop %v1141
    %v1143 = vmul.f32 %v1137, %v1142
    %vm1144 = vcmask 58368
    %v1145 = vsel %vm1144, %v1143, -inf
    %1146 = vmax.xlane.f32.xlu0 %v1145
    %v1147 = vpop.xlane.xlu0 %1146
    %v1148 = vsub.f32 %v1143, %v1147
    %v1149 = vmul.f32 %v1148, 1.442695
    %v1150 = vpow.pop %v1149
    %v1151 = vsel %vm1144, %v1150, 0.0
    %1152 = vadd.xlane.f32.xlu0 %v1151
    %v1153 = vpop.xlane.xlu0 %1152
    %v1154 = vrcp.pop %v1153
    %v1155 = vmul.f32 %v1150, %v1154
    %1156 = vst.msk [vmem:[%s24] sm:$0x3] %vm1144, %v1155
    // Predicated region
    $region110: #{branch_0_fun.1} parent=1 // pred_check
      _
    $region111: #{branch_0_fun.1} parent=1 // pred_check_branch
      %1158 = sbr.rel (0) target = $region113
    $region112: #{branch_0_fun.1} parent=1 // pred_region
      _
    $region113: #{branch_0_fun.1} parent=1 // pred_fallthru
      _
    // Predicated region
    $region114: #{branch_0_fun.1} parent=1 // pred_check
      _
    $region115: #{branch_0_fun.1} parent=1 // pred_check_branch
      %1160 = sbr.rel (0) target = $region117
    $region116: #{branch_0_fun.1} parent=1 // pred_region
      _
    $region117: #{branch_0_fun.1} parent=1 // pred_fallthru
      _
    %1161 = vsyncpa [#allocation4], 1
    %1162 = vsyncpa [#allocation6], 1

// kernel: branch_1_fun.1
$region0: #{branch_1_fun.1}
  #allocation0 [shape = 'u32[]', space=smem, size = 0x4, offset = 0x4, fixed_abs, tag = 'smem constant byte address 0x4 - core index']
  #allocation1 [shape = 'u32[144,128]{1,0:T(1,128)}', space=vmem, size = 0x12000, scoped, tag = 'internal scratch']
  #allocation2 [shape = 'f32[1,1]{1,0:T(1,128)S(1)}', space=vmem, size = 0x200, scoped, tag = 'scoped memory for branch_1_fun.1']
  %s0 = inlined_call_operand.smem [shape: u32[30], index: -1, kind: input, shape index: {}]
  %s1 = sld [smem:[%s0]]
  %s2 = scalar_lea.smem %s0, 1
  %s3 = sld [smem:[%s2]]
  %s4 = scalar_lea.smem %s0, 2
  %s5 = sld [smem:[%s4]]
  %s6 = scalar_lea.smem %s0, 3
  %s7 = sld [smem:[%s6]]
  %s8 = scalar_lea.smem %s0, 4
  %s9 = sld [smem:[%s8]]
  %s10 = scalar_lea.smem %s0, 5
  %s11 = sld [smem:[%s10]]
  %s12 = scalar_lea.smem %s0, 6
  %s13 = sld [smem:[%s12]]
  %s14 = scalar_lea.smem %s0, 7
  %s15 = sld [smem:[%s14]]
  %s16 = scalar_lea.smem %s0, 8
  %s17 = sld [smem:[%s16]]
  %s18 = scalar_lea.smem %s0, 9
  %s19 = sld [smem:[%s18]]
  %s20 = scalar_lea.smem %s0, 10
  %s21 = sld [smem:[%s20]]
  %s22 = scalar_lea.smem %s0, 11
  %s23 = sld [smem:[%s22]]
  %s24 = scalar_lea.smem %s0, 12
  %s25 = sld [smem:[%s24]]
  %s26 = scalar_lea.smem %s0, 13
  %s27 = sld [smem:[%s26]]
  %s28 = scalar_lea.smem %s0, 14
  %s29 = sld [smem:[%s28]]
  %s30 = scalar_lea.smem %s0, 15
  %s31 = sld [smem:[%s30]]
  %s32 = scalar_lea.smem %s0, 16
  %s33 = sld [smem:[%s32]]
  %s34 = scalar_lea.smem %s0, 17
  %s35 = sld [smem:[%s34]]
  %s36 = scalar_lea.smem %s0, 18
  %s37 = sld [smem:[%s36]]
  %s38 = scalar_lea.smem %s0, 19
  %s39 = sld [smem:[%s38]]
  %s40 = scalar_lea.smem %s0, 20
  %s41 = sld [smem:[%s40]]
  %s42 = scalar_lea.smem %s0, 21
  %s43 = sld [smem:[%s42]]
  %s44 = scalar_lea.smem %s0, 22
  %s45 = sld [smem:[%s44]]
  %s46 = scalar_lea.smem %s0, 23
  %s47 = sld [smem:[%s46]]
  %s48 = scalar_lea.smem %s0, 24
  %s49 = sld [smem:[%s48]]
  %s50 = scalar_lea.smem %s0, 25
  %s51 = sld [smem:[%s50]]
  %s52 = scalar_lea.smem %s0, 26
  %s53 = sld [smem:[%s52]]
  %s54 = scalar_lea.smem %s0, 27
  %s55 = sld [smem:[%s54]]
  %s56 = scalar_lea.smem %s0, 28
  %s57 = sld [smem:[%s56]]
  %s58 = scalar_lea.smem %s0, 29
  %s59 = sld [smem:[%s58]]
  %60 = xla_tuple %s57, %s59
  %s61 = sld [smem:[#allocation0]]
  $region178: #{branch_1_fun.1} parent=0
    _
  %s63 = ssub.s32 1, %s61
  %s64 = scalar_select 0, %s63, %s61
  %v65 = vstv %s27
  %66 = vst [vmem:[#allocation2] sm:$0x1] %v65
  $region1: #{branch_1_fun.1} parent=0
    #allocation3 [shape = 'u8[512]{0}', space=vmem, size = 0x400, scoped, tag = 'input window, operand 3, single buffered']
    #allocation4 [shape = 's32[1]{0}', space=sflag, size = 0x4, scoped, tag = 'scoped memory for branch_1_fun.1']
    #allocation5 [shape = 'u8[512]{0}', space=vmem, size = 0x400, scoped, tag = 'input window, operand 4, single buffered']
    #allocation6 [shape = 's32[1]{0}', space=sflag, size = 0x4, scoped, tag = 'scoped memory for branch_1_fun.1']
    #allocation7 [shape = 'u8[512]{0}', space=vmem, size = 0x400, scoped, tag = 'input window, operand 5, single buffered']
    #allocation8 [shape = 'u8[512]{0}', space=vmem, size = 0x400, scoped, tag = 'input window, operand 9, single buffered']
    #allocation9 [shape = 's32[1]{0}', space=sflag, size = 0x4, scoped, tag = 'scoped memory for branch_1_fun.1']
    #allocation10 [shape = 'u8[512]{0}', space=vmem, size = 0x400, scoped, tag = 'input window, operand 11, single buffered']
    #allocation11 [shape = 'u8[1024]{0}', space=vmem, size = 0x400, scoped, tag = 'input window, operand 17, single buffered']
    #allocation12 [shape = 's32[1]{0}', space=sflag, size = 0x4, scoped, tag = 'scoped memory for branch_1_fun.1']
    #allocation13 [shape = 'u8[1024]{0}', space=vmem, size = 0x400, scoped, tag = 'input window, operand 18, single buffered']
    #allocation14 [shape = 'u8[1024]{0}', space=vmem, size = 0x400, scoped, tag = 'input window, operand 19, single buffered']
    #allocation15 [shape = 's32[1]{0}', space=sflag, size = 0x4, scoped, tag = 'scoped memory for branch_1_fun.1']
    #allocation16 [shape = 'u8[512]{0}', space=vmem, size = 0x400, scoped, tag = 'input window, operand 21, single buffered']
    #allocation17 [shape = 'u8[512]{0}', space=vmem, size = 0x400, scoped, tag = 'input window, operand 22, single buffered']
    #allocation18 [shape = 's32[1]{0}', space=sflag, size = 0x4, scoped, tag = 'scoped memory for branch_1_fun.1']
    #allocation19 [shape = 'u8[512]{0}', space=vmem, size = 0x400, scoped, tag = 'input window, operand 23, single buffered']
    #allocation20 [shape = 'u8[512]{0}', space=vmem, size = 0x400, scoped, tag = 'input window, operand 25, single buffered']
    #allocation21 [shape = 's32[1]{0}', space=sflag, size = 0x4, scoped, tag = 'scoped memory for branch_1_fun.1']
    %67 = vsyncpa [#allocation4], 0
    %68 = vsyncpa [#allocation6], 0
    %69 = vsyncpa [#allocation9], 0
    %70 = vsyncpa [#allocation12], 0
    %71 = vsyncpa [#allocation15], 0
    %72 = vsyncpa [#allocation18], 0
    %73 = vsyncpa [#allocation21], 0
    // Predicated region
    $region2: #{branch_1_fun.1} parent=1 // pred_check
      _
    $region3: #{branch_1_fun.1} parent=1 // pred_check_branch
      %75 = sbr.rel (0) target = $region5
    $region4: #{branch_1_fun.1} parent=1 // pred_region
      _
    $region5: #{branch_1_fun.1} parent=1 // pred_fallthru
      _
    // Predicated region
    $region6: #{branch_1_fun.1} parent=1 // pred_check
      _
    $region7: #{branch_1_fun.1} parent=1 // pred_check_branch
      %77 = sbr.rel (0) target = $region9
    $region8: #{branch_1_fun.1} parent=1 // pred_region
      _
    $region9: #{branch_1_fun.1} parent=1 // pred_fallthru
      _
    // Predicated region
    $region10: #{branch_1_fun.1} parent=1 // pred_check
      _
    $region11: #{branch_1_fun.1} parent=1 // pred_check_branch
      %79 = sbr.rel (0) target = $region13
    $region12: #{branch_1_fun.1} parent=1 // pred_region
      _
    $region13: #{branch_1_fun.1} parent=1 // pred_fallthru
      _
    // Predicated region
    $region14: #{branch_1_fun.1} parent=1 // pred_check
      _
    $region15: #{branch_1_fun.1} parent=1 // pred_check_branch
      %81 = sbr.rel (0) target = $region17
    $region16: #{branch_1_fun.1} parent=1 // pred_region
      %s83 = ssub.s32 16, 16
      %84 = vsyncadd [#allocation4], %s83
      %s86 = sshll.u32 [#allocation3], 4
      %s87 = int_to_ptr.vmem [resolvable:$true] %s86
      %89 = dma.hbm_to_vmem [thread:$0]  %s7, 16, %s87, [#allocation4]
    $region17: #{branch_1_fun.1} parent=1 // pred_fallthru
      _
    // Predicated region
    $region18: #{branch_1_fun.1} parent=1 // pred_check
      _
    $region19: #{branch_1_fun.1} parent=1 // pred_check_branch
      %91 = sbr.rel (0) target = $region21
    $region20: #{branch_1_fun.1} parent=1 // pred_region
      %s93 = ssub.s32 16, 16
      %94 = vsyncadd [#allocation6], %s93
      %s96 = sshll.u32 [#allocation5], 4
      %s97 = int_to_ptr.vmem [resolvable:$true] %s96
      %99 = dma.hbm_to_vmem [thread:$0]  %s9, 16, %s97, [#allocation6]
    $region21: #{branch_1_fun.1} parent=1 // pred_fallthru
      _
    // Predicated region
    $region22: #{branch_1_fun.1} parent=1 // pred_check
      _
    $region23: #{branch_1_fun.1} parent=1 // pred_check_branch
      %101 = sbr.rel (0) target = $region25
    $region24: #{branch_1_fun.1} parent=1 // pred_region
      %s103 = ssub.s32 16, 16
      %104 = vsyncadd [#allocation6], %s103
      %s106 = sshll.u32 [#allocation7], 4
      %s107 = int_to_ptr.vmem [resolvable:$true] %s106
      %109 = dma.hbm_to_vmem [thread:$0]  %s11, 16, %s107, [#allocation6]
    $region25: #{branch_1_fun.1} parent=1 // pred_fallthru
      _
    // Predicated region
    $region26: #{branch_1_fun.1} parent=1 // pred_check
      _
    $region27: #{branch_1_fun.1} parent=1 // pred_check_branch
      %111 = sbr.rel (0) target = $region29
    $region28: #{branch_1_fun.1} parent=1 // pred_region
      _
    $region29: #{branch_1_fun.1} parent=1 // pred_fallthru
      _
    // Predicated region
    $region30: #{branch_1_fun.1} parent=1 // pred_check
      _
    $region31: #{branch_1_fun.1} parent=1 // pred_check_branch
      %113 = sbr.rel (0) target = $region33
    $region32: #{branch_1_fun.1} parent=1 // pred_region
      _
    $region33: #{branch_1_fun.1} parent=1 // pred_fallthru
      _
    // Predicated region
    $region34: #{branch_1_fun.1} parent=1 // pred_check
      _
    $region35: #{branch_1_fun.1} parent=1 // pred_check_branch
      %115 = sbr.rel (0) target = $region37
    $region36: #{branch_1_fun.1} parent=1 // pred_region
      _
    $region37: #{branch_1_fun.1} parent=1 // pred_fallthru
      _
    // Predicated region
    $region38: #{branch_1_fun.1} parent=1 // pred_check
      _
    $region39: #{branch_1_fun.1} parent=1 // pred_check_branch
      %117 = sbr.rel (0) target = $region41
    $region40: #{branch_1_fun.1} parent=1 // pred_region
      %s119 = ssub.s32 16, 16
      %120 = vsyncadd [#allocation9], %s119
      %s122 = sshll.u32 [#allocation8], 4
      %s123 = int_to_ptr.vmem [resolvable:$true] %s122
      %125 = dma.hbm_to_vmem [thread:$0]  %s19, 16, %s123, [#allocation9]
    $region41: #{branch_1_fun.1} parent=1 // pred_fallthru
      _
    // Predicated region
    $region42: #{branch_1_fun.1} parent=1 // pred_check
      _
    $region43: #{branch_1_fun.1} parent=1 // pred_check_branch
      %127 = sbr.rel (0) target = $region45
    $region44: #{branch_1_fun.1} parent=1 // pred_region
      _
    $region45: #{branch_1_fun.1} parent=1 // pred_fallthru
      _
    // Predicated region
    $region46: #{branch_1_fun.1} parent=1 // pred_check
      _
    $region47: #{branch_1_fun.1} parent=1 // pred_check_branch
      %129 = sbr.rel (0) target = $region49
    $region48: #{branch_1_fun.1} parent=1 // pred_region
      %s131 = ssub.s32 16, 16
      %132 = vsyncadd [#allocation9], %s131
      %s134 = sshll.u32 [#allocation10], 4
      %s135 = int_to_ptr.vmem [resolvable:$true] %s134
      %137 = dma.hbm_to_vmem [thread:$0]  %s23, 16, %s135, [#allocation9]
    $region49: #{branch_1_fun.1} parent=1 // pred_fallthru
      _
    // Predicated region
    $region50: #{branch_1_fun.1} parent=1 // pred_check
      _
    $region51: #{branch_1_fun.1} parent=1 // pred_check_branch
      %139 = sbr.rel (0) target = $region53
    $region52: #{branch_1_fun.1} parent=1 // pred_region
      _
    $region53: #{branch_1_fun.1} parent=1 // pred_fallthru
      _
    // Predicated region
    $region54: #{branch_1_fun.1} parent=1 // pred_check
      _
    $region55: #{branch_1_fun.1} parent=1 // pred_check_branch
      %141 = sbr.rel (0) target = $region57
    $region56: #{branch_1_fun.1} parent=1 // pred_region
      _
    $region57: #{branch_1_fun.1} parent=1 // pred_fallthru
      _
    // Predicated region
    $region58: #{branch_1_fun.1} parent=1 // pred_check
      _
    $region59: #{branch_1_fun.1} parent=1 // pred_check_branch
      %143 = sbr.rel (0) target = $region61
    $region60: #{branch_1_fun.1} parent=1 // pred_region
      _
    $region61: #{branch_1_fun.1} parent=1 // pred_fallthru
      _
    // Predicated region
    $region62: #{branch_1_fun.1} parent=1 // pred_check
      _
    $region63: #{branch_1_fun.1} parent=1 // pred_check_branch
      %145 = sbr.rel (0) target = $region65
    $region64: #{branch_1_fun.1} parent=1 // pred_region
      _
    $region65: #{branch_1_fun.1} parent=1 // pred_fallthru
      _
    // Predicated region
    $region66: #{branch_1_fun.1} parent=1 // pred_check
      _
    $region67: #{branch_1_fun.1} parent=1 // pred_check_branch
      %147 = sbr.rel (0) target = $region69
    $region68: #{branch_1_fun.1} parent=1 // pred_region
      _
    $region69: #{branch_1_fun.1} parent=1 // pred_fallthru
      _
    // Predicated region
    $region70: #{branch_1_fun.1} parent=1 // pred_check
      _
    $region71: #{branch_1_fun.1} parent=1 // pred_check_branch
      %149 = sbr.rel (0) target = $region73
    $region72: #{branch_1_fun.1} parent=1 // pred_region
      %s151 = ssub.s32 32, 32
      %152 = vsyncadd [#allocation12], %s151
      %s154 = sshll.u32 [#allocation11], 4
      %s155 = int_to_ptr.vmem [resolvable:$true] %s154
      %157 = dma.hbm_to_vmem [thread:$0]  %s35, 32, %s155, [#allocation12]
    $region73: #{branch_1_fun.1} parent=1 // pred_fallthru
      _
    // Predicated region
    $region74: #{branch_1_fun.1} parent=1 // pred_check
      _
    $region75: #{branch_1_fun.1} parent=1 // pred_check_branch
      %159 = sbr.rel (0) target = $region77
    $region76: #{branch_1_fun.1} parent=1 // pred_region
      %s161 = ssub.s32 32, 32
      %162 = vsyncadd [#allocation12], %s161
      %s164 = sshll.u32 [#allocation13], 4
      %s165 = int_to_ptr.vmem [resolvable:$true] %s164
      %167 = dma.hbm_to_vmem [thread:$0]  %s37, 32, %s165, [#allocation12]
    $region77: #{branch_1_fun.1} parent=1 // pred_fallthru
      _
    // Predicated region
    $region78: #{branch_1_fun.1} parent=1 // pred_check
      _
    $region79: #{branch_1_fun.1} parent=1 // pred_check_branch
      %169 = sbr.rel (0) target = $region81
    $region80: #{branch_1_fun.1} parent=1 // pred_region
      %s171 = ssub.s32 32, 32
      %172 = vsyncadd [#allocation15], %s171
      %s174 = sshll.u32 [#allocation14], 4
      %s175 = int_to_ptr.vmem [resolvable:$true] %s174
      %177 = dma.hbm_to_vmem [thread:$0]  %s39, 32, %s175, [#allocation15]
    $region81: #{branch_1_fun.1} parent=1 // pred_fallthru
      _
    // Predicated region
    $region82: #{branch_1_fun.1} parent=1 // pred_check
      _
    $region83: #{branch_1_fun.1} parent=1 // pred_check_branch
      %179 = sbr.rel (0) target = $region85
    $region84: #{branch_1_fun.1} parent=1 // pred_region
      _
    $region85: #{branch_1_fun.1} parent=1 // pred_fallthru
      _
    // Predicated region
    $region86: #{branch_1_fun.1} parent=1 // pred_check
      _
    $region87: #{branch_1_fun.1} parent=1 // pred_check_branch
      %181 = sbr.rel (0) target = $region89
    $region88: #{branch_1_fun.1} parent=1 // pred_region
      %s183 = ssub.s32 16, 16
      %184 = vsyncadd [#allocation15], %s183
      %s186 = sshll.u32 [#allocation16], 4
      %s187 = int_to_ptr.vmem [resolvable:$true] %s186
      %189 = dma.hbm_to_vmem [thread:$0]  %s43, 16, %s187, [#allocation15]
    $region89: #{branch_1_fun.1} parent=1 // pred_fallthru
      _
    // Predicated region
    $region90: #{branch_1_fun.1} parent=1 // pred_check
      _
    $region91: #{branch_1_fun.1} parent=1 // pred_check_branch
      %191 = sbr.rel (0) target = $region93
    $region92: #{branch_1_fun.1} parent=1 // pred_region
      %s193 = ssub.s32 16, 16
      %194 = vsyncadd [#allocation18], %s193
      %s196 = sshll.u32 [#allocation17], 4
      %s197 = int_to_ptr.vmem [resolvable:$true] %s196
      %199 = dma.hbm_to_vmem [thread:$0]  %s45, 16, %s197, [#allocation18]
    $region93: #{branch_1_fun.1} parent=1 // pred_fallthru
      _
    // Predicated region
    $region94: #{branch_1_fun.1} parent=1 // pred_check
      _
    $region95: #{branch_1_fun.1} parent=1 // pred_check_branch
      %201 = sbr.rel (0) target = $region97
    $region96: #{branch_1_fun.1} parent=1 // pred_region
      %s203 = ssub.s32 16, 16
      %204 = vsyncadd [#allocation18], %s203
      %s206 = sshll.u32 [#allocation19], 4
      %s207 = int_to_ptr.vmem [resolvable:$true] %s206
      %209 = dma.hbm_to_vmem [thread:$0]  %s47, 16, %s207, [#allocation18]
    $region97: #{branch_1_fun.1} parent=1 // pred_fallthru
      _
    // Predicated region
    $region98: #{branch_1_fun.1} parent=1 // pred_check
      _
    $region99: #{branch_1_fun.1} parent=1 // pred_check_branch
      %211 = sbr.rel (0) target = $region101
    $region100: #{branch_1_fun.1} parent=1 // pred_region
      _
    $region101: #{branch_1_fun.1} parent=1 // pred_fallthru
      _
    // Predicated region
    $region102: #{branch_1_fun.1} parent=1 // pred_check
      _
    $region103: #{branch_1_fun.1} parent=1 // pred_check_branch
      %213 = sbr.rel (0) target = $region105
    $region104: #{branch_1_fun.1} parent=1 // pred_region
      %s215 = ssub.s32 16, 16
      %216 = vsyncadd [#allocation21], %s215
      %s218 = sshll.u32 [#allocation20], 4
      %s219 = int_to_ptr.vmem [resolvable:$true] %s218
      %221 = dma.hbm_to_vmem [thread:$0]  %s51, 16, %s219, [#allocation21]
    $region105: #{branch_1_fun.1} parent=1 // pred_fallthru
      _
    // Predicated region
    $region106: #{branch_1_fun.1} parent=1 // pred_check
      _
    $region107: #{branch_1_fun.1} parent=1 // pred_check_branch
      %223 = sbr.rel (0) target = $region109
    $region108: #{branch_1_fun.1} parent=1 // pred_region
      _
    $region109: #{branch_1_fun.1} parent=1 // pred_fallthru
      _
    // Predicated region
    $region110: #{branch_1_fun.1} parent=1 // pred_check
      _
    $region111: #{branch_1_fun.1} parent=1 // pred_check_branch
      %225 = sbr.rel (0) target = $region113
    $region112: #{branch_1_fun.1} parent=1 // pred_region
      _
    $region113: #{branch_1_fun.1} parent=1 // pred_fallthru
      _
    // Predicated region
    $region114: #{branch_1_fun.1} parent=1 // pred_check
      _
    $region115: #{branch_1_fun.1} parent=1 // pred_check_branch
      %227 = sbr.rel (0) target = $region117
    $region116: #{branch_1_fun.1} parent=1 // pred_region
      %228 = dma.done [#allocation4], 16
    $region117: #{branch_1_fun.1} parent=1 // pred_fallthru
      _
    // Predicated region
    $region118: #{branch_1_fun.1} parent=1 // pred_check
      _
    $region119: #{branch_1_fun.1} parent=1 // pred_check_branch
      %230 = sbr.rel (0) target = $region121
    $region120: #{branch_1_fun.1} parent=1 // pred_region
      %231 = dma.done [#allocation6], 16
    $region121: #{branch_1_fun.1} parent=1 // pred_fallthru
      _
    // Predicated region
    $region122: #{branch_1_fun.1} parent=1 // pred_check
      _
    $region123: #{branch_1_fun.1} parent=1 // pred_check_branch
      %233 = sbr.rel (0) target = $region125
    $region124: #{branch_1_fun.1} parent=1 // pred_region
      %234 = dma.done [#allocation6], 16
    $region125: #{branch_1_fun.1} parent=1 // pred_fallthru
      _
    // Predicated region
    $region126: #{branch_1_fun.1} parent=1 // pred_check
      _
    $region127: #{branch_1_fun.1} parent=1 // pred_check_branch
      %236 = sbr.rel (0) target = $region129
    $region128: #{branch_1_fun.1} parent=1 // pred_region
      %237 = dma.done [#allocation9], 16
    $region129: #{branch_1_fun.1} parent=1 // pred_fallthru
      _
    // Predicated region
    $region130: #{branch_1_fun.1} parent=1 // pred_check
      _
    $region131: #{branch_1_fun.1} parent=1 // pred_check_branch
      %239 = sbr.rel (0) target = $region133
    $region132: #{branch_1_fun.1} parent=1 // pred_region
      %240 = dma.done [#allocation9], 16
    $region133: #{branch_1_fun.1} parent=1 // pred_fallthru
      _
    // Predicated region
    $region134: #{branch_1_fun.1} parent=1 // pred_check
      _
    $region135: #{branch_1_fun.1} parent=1 // pred_check_branch
      %242 = sbr.rel (0) target = $region137
    $region136: #{branch_1_fun.1} parent=1 // pred_region
      %243 = dma.done [#allocation12], 32
    $region137: #{branch_1_fun.1} parent=1 // pred_fallthru
      _
    // Predicated region
    $region138: #{branch_1_fun.1} parent=1 // pred_check
      _
    $region139: #{branch_1_fun.1} parent=1 // pred_check_branch
      %245 = sbr.rel (0) target = $region141
    $region140: #{branch_1_fun.1} parent=1 // pred_region
      %246 = dma.done [#allocation12], 32
    $region141: #{branch_1_fun.1} parent=1 // pred_fallthru
      _
    // Predicated region
    $region142: #{branch_1_fun.1} parent=1 // pred_check
      _
    $region143: #{branch_1_fun.1} parent=1 // pred_check_branch
      %248 = sbr.rel (0) target = $region145
    $region144: #{branch_1_fun.1} parent=1 // pred_region
      %249 = dma.done [#allocation15], 32
    $region145: #{branch_1_fun.1} parent=1 // pred_fallthru
      _
    // Predicated region
    $region146: #{branch_1_fun.1} parent=1 // pred_check
      _
    $region147: #{branch_1_fun.1} parent=1 // pred_check_branch
      %251 = sbr.rel (0) target = $region149
    $region148: #{branch_1_fun.1} parent=1 // pred_region
      %252 = dma.done [#allocation15], 16
    $region149: #{branch_1_fun.1} parent=1 // pred_fallthru
      _
    // Predicated region
    $region150: #{branch_1_fun.1} parent=1 // pred_check
      _
    $region151: #{branch_1_fun.1} parent=1 // pred_check_branch
      %254 = sbr.rel (0) target = $region153
    $region152: #{branch_1_fun.1} parent=1 // pred_region
      %255 = dma.done [#allocation18], 16
    $region153: #{branch_1_fun.1} parent=1 // pred_fallthru
      _
    // Predicated region
    $region154: #{branch_1_fun.1} parent=1 // pred_check
      _
    $region155: #{branch_1_fun.1} parent=1 // pred_check_branch
      %257 = sbr.rel (0) target = $region157
    $region156: #{branch_1_fun.1} parent=1 // pred_region
      %258 = dma.done [#allocation18], 16
    $region157: #{branch_1_fun.1} parent=1 // pred_fallthru
      _
    // Predicated region
    $region158: #{branch_1_fun.1} parent=1 // pred_check
      _
    $region159: #{branch_1_fun.1} parent=1 // pred_check_branch
      %260 = sbr.rel (0) target = $region161
    $region160: #{branch_1_fun.1} parent=1 // pred_region
      %261 = dma.done [#allocation21], 16
    $region161: #{branch_1_fun.1} parent=1 // pred_fallthru
      _
    %v262 = vld [vmem:[%s1] sm:$0x3]
    %v263 = vld [vmem:[%s3] sm:$0xff]
    %v264 = vld [vmem:[%s3 + $0x8] sm:$0xff]
    %v265 = vld [vmem:[%s3 + $0x10] sm:$0xff]
    %v266 = vld [vmem:[%s3 + $0x18] sm:$0xff]
    %v267 = vld [vmem:[%s3 + $0x20] sm:$0xff]
    %v268 = vld [vmem:[%s3 + $0x28] sm:$0xff]
    %v269 = vld [vmem:[%s3 + $0x30] sm:$0xff]
    %v270 = vld [vmem:[%s3 + $0x38] sm:$0xff]
    %v271 = vld [vmem:[%s5] sm:$0xff]
    %v272 = vld [vmem:[%s5 + $0x8] sm:$0xff]
    %v273 = vld [vmem:[%s5 + $0x10] sm:$0xff]
    %v274 = vld [vmem:[%s5 + $0x18] sm:$0xff]
    %v275 = vld [vmem:[#allocation3] sm:$0x1]
    %v276 = vld [vmem:[#allocation5] sm:$0x1]
    %v277 = vld [vmem:[#allocation7] sm:$0x1]
    %v278 = vld [vmem:[%s13] sm:$0xff]
    %v279 = vld [vmem:[%s13 + $0x8] sm:$0xff]
    %v280 = vld [vmem:[%s13 + $0x10] sm:$0xff]
    %v281 = vld [vmem:[%s13 + $0x18] sm:$0xff]
    %v282 = vld [vmem:[%s13 + $0x20] sm:$0xff]
    %v283 = vld [vmem:[%s13 + $0x28] sm:$0xff]
    %v284 = vld [vmem:[%s13 + $0x30] sm:$0xff]
    %v285 = vld [vmem:[%s13 + $0x38] sm:$0xff]
    %v286 = vld [vmem:[%s15] sm:$0x1]
    %v287 = vld [vmem:[%s17] sm:$0xff]
    %v288 = vld [vmem:[%s17 + $0x8] sm:$0xff]
    %v289 = vld [vmem:[%s17 + $0x10] sm:$0xff]
    %v290 = vld [vmem:[%s17 + $0x18] sm:$0xff]
    %v291 = vld [vmem:[#allocation8] sm:$0x1]
    %v293 = vlaneseq
    %v294 = vshrl.u32 %v293, 7
    %v295 = vsub.s32 0, %v294
    %v296 = vrot.slane %v275, %v295
    %vm298 = vcmask 261120
    %v300 = vsel %vm298, %v262, 0
    %302 = vmatprep.subr.mxu0 0.0
    %303 = vmatpush1.msra.mxu0 0.0
    %304 = vmatprep.subr.mxu0 0.0
    %305 = vmatpush1.msra.mxu0 0.0
    %306 = vmatprep.subr.mxu0 0.0
    %307 = vmatpush1.msra.mxu0 0.0
    %308 = vmatprep.subr.mxu0 0.0
    %309 = vmatpush1.msra.mxu0 0.0
    %310 = vmatprep.subr.mxu0 0.0
    %311 = vmatpush1.msra.mxu0 0.0
    %312 = vmatprep.subr.mxu0 0.0
    %313 = vmatpush1.msra.mxu0 0.0
    %314 = vmatprep.subr.mxu0 0.0
    %315 = vmatpush1.msra.mxu0 0.0
    %316 = vmatprep.subr.mxu0 0.0
    %317 = vmatpush1.msra.mxu0 0.0
    %318 = vmatprep.subr.mxu0 0.0
    %319 = vmatpush1.msra.mxu0 0.0
    %320 = vmatprep.subr.mxu0 0.0
    %321 = vmatpush1.msra.mxu0 0.0
    %322 = vmatprep.subr.mxu0 0.0
    %323 = vmatpush1.msra.mxu0 0.0
    %324 = vmatprep.subr.mxu0 0.0
    %325 = vmatpush1.msra.mxu0 0.0
    %326 = vmatprep.subr.mxu0 0.0
    %327 = vmatpush1.msra.mxu0 %v274
    %328 = vmatprep.subr.mxu0 0.0
    %329 = vmatpush1.msra.mxu0 %v273
    %330 = vmatprep.subr.mxu0 0.0
    %331 = vmatpush1.msra.mxu0 %v272
    %332 = vmatprep.subr.mxu0 0.0
    %333 = vmatpush1.msra.mxu0 %v271
    %334 = vmatprep.subr.mxu0 0.0
    %335 = vmatpush2.msra.mxu0 0.0
    %336 = vmatprep.subr.mxu0 0.0
    %337 = vmatpush2.msra.mxu0 0.0
    %338 = vmatprep.subr.mxu0 0.0
    %339 = vmatpush2.msra.mxu0 0.0
    %340 = vmatprep.subr.mxu0 0.0
    %341 = vmatpush2.msra.mxu0 0.0
    %342 = vmatprep.subr.mxu0 0.0
    %343 = vmatpush2.msra.mxu0 0.0
    %344 = vmatprep.subr.mxu0 0.0
    %345 = vmatpush2.msra.mxu0 0.0
    %346 = vmatprep.subr.mxu0 0.0
    %347 = vmatpush2.msra.mxu0 0.0
    %348 = vmatprep.subr.mxu0 0.0
    %349 = vmatpush2.msra.mxu0 0.0
    %350 = vmatprep.subr.mxu0 0.0
    %351 = vmatpush2.msra.mxu0 0.0
    %352 = vmatprep.subr.mxu0 0.0
    %353 = vmatpush2.msra.mxu0 0.0
    %354 = vmatprep.subr.mxu0 0.0
    %355 = vmatpush2.msra.mxu0 0.0
    %356 = vmatprep.subr.mxu0 0.0
    %357 = vmatpush2.msra.mxu0 0.0
    %358 = vmatprep.subr.mxu0 0.0
    %359 = vmatpush2.msra.mxu0 0.0
    %360 = vmatprep.subr.mxu0 0.0
    %361 = vmatpush2.msra.mxu0 0.0
    %362 = vmatprep.subr.mxu0 0.0
    %363 = vmatpush2.msra.mxu0 0.0
    %364 = vmatprep.subr.mxu0 0.0
    %365 = vmatpush2.msra.mxu0 0.0
    %366 = vmatprep.mubr.f32.mxu0 0.0
    %367 = vmatmul.mubr.f32.gmra.mxu0 %v300
    %v368 = vpop.f32.mrf.mxu0
    %v369 = vadd.f32 %v296, %v368
    %v370 = vpop.f32.mrf.mxu0
    %371 = vdwg.mxu0
    %v372 = vmax.f32 %v369, 0.0
    %vm373 = vcmask 523264
    %v375 = vsel %vm373, %v372, 0
    %377 = vmatprep.subr.mxu0 0.0
    %378 = vmatpush1.msra.mxu0 0.0
    %379 = vmatprep.subr.mxu0 0.0
    %380 = vmatpush1.msra.mxu0 0.0
    %381 = vmatprep.subr.mxu0 0.0
    %382 = vmatpush1.msra.mxu0 0.0
    %383 = vmatprep.subr.mxu0 0.0
    %384 = vmatpush1.msra.mxu0 0.0
    %385 = vmatprep.subr.mxu0 0.0
    %386 = vmatpush1.msra.mxu0 0.0
    %387 = vmatprep.subr.mxu0 0.0
    %388 = vmatpush1.msra.mxu0 0.0
    %389 = vmatprep.subr.mxu0 0.0
    %390 = vmatpush1.msra.mxu0 0.0
    %391 = vmatprep.subr.mxu0 0.0
    %392 = vmatpush1.msra.mxu0 0.0
    %393 = vmatprep.subr.mxu0 0.0
    %394 = vmatpush1.msra.mxu0 %v270
    %395 = vmatprep.subr.mxu0 0.0
    %396 = vmatpush1.msra.mxu0 %v269
    %397 = vmatprep.subr.mxu0 0.0
    %398 = vmatpush1.msra.mxu0 %v268
    %399 = vmatprep.subr.mxu0 0.0
    %400 = vmatpush1.msra.mxu0 %v267
    %401 = vmatprep.subr.mxu0 0.0
    %402 = vmatpush1.msra.mxu0 %v266
    %403 = vmatprep.subr.mxu0 0.0
    %404 = vmatpush1.msra.mxu0 %v265
    %405 = vmatprep.subr.mxu0 0.0
    %406 = vmatpush1.msra.mxu0 %v264
    %407 = vmatprep.subr.mxu0 0.0
    %408 = vmatpush1.msra.mxu0 %v263
    %409 = vmatprep.subr.mxu0 0.0
    %410 = vmatpush2.msra.mxu0 0.0
    %411 = vmatprep.subr.mxu0 0.0
    %412 = vmatpush2.msra.mxu0 0.0
    %413 = vmatprep.subr.mxu0 0.0
    %414 = vmatpush2.msra.mxu0 0.0
    %415 = vmatprep.subr.mxu0 0.0
    %416 = vmatpush2.msra.mxu0 0.0
    %417 = vmatprep.subr.mxu0 0.0
    %418 = vmatpush2.msra.mxu0 0.0
    %419 = vmatprep.subr.mxu0 0.0
    %420 = vmatpush2.msra.mxu0 0.0
    %421 = vmatprep.subr.mxu0 0.0
    %422 = vmatpush2.msra.mxu0 0.0
    %423 = vmatprep.subr.mxu0 0.0
    %424 = vmatpush2.msra.mxu0 0.0
    %425 = vmatprep.subr.mxu0 0.0
    %426 = vmatpush2.msra.mxu0 0.0
    %427 = vmatprep.subr.mxu0 0.0
    %428 = vmatpush2.msra.mxu0 0.0
    %429 = vmatprep.subr.mxu0 0.0
    %430 = vmatpush2.msra.mxu0 0.0
    %431 = vmatprep.subr.mxu0 0.0
    %432 = vmatpush2.msra.mxu0 0.0
    %433 = vmatprep.subr.mxu0 0.0
    %434 = vmatpush2.msra.mxu0 0.0
    %435 = vmatprep.subr.mxu0 0.0
    %436 = vmatpush2.msra.mxu0 0.0
    %437 = vmatprep.subr.mxu0 0.0
    %438 = vmatpush2.msra.mxu0 0.0
    %439 = vmatprep.subr.mxu0 0.0
    %440 = vmatpush2.msra.mxu0 0.0
    %441 = vmatprep.mubr.f32.mxu0 0.0
    %442 = vmatmul.mubr.f32.gmra.mxu0 %v375
    %v443 = vpop.f32.mrf.mxu0
    %v444 = vadd.f32 0.0, %v443
    %v445 = vpop.f32.mrf.mxu0
    %446 = vdwg.mxu0
    %v447 = vmul.f32 %v372, %v372
    %v449 = vsel %vm373, %v447, 0
    %451 = vmatprep.subr.mxu0 0.0
    %452 = vmatpush1.msra.mxu0 0.0
    %453 = vmatprep.subr.mxu0 0.0
    %454 = vmatpush1.msra.mxu0 0.0
    %455 = vmatprep.subr.mxu0 0.0
    %456 = vmatpush1.msra.mxu0 0.0
    %457 = vmatprep.subr.mxu0 0.0
    %458 = vmatpush1.msra.mxu0 0.0
    %459 = vmatprep.subr.mxu0 0.0
    %460 = vmatpush1.msra.mxu0 0.0
    %461 = vmatprep.subr.mxu0 0.0
    %462 = vmatpush1.msra.mxu0 0.0
    %463 = vmatprep.subr.mxu0 0.0
    %464 = vmatpush1.msra.mxu0 0.0
    %465 = vmatprep.subr.mxu0 0.0
    %466 = vmatpush1.msra.mxu0 0.0
    %467 = vmatprep.subr.mxu0 0.0
    %468 = vmatpush1.msra.mxu0 %v270
    %469 = vmatprep.subr.mxu0 0.0
    %470 = vmatpush1.msra.mxu0 %v269
    %471 = vmatprep.subr.mxu0 0.0
    %472 = vmatpush1.msra.mxu0 %v268
    %473 = vmatprep.subr.mxu0 0.0
    %474 = vmatpush1.msra.mxu0 %v267
    %475 = vmatprep.subr.mxu0 0.0
    %476 = vmatpush1.msra.mxu0 %v266
    %477 = vmatprep.subr.mxu0 0.0
    %478 = vmatpush1.msra.mxu0 %v265
    %479 = vmatprep.subr.mxu0 0.0
    %480 = vmatpush1.msra.mxu0 %v264
    %481 = vmatprep.subr.mxu0 0.0
    %482 = vmatpush1.msra.mxu0 %v263
    %483 = vmatprep.subr.mxu0 0.0
    %484 = vmatpush2.msra.mxu0 0.0
    %485 = vmatprep.subr.mxu0 0.0
    %486 = vmatpush2.msra.mxu0 0.0
    %487 = vmatprep.subr.mxu0 0.0
    %488 = vmatpush2.msra.mxu0 0.0
    %489 = vmatprep.subr.mxu0 0.0
    %490 = vmatpush2.msra.mxu0 0.0
    %491 = vmatprep.subr.mxu0 0.0
    %492 = vmatpush2.msra.mxu0 0.0
    %493 = vmatprep.subr.mxu0 0.0
    %494 = vmatpush2.msra.mxu0 0.0
    %495 = vmatprep.subr.mxu0 0.0
    %496 = vmatpush2.msra.mxu0 0.0
    %497 = vmatprep.subr.mxu0 0.0
    %498 = vmatpush2.msra.mxu0 0.0
    %499 = vmatprep.subr.mxu0 0.0
    %500 = vmatpush2.msra.mxu0 0.0
    %501 = vmatprep.subr.mxu0 0.0
    %502 = vmatpush2.msra.mxu0 0.0
    %503 = vmatprep.subr.mxu0 0.0
    %504 = vmatpush2.msra.mxu0 0.0
    %505 = vmatprep.subr.mxu0 0.0
    %506 = vmatpush2.msra.mxu0 0.0
    %507 = vmatprep.subr.mxu0 0.0
    %508 = vmatpush2.msra.mxu0 0.0
    %509 = vmatprep.subr.mxu0 0.0
    %510 = vmatpush2.msra.mxu0 0.0
    %511 = vmatprep.subr.mxu0 0.0
    %512 = vmatpush2.msra.mxu0 0.0
    %513 = vmatprep.subr.mxu0 0.0
    %514 = vmatpush2.msra.mxu0 0.0
    %515 = vmatprep.mubr.f32.mxu0 0.0
    %516 = vmatmul.mubr.f32.gmra.mxu0 %v449
    %v517 = vpop.f32.mrf.mxu0
    %v518 = vadd.f32 0.0, %v517
    %v519 = vpop.f32.mrf.mxu0
    %520 = vdwg.mxu0
    %v521 = vmul.f32 %v444, %v444
    %v522 = vsub.f32 %v518, %v521
    %v523 = vsub.f32 %v372, %v444
    %v524 = vadd.f32 %v522, 1e-05
    %v525 = vrsqrt.pop %v524
    %v526 = vmul.f32 %v523, %v525
    %v528 = vlaneseq
    %v529 = vshrl.u32 %v528, 7
    %v530 = vsub.s32 0, %v529
    %v531 = vrot.slane %v276, %v530
    %v533 = vmul.f32 %v526, %v531
    %v535 = vlaneseq
    %v536 = vshrl.u32 %v535, 7
    %v537 = vsub.s32 0, %v536
    %v538 = vrot.slane %v277, %v537
    %v540 = vadd.f32 %v533, %v538
    %v542 = vlaneseq
    %v543 = vshrl.u32 %v542, 7
    %v544 = vsub.s32 0, %v543
    %v545 = vrot.slane %v286, %v544
    %v548 = vsel %vm373, %v540, 0
    %550 = vmatprep.subr.mxu0 0.0
    %551 = vmatpush1.msra.mxu0 0.0
    %552 = vmatprep.subr.mxu0 0.0
    %553 = vmatpush1.msra.mxu0 0.0
    %554 = vmatprep.subr.mxu0 0.0
    %555 = vmatpush1.msra.mxu0 0.0
    %556 = vmatprep.subr.mxu0 0.0
    %557 = vmatpush1.msra.mxu0 0.0
    %558 = vmatprep.subr.mxu0 0.0
    %559 = vmatpush1.msra.mxu0 0.0
    %560 = vmatprep.subr.mxu0 0.0
    %561 = vmatpush1.msra.mxu0 0.0
    %562 = vmatprep.subr.mxu0 0.0
    %563 = vmatpush1.msra.mxu0 0.0
    %564 = vmatprep.subr.mxu0 0.0
    %565 = vmatpush1.msra.mxu0 0.0
    %566 = vmatprep.subr.mxu0 0.0
    %567 = vmatpush1.msra.mxu0 %v285
    %568 = vmatprep.subr.mxu0 0.0
    %569 = vmatpush1.msra.mxu0 %v284
    %570 = vmatprep.subr.mxu0 0.0
    %571 = vmatpush1.msra.mxu0 %v283
    %572 = vmatprep.subr.mxu0 0.0
    %573 = vmatpush1.msra.mxu0 %v282
    %574 = vmatprep.subr.mxu0 0.0
    %575 = vmatpush1.msra.mxu0 %v281
    %576 = vmatprep.subr.mxu0 0.0
    %577 = vmatpush1.msra.mxu0 %v280
    %578 = vmatprep.subr.mxu0 0.0
    %579 = vmatpush1.msra.mxu0 %v279
    %580 = vmatprep.subr.mxu0 0.0
    %581 = vmatpush1.msra.mxu0 %v278
    %582 = vmatprep.subr.mxu0 0.0
    %583 = vmatpush2.msra.mxu0 0.0
    %584 = vmatprep.subr.mxu0 0.0
    %585 = vmatpush2.msra.mxu0 0.0
    %586 = vmatprep.subr.mxu0 0.0
    %587 = vmatpush2.msra.mxu0 0.0
    %588 = vmatprep.subr.mxu0 0.0
    %589 = vmatpush2.msra.mxu0 0.0
    %590 = vmatprep.subr.mxu0 0.0
    %591 = vmatpush2.msra.mxu0 0.0
    %592 = vmatprep.subr.mxu0 0.0
    %593 = vmatpush2.msra.mxu0 0.0
    %594 = vmatprep.subr.mxu0 0.0
    %595 = vmatpush2.msra.mxu0 0.0
    %596 = vmatprep.subr.mxu0 0.0
    %597 = vmatpush2.msra.mxu0 0.0
    %598 = vmatprep.subr.mxu0 0.0
    %599 = vmatpush2.msra.mxu0 0.0
    %600 = vmatprep.subr.mxu0 0.0
    %601 = vmatpush2.msra.mxu0 0.0
    %602 = vmatprep.subr.mxu0 0.0
    %603 = vmatpush2.msra.mxu0 0.0
    %604 = vmatprep.subr.mxu0 0.0
    %605 = vmatpush2.msra.mxu0 0.0
    %606 = vmatprep.subr.mxu0 0.0
    %607 = vmatpush2.msra.mxu0 0.0
    %608 = vmatprep.subr.mxu0 0.0
    %609 = vmatpush2.msra.mxu0 0.0
    %610 = vmatprep.subr.mxu0 0.0
    %611 = vmatpush2.msra.mxu0 0.0
    %612 = vmatprep.subr.mxu0 0.0
    %613 = vmatpush2.msra.mxu0 0.0
    %614 = vmatprep.mubr.f32.mxu0 0.0
    %615 = vmatmul.mubr.f32.gmra.mxu0 %v548
    %v616 = vpop.f32.mrf.mxu0
    %v617 = vadd.f32 %v545, %v616
    %v618 = vpop.f32.mrf.mxu0
    %619 = vdwg.mxu0
    %v620 = vmax.f32 %v617, 0.0
    %v622 = vlaneseq
    %v623 = vshrl.u32 %v622, 7
    %v624 = vsub.s32 0, %v623
    %v625 = vrot.slane %v291, %v624
    %v628 = vsel %vm298, %v620, 0
    %630 = vmatprep.subr.mxu0 0.0
    %631 = vmatpush1.msra.mxu0 0.0
    %632 = vmatprep.subr.mxu0 0.0
    %633 = vmatpush1.msra.mxu0 0.0
    %634 = vmatprep.subr.mxu0 0.0
    %635 = vmatpush1.msra.mxu0 0.0
    %636 = vmatprep.subr.mxu0 0.0
    %637 = vmatpush1.msra.mxu0 0.0
    %638 = vmatprep.subr.mxu0 0.0
    %639 = vmatpush1.msra.mxu0 0.0
    %640 = vmatprep.subr.mxu0 0.0
    %641 = vmatpush1.msra.mxu0 0.0
    %642 = vmatprep.subr.mxu0 0.0
    %643 = vmatpush1.msra.mxu0 0.0
    %644 = vmatprep.subr.mxu0 0.0
    %645 = vmatpush1.msra.mxu0 0.0
    %646 = vmatprep.subr.mxu0 0.0
    %647 = vmatpush1.msra.mxu0 0.0
    %648 = vmatprep.subr.mxu0 0.0
    %649 = vmatpush1.msra.mxu0 0.0
    %650 = vmatprep.subr.mxu0 0.0
    %651 = vmatpush1.msra.mxu0 0.0
    %652 = vmatprep.subr.mxu0 0.0
    %653 = vmatpush1.msra.mxu0 0.0
    %654 = vmatprep.subr.mxu0 0.0
    %655 = vmatpush1.msra.mxu0 %v290
    %656 = vmatprep.subr.mxu0 0.0
    %657 = vmatpush1.msra.mxu0 %v289
    %658 = vmatprep.subr.mxu0 0.0
    %659 = vmatpush1.msra.mxu0 %v288
    %660 = vmatprep.subr.mxu0 0.0
    %661 = vmatpush1.msra.mxu0 %v287
    %662 = vmatprep.subr.mxu0 0.0
    %663 = vmatpush2.msra.mxu0 0.0
    %664 = vmatprep.subr.mxu0 0.0
    %665 = vmatpush2.msra.mxu0 0.0
    %666 = vmatprep.subr.mxu0 0.0
    %667 = vmatpush2.msra.mxu0 0.0
    %668 = vmatprep.subr.mxu0 0.0
    %669 = vmatpush2.msra.mxu0 0.0
    %670 = vmatprep.subr.mxu0 0.0
    %671 = vmatpush2.msra.mxu0 0.0
    %672 = vmatprep.subr.mxu0 0.0
    %673 = vmatpush2.msra.mxu0 0.0
    %674 = vmatprep.subr.mxu0 0.0
    %675 = vmatpush2.msra.mxu0 0.0
    %676 = vmatprep.subr.mxu0 0.0
    %677 = vmatpush2.msra.mxu0 0.0
    %678 = vmatprep.subr.mxu0 0.0
    %679 = vmatpush2.msra.mxu0 0.0
    %680 = vmatprep.subr.mxu0 0.0
    %681 = vmatpush2.msra.mxu0 0.0
    %682 = vmatprep.subr.mxu0 0.0
    %683 = vmatpush2.msra.mxu0 0.0
    %684 = vmatprep.subr.mxu0 0.0
    %685 = vmatpush2.msra.mxu0 0.0
    %686 = vmatprep.subr.mxu0 0.0
    %687 = vmatpush2.msra.mxu0 0.0
    %688 = vmatprep.subr.mxu0 0.0
    %689 = vmatpush2.msra.mxu0 0.0
    %690 = vmatprep.subr.mxu0 0.0
    %691 = vmatpush2.msra.mxu0 0.0
    %692 = vmatprep.subr.mxu0 0.0
    %693 = vmatpush2.msra.mxu0 0.0
    %694 = vmatprep.mubr.f32.mxu0 0.0
    %695 = vmatmul.mubr.f32.gmra.mxu0 %v628
    %v696 = vpop.f32.mrf.mxu0
    %v697 = vadd.f32 %v625, %v696
    %v698 = vpop.f32.mrf.mxu0
    %699 = vdwg.mxu0
    %vm700 = vcmask 25600
    %v701 = vsel %vm700, %v697, -inf
    %702 = vmax.xlane.f32.xlu0 %v701
    %v703 = vpop.xlane.xlu0 %702
    %v704 = vsub.f32 %v697, %v703
    %v705 = vmul.f32 %v704, 1.442695
    %v706 = vpow.pop %v705
    %v707 = vsel %vm700, %v706, 0.0
    %708 = vadd.xlane.f32.xlu0 %v707
    %v709 = vpop.xlane.xlu0 %708
    %v710 = vrcp.pop %v709
    %v711 = vmul.f32 %v706, %v710
    %v712 = vld [vmem:[%s21] sm:$0xf]
    %v713 = vld [vmem:[#allocation10] sm:$0x1]
    %v715 = vlaneseq
    %v716 = vshrl.u32 %v715, 7
    %v717 = vsub.s32 0, %v716
    %v718 = vrot.slane %v713, %v717
    %vm720 = vcmask 31744
    %v722 = vsel %vm720, %v711, 0
    %vm724 = vcmask 1043456
    %v726 = vsel %vm724, %v712, 0
    %728 = vmatprep.subr.mxu0 0.0
    %729 = vmatpush1.msra.mxu0 0.0
    %730 = vmatprep.subr.mxu0 0.0
    %731 = vmatpush1.msra.mxu0 0.0
    %732 = vmatprep.subr.mxu0 0.0
    %733 = vmatpush1.msra.mxu0 0.0
    %734 = vmatprep.subr.mxu0 0.0
    %735 = vmatpush1.msra.mxu0 0.0
    %736 = vmatprep.subr.mxu0 0.0
    %737 = vmatpush1.msra.mxu0 0.0
    %738 = vmatprep.subr.mxu0 0.0
    %739 = vmatpush1.msra.mxu0 0.0
    %740 = vmatprep.subr.mxu0 0.0
    %741 = vmatpush1.msra.mxu0 0.0
    %742 = vmatprep.subr.mxu0 0.0
    %743 = vmatpush1.msra.mxu0 0.0
    %744 = vmatprep.subr.mxu0 0.0
    %745 = vmatpush1.msra.mxu0 0.0
    %746 = vmatprep.subr.mxu0 0.0
    %747 = vmatpush1.msra.mxu0 0.0
    %748 = vmatprep.subr.mxu0 0.0
    %749 = vmatpush1.msra.mxu0 0.0
    %750 = vmatprep.subr.mxu0 0.0
    %751 = vmatpush1.msra.mxu0 0.0
    %752 = vmatprep.subr.mxu0 0.0
    %753 = vmatpush1.msra.mxu0 0.0
    %754 = vmatprep.subr.mxu0 0.0
    %755 = vmatpush1.msra.mxu0 0.0
    %756 = vmatprep.subr.mxu0 0.0
    %757 = vmatpush1.msra.mxu0 0.0
    %758 = vmatprep.subr.mxu0 0.0
    %759 = vmatpush1.msra.mxu0 %v726
    %760 = vmatprep.subr.mxu0 0.0
    %761 = vmatpush2.msra.mxu0 0.0
    %762 = vmatprep.subr.mxu0 0.0
    %763 = vmatpush2.msra.mxu0 0.0
    %764 = vmatprep.subr.mxu0 0.0
    %765 = vmatpush2.msra.mxu0 0.0
    %766 = vmatprep.subr.mxu0 0.0
    %767 = vmatpush2.msra.mxu0 0.0
    %768 = vmatprep.subr.mxu0 0.0
    %769 = vmatpush2.msra.mxu0 0.0
    %770 = vmatprep.subr.mxu0 0.0
    %771 = vmatpush2.msra.mxu0 0.0
    %772 = vmatprep.subr.mxu0 0.0
    %773 = vmatpush2.msra.mxu0 0.0
    %774 = vmatprep.subr.mxu0 0.0
    %775 = vmatpush2.msra.mxu0 0.0
    %776 = vmatprep.subr.mxu0 0.0
    %777 = vmatpush2.msra.mxu0 0.0
    %778 = vmatprep.subr.mxu0 0.0
    %779 = vmatpush2.msra.mxu0 0.0
    %780 = vmatprep.subr.mxu0 0.0
    %781 = vmatpush2.msra.mxu0 0.0
    %782 = vmatprep.subr.mxu0 0.0
    %783 = vmatpush2.msra.mxu0 0.0
    %784 = vmatprep.subr.mxu0 0.0
    %785 = vmatpush2.msra.mxu0 0.0
    %786 = vmatprep.subr.mxu0 0.0
    %787 = vmatpush2.msra.mxu0 0.0
    %788 = vmatprep.subr.mxu0 0.0
    %789 = vmatpush2.msra.mxu0 0.0
    %790 = vmatprep.subr.mxu0 0.0
    %791 = vmatpush2.msra.mxu0 0.0
    %792 = vmatprep.mubr.f32.mxu0 0.0
    %793 = vmatmul.mubr.f32.gmra.mxu0 %v722
    %v794 = vpop.f32.mrf.mxu0
    %v795 = vadd.f32 %v718, %v794
    %v796 = vpop.f32.mrf.mxu0
    %797 = vdwg.mxu0
    %v798 = vmax.f32 %v795, 0.0
    %v799 = vld [vmem:[%s25] sm:$0xff]
    %v800 = vld [vmem:[%s25 + $0x8] sm:$0xff]
    %v801 = vld [vmem:[#allocation2] sm:$0x1]
    %v803 = vlaneseq
    %v804 = vshrl.u32 %v803, 7
    %v805 = vsub.s32 0, %v804
    %v806 = vrot.slane %v801, %v805
    %vm808 = vcmask 130048
    %v810 = vsel %vm808, %v798, 0
    %812 = vmatprep.subr.mxu0 0.0
    %813 = vmatpush1.msra.mxu0 0.0
    %814 = vmatprep.subr.mxu0 0.0
    %815 = vmatpush1.msra.mxu0 0.0
    %816 = vmatprep.subr.mxu0 0.0
    %817 = vmatpush1.msra.mxu0 0.0
    %818 = vmatprep.subr.mxu0 0.0
    %819 = vmatpush1.msra.mxu0 0.0
    %820 = vmatprep.subr.mxu0 0.0
    %821 = vmatpush1.msra.mxu0 0.0
    %822 = vmatprep.subr.mxu0 0.0
    %823 = vmatpush1.msra.mxu0 0.0
    %824 = vmatprep.subr.mxu0 0.0
    %825 = vmatpush1.msra.mxu0 0.0
    %826 = vmatprep.subr.mxu0 0.0
    %827 = vmatpush1.msra.mxu0 0.0
    %828 = vmatprep.subr.mxu0 0.0
    %829 = vmatpush1.msra.mxu0 0.0
    %830 = vmatprep.subr.mxu0 0.0
    %831 = vmatpush1.msra.mxu0 0.0
    %832 = vmatprep.subr.mxu0 0.0
    %833 = vmatpush1.msra.mxu0 0.0
    %834 = vmatprep.subr.mxu0 0.0
    %835 = vmatpush1.msra.mxu0 0.0
    %836 = vmatprep.subr.mxu0 0.0
    %837 = vmatpush1.msra.mxu0 0.0
    %838 = vmatprep.subr.mxu0 0.0
    %839 = vmatpush1.msra.mxu0 0.0
    %840 = vmatprep.subr.mxu0 0.0
    %841 = vmatpush1.msra.mxu0 %v800
    %842 = vmatprep.subr.mxu0 0.0
    %843 = vmatpush1.msra.mxu0 %v799
    %844 = vmatprep.subr.mxu0 0.0
    %845 = vmatpush2.msra.mxu0 0.0
    %846 = vmatprep.subr.mxu0 0.0
    %847 = vmatpush2.msra.mxu0 0.0
    %848 = vmatprep.subr.mxu0 0.0
    %849 = vmatpush2.msra.mxu0 0.0
    %850 = vmatprep.subr.mxu0 0.0
    %851 = vmatpush2.msra.mxu0 0.0
    %852 = vmatprep.subr.mxu0 0.0
    %853 = vmatpush2.msra.mxu0 0.0
    %854 = vmatprep.subr.mxu0 0.0
    %855 = vmatpush2.msra.mxu0 0.0
    %856 = vmatprep.subr.mxu0 0.0
    %857 = vmatpush2.msra.mxu0 0.0
    %858 = vmatprep.subr.mxu0 0.0
    %859 = vmatpush2.msra.mxu0 0.0
    %860 = vmatprep.subr.mxu0 0.0
    %861 = vmatpush2.msra.mxu0 0.0
    %862 = vmatprep.subr.mxu0 0.0
    %863 = vmatpush2.msra.mxu0 0.0
    %864 = vmatprep.subr.mxu0 0.0
    %865 = vmatpush2.msra.mxu0 0.0
    %866 = vmatprep.subr.mxu0 0.0
    %867 = vmatpush2.msra.mxu0 0.0
    %868 = vmatprep.subr.mxu0 0.0
    %869 = vmatpush2.msra.mxu0 0.0
    %870 = vmatprep.subr.mxu0 0.0
    %871 = vmatpush2.msra.mxu0 0.0
    %872 = vmatprep.subr.mxu0 0.0
    %873 = vmatpush2.msra.mxu0 0.0
    %874 = vmatprep.subr.mxu0 0.0
    %875 = vmatpush2.msra.mxu0 0.0
    %876 = vmatprep.mubr.f32.mxu0 0.0
    %877 = vmatmul.mubr.f32.gmra.mxu0 %v810
    %v878 = vpop.f32.mrf.mxu0
    %v879 = vadd.f32 %v806, %v878
    %v880 = vpop.f32.mrf.mxu0
    %881 = vdwg.mxu0
    %v882 = vxor.u32 %v879, 2147483648
    %v883 = vmul.f32 %v882, 1.442695
    %v884 = vpow.pop %v883
    %v885 = vadd.f32 %v884, 1.0
    %v886 = vrcp.pop %v885
    %v887 = vmul.f32 1.0, %v886
    %v888 = vld [vmem:[%s29] sm:$0xff]
    %v889 = vld [vmem:[%s29 + $0x8] sm:$0xff]
    %v890 = vld [vmem:[%s29 + $0x10] sm:$0xff]
    %v891 = vld [vmem:[%s29 + $0x18] sm:$0xff]
    %v892 = vld [vmem:[%s29 + $0x20] sm:$0xff]
    %v893 = vld [vmem:[%s29 + $0x28] sm:$0xff]
    %v894 = vld [vmem:[%s29 + $0x30] sm:$0xff]
    %v895 = vld [vmem:[%s29 + $0x38] sm:$0xff]
    %v896 = vld [vmem:[%s31] sm:$0xff]
    %v897 = vld [vmem:[%s31 + $0x8] sm:$0xff]
    %v898 = vld [vmem:[%s31 + $0x10] sm:$0xff]
    %v899 = vld [vmem:[%s31 + $0x18] sm:$0xff]
    %v900 = vld [vmem:[%s31 + $0x20] sm:$0xff]
    %v901 = vld [vmem:[%s31 + $0x28] sm:$0xff]
    %v902 = vld [vmem:[%s31 + $0x30] sm:$0xff]
    %v903 = vld [vmem:[%s31 + $0x38] sm:$0xff]
    %v904 = vld [vmem:[%s31 + $0x40] sm:$0xff]
    %v905 = vld [vmem:[%s31 + $0x48] sm:$0xff]
    %v906 = vld [vmem:[%s31 + $0x50] sm:$0xff]
    %v907 = vld [vmem:[%s31 + $0x58] sm:$0xff]
    %v908 = vld [vmem:[%s31 + $0x60] sm:$0xff]
    %v909 = vld [vmem:[%s31 + $0x68] sm:$0xff]
    %v910 = vld [vmem:[%s31 + $0x70] sm:$0xff]
    %v911 = vld [vmem:[%s31 + $0x78] sm:$0xff]
    %912 = vmatprep.subr.mxu0 0.0
    %913 = vmatpush1.msra.mxu0 0.0
    %914 = vmatprep.subr.mxu0 0.0
    %915 = vmatpush1.msra.mxu0 0.0
    %916 = vmatprep.subr.mxu0 0.0
    %917 = vmatpush1.msra.mxu0 0.0
    %918 = vmatprep.subr.mxu0 0.0
    %919 = vmatpush1.msra.mxu0 0.0
    %920 = vmatprep.subr.mxu0 0.0
    %921 = vmatpush1.msra.mxu0 0.0
    %922 = vmatprep.subr.mxu0 0.0
    %923 = vmatpush1.msra.mxu0 0.0
    %924 = vmatprep.subr.mxu0 0.0
    %925 = vmatpush1.msra.mxu0 0.0
    %926 = vmatprep.subr.mxu0 0.0
    %927 = vmatpush1.msra.mxu0 0.0
    %928 = vmatprep.subr.mxu0 %v911
    %929 = vmatpush1.msra.mxu0 %v910
    %930 = vmatprep.subr.mxu0 %v909
    %931 = vmatpush1.msra.mxu0 %v908
    %932 = vmatprep.subr.mxu0 %v907
    %933 = vmatpush1.msra.mxu0 %v906
    %934 = vmatprep.subr.mxu0 %v905
    %935 = vmatpush1.msra.mxu0 %v904
    %936 = vmatprep.subr.mxu0 %v903
    %937 = vmatpush1.msra.mxu0 %v902
    %938 = vmatprep.subr.mxu0 %v901
    %939 = vmatpush1.msra.mxu0 %v900
    %940 = vmatprep.subr.mxu0 %v899
    %941 = vmatpush1.msra.mxu0 %v898
    %942 = vmatprep.subr.mxu0 %v897
    %943 = vmatpush1.msra.mxu0 %v896
    %944 = vmatprep.subr.mxu0 0.0
    %945 = vmatpush2.msra.mxu0 0.0
    %946 = vmatprep.subr.mxu0 0.0
    %947 = vmatpush2.msra.mxu0 0.0
    %948 = vmatprep.subr.mxu0 0.0
    %949 = vmatpush2.msra.mxu0 0.0
    %950 = vmatprep.subr.mxu0 0.0
    %951 = vmatpush2.msra.mxu0 0.0
    %952 = vmatprep.subr.mxu0 0.0
    %953 = vmatpush2.msra.mxu0 0.0
    %954 = vmatprep.subr.mxu0 0.0
    %955 = vmatpush2.msra.mxu0 0.0
    %956 = vmatprep.subr.mxu0 0.0
    %957 = vmatpush2.msra.mxu0 0.0
    %958 = vmatprep.subr.mxu0 0.0
    %959 = vmatpush2.msra.mxu0 0.0
    %960 = vmatprep.subr.mxu0 0.0
    %961 = vmatpush2.msra.mxu0 0.0
    %962 = vmatprep.subr.mxu0 0.0
    %963 = vmatpush2.msra.mxu0 0.0
    %964 = vmatprep.subr.mxu0 0.0
    %965 = vmatpush2.msra.mxu0 0.0
    %966 = vmatprep.subr.mxu0 0.0
    %967 = vmatpush2.msra.mxu0 0.0
    %968 = vmatprep.subr.mxu0 0.0
    %969 = vmatpush2.msra.mxu0 0.0
    %970 = vmatprep.subr.mxu0 0.0
    %971 = vmatpush2.msra.mxu0 0.0
    %972 = vmatprep.subr.mxu0 0.0
    %973 = vmatpush2.msra.mxu0 0.0
    %974 = vmatprep.subr.mxu0 0.0
    %975 = vmatpush2.msra.mxu0 0.0
    %976 = vmatprep.mubr.f32.mxu0 0.0
    %977 = vmatmul.mubr.f32.gmra.mxu0 %v548
    %v978 = vpop.f32.mrf.mxu0
    %v979 = vadd.f32 0.0, %v978
    %v980 = vpop.f32.mrf.mxu0
    %v981 = vadd.f32 0.0, %v980
    %982 = vdwg.mxu0
    %983 = vmatprep.subr.mxu0 0.0
    %984 = vmatpush1.msra.mxu0 0.0
    %985 = vmatprep.subr.mxu0 0.0
    %986 = vmatpush1.msra.mxu0 0.0
    %987 = vmatprep.subr.mxu0 0.0
    %988 = vmatpush1.msra.mxu0 0.0
    %989 = vmatprep.subr.mxu0 0.0
    %990 = vmatpush1.msra.mxu0 0.0
    %991 = vmatprep.subr.mxu0 0.0
    %992 = vmatpush1.msra.mxu0 0.0
    %993 = vmatprep.subr.mxu0 0.0
    %994 = vmatpush1.msra.mxu0 0.0
    %995 = vmatprep.subr.mxu0 0.0
    %996 = vmatpush1.msra.mxu0 0.0
    %997 = vmatprep.subr.mxu0 0.0
    %998 = vmatpush1.msra.mxu0 0.0
    %999 = vmatprep.subr.mxu0 0.0
    %1000 = vmatpush1.msra.mxu0 0.0
    %1001 = vmatprep.subr.mxu0 0.0
    %1002 = vmatpush1.msra.mxu0 0.0
    %1003 = vmatprep.subr.mxu0 0.0
    %1004 = vmatpush1.msra.mxu0 0.0
    %1005 = vmatprep.subr.mxu0 0.0
    %1006 = vmatpush1.msra.mxu0 0.0
    %1007 = vmatprep.subr.mxu0 %v895
    %1008 = vmatpush1.msra.mxu0 %v894
    %1009 = vmatprep.subr.mxu0 %v893
    %1010 = vmatpush1.msra.mxu0 %v892
    %1011 = vmatprep.subr.mxu0 %v891
    %1012 = vmatpush1.msra.mxu0 %v890
    %1013 = vmatprep.subr.mxu0 %v889
    %1014 = vmatpush1.msra.mxu0 %v888
    %1015 = vmatprep.subr.mxu0 0.0
    %1016 = vmatpush2.msra.mxu0 0.0
    %1017 = vmatprep.subr.mxu0 0.0
    %1018 = vmatpush2.msra.mxu0 0.0
    %1019 = vmatprep.subr.mxu0 0.0
    %1020 = vmatpush2.msra.mxu0 0.0
    %1021 = vmatprep.subr.mxu0 0.0
    %1022 = vmatpush2.msra.mxu0 0.0
    %1023 = vmatprep.subr.mxu0 0.0
    %1024 = vmatpush2.msra.mxu0 0.0
    %1025 = vmatprep.subr.mxu0 0.0
    %1026 = vmatpush2.msra.mxu0 0.0
    %1027 = vmatprep.subr.mxu0 0.0
    %1028 = vmatpush2.msra.mxu0 0.0
    %1029 = vmatprep.subr.mxu0 0.0
    %1030 = vmatpush2.msra.mxu0 0.0
    %1031 = vmatprep.subr.mxu0 0.0
    %1032 = vmatpush2.msra.mxu0 0.0
    %1033 = vmatprep.subr.mxu0 0.0
    %1034 = vmatpush2.msra.mxu0 0.0
    %1035 = vmatprep.subr.mxu0 0.0
    %1036 = vmatpush2.msra.mxu0 0.0
    %1037 = vmatprep.subr.mxu0 0.0
    %1038 = vmatpush2.msra.mxu0 0.0
    %1039 = vmatprep.subr.mxu0 0.0
    %1040 = vmatpush2.msra.mxu0 0.0
    %1041 = vmatprep.subr.mxu0 0.0
    %1042 = vmatpush2.msra.mxu0 0.0
    %1043 = vmatprep.subr.mxu0 0.0
    %1044 = vmatpush2.msra.mxu0 0.0
    %1045 = vmatprep.subr.mxu0 0.0
    %1046 = vmatpush2.msra.mxu0 0.0
    %1047 = vmatprep.mubr.f32.mxu0 0.0
    %1048 = vmatmul.mubr.f32.gmra.mxu0 %v300
    %v1049 = vpop.f32.mrf.mxu0
    %v1050 = vadd.f32 %v979, %v1049
    %v1051 = vpop.f32.mrf.mxu0
    %v1052 = vadd.f32 %v981, %v1051
    %1053 = vdwg.mxu0
    %v1054 = vld [vmem:[%s33] sm:$0xff]
    %v1056 = vcombine.high %v1054, %v1054
    %v1057 = vsel %vm724, %v1054, 0
    %v1059 = vsel %vm724, %v1056, 0
    %1061 = vmatprep.subr.mxu0 0.0
    %1062 = vmatpush1.msra.mxu0 0.0
    %1063 = vmatprep.subr.mxu0 0.0
    %1064 = vmatpush1.msra.mxu0 0.0
    %1065 = vmatprep.subr.mxu0 0.0
    %1066 = vmatpush1.msra.mxu0 0.0
    %1067 = vmatprep.subr.mxu0 0.0
    %1068 = vmatpush1.msra.mxu0 0.0
    %1069 = vmatprep.subr.mxu0 0.0
    %1070 = vmatpush1.msra.mxu0 0.0
    %1071 = vmatprep.subr.mxu0 0.0
    %1072 = vmatpush1.msra.mxu0 0.0
    %1073 = vmatprep.subr.mxu0 0.0
    %1074 = vmatpush1.msra.mxu0 0.0
    %1075 = vmatprep.subr.mxu0 0.0
    %1076 = vmatpush1.msra.mxu0 0.0
    %1077 = vmatprep.subr.mxu0 0.0
    %1078 = vmatpush1.msra.mxu0 0.0
    %1079 = vmatprep.subr.mxu0 0.0
    %1080 = vmatpush1.msra.mxu0 0.0
    %1081 = vmatprep.subr.mxu0 0.0
    %1082 = vmatpush1.msra.mxu0 0.0
    %1083 = vmatprep.subr.mxu0 0.0
    %1084 = vmatpush1.msra.mxu0 0.0
    %1085 = vmatprep.subr.mxu0 0.0
    %1086 = vmatpush1.msra.mxu0 0.0
    %1087 = vmatprep.subr.mxu0 0.0
    %1088 = vmatpush1.msra.mxu0 0.0
    %1089 = vmatprep.subr.mxu0 0.0
    %1090 = vmatpush1.msra.mxu0 0.0
    %1091 = vmatprep.subr.mxu0 %v1059
    %1092 = vmatpush1.msra.mxu0 %v1057
    %1093 = vmatprep.subr.mxu0 0.0
    %1094 = vmatpush2.msra.mxu0 0.0
    %1095 = vmatprep.subr.mxu0 0.0
    %1096 = vmatpush2.msra.mxu0 0.0
    %1097 = vmatprep.subr.mxu0 0.0
    %1098 = vmatpush2.msra.mxu0 0.0
    %1099 = vmatprep.subr.mxu0 0.0
    %1100 = vmatpush2.msra.mxu0 0.0
    %1101 = vmatprep.subr.mxu0 0.0
    %1102 = vmatpush2.msra.mxu0 0.0
    %1103 = vmatprep.subr.mxu0 0.0
    %1104 = vmatpush2.msra.mxu0 0.0
    %1105 = vmatprep.subr.mxu0 0.0
    %1106 = vmatpush2.msra.mxu0 0.0
    %1107 = vmatprep.subr.mxu0 0.0
    %1108 = vmatpush2.msra.mxu0 0.0
    %1109 = vmatprep.subr.mxu0 0.0
    %1110 = vmatpush2.msra.mxu0 0.0
    %1111 = vmatprep.subr.mxu0 0.0
    %1112 = vmatpush2.msra.mxu0 0.0
    %1113 = vmatprep.subr.mxu0 0.0
    %1114 = vmatpush2.msra.mxu0 0.0
    %1115 = vmatprep.subr.mxu0 0.0
    %1116 = vmatpush2.msra.mxu0 0.0
    %1117 = vmatprep.subr.mxu0 0.0
    %1118 = vmatpush2.msra.mxu0 0.0
    %1119 = vmatprep.subr.mxu0 0.0
    %1120 = vmatpush2.msra.mxu0 0.0
    %1121 = vmatprep.subr.mxu0 0.0
    %1122 = vmatpush2.msra.mxu0 0.0
    %1123 = vmatprep.subr.mxu0 0.0
    %1124 = vmatpush2.msra.mxu0 0.0
    %1125 = vmatprep.mubr.f32.mxu0 0.0
    %1126 = vmatmul.mubr.f32.gmra.mxu0 %v722
    %v1127 = vpop.f32.mrf.mxu0
    %v1128 = vadd.f32 0.0, %v1127
    %v1129 = vpop.f32.mrf.mxu0
    %v1130 = vadd.f32 0.0, %v1129
    %1131 = vdwg.mxu0
    %v1132 = vadd.f32 %v1050, %v1128
    %v1133 = vadd.f32 %v1052, %v1130
    %v1134 = vld [vmem:[#allocation11] sm:$0x3]
    %v1136 = vlaneseq
    %v1137 = vshrl.u32 %v1136, 7
    %v1138 = vsub.s32 0, %v1137
    %v1139 = vrot.slane %v1134, %v1138
    %v1140 = vlaneseq
    %v1141 = vshrl.u32 %v1140, 7
    %v1142 = vsub.s32 1, %v1141
    %v1143 = vrot.slane %v1134, %v1142
    %v1146 = vadd.f32 %v1132, %v1139
    %v1147 = vadd.f32 %v1133, %v1143
    %v1148 = vld [vmem:[#allocation13] sm:$0x3]
    %v1149 = vld [vmem:[#allocation14] sm:$0x3]
    %vm1150 = vcmask 1041408
    %v1151 = vsel %vm1150, %v1146, 0.0
    %vm1152 = vcmask 582656
    %v1153 = vsel %vm1152, %v1147, 0.0
    %v1154 = vadd.f32 %v1151, %v1153
    %1155 = vadd.xlane.f32.xlu0 %v1154
    %v1156 = vpop.xlane.xlu0 %1155
    %v1157 = vrcp.pop 200.0
    %v1158 = vmul.f32 %v1156, %v1157
    %v1159 = vsub.f32 %v1146, %v1158
    %v1160 = vsub.f32 %v1147, %v1158
    %v1161 = vmul.f32 %v1159, %v1159
    %v1162 = vmul.f32 %v1160, %v1160
    %v1163 = vsel %vm1150, %v1161, 0.0
    %v1164 = vsel %vm1152, %v1162, 0.0
    %v1165 = vadd.f32 %v1163, %v1164
    %1166 = vadd.xlane.f32.xlu0 %v1165
    %v1167 = vpop.xlane.xlu0 %1166
    %v1168 = vmul.f32 %v1167, %v1157
    %v1169 = vadd.f32 %v1168, 1e-05
    %v1170 = vrsqrt.pop %v1169
    %v1171 = vmul.f32 %v1159, %v1170
    %v1172 = vmul.f32 %v1160, %v1170
    %v1174 = vlaneseq
    %v1175 = vshrl.u32 %v1174, 7
    %v1176 = vsub.s32 0, %v1175
    %v1177 = vrot.slane %v1148, %v1176
    %v1178 = vlaneseq
    %v1179 = vshrl.u32 %v1178, 7
    %v1180 = vsub.s32 1, %v1179
    %v1181 = vrot.slane %v1148, %v1180
    %v1184 = vmul.f32 %v1171, %v1177
    %v1185 = vmul.f32 %v1172, %v1181
    %v1187 = vlaneseq
    %v1188 = vshrl.u32 %v1187, 7
    %v1189 = vsub.s32 0, %v1188
    %v1190 = vrot.slane %v1149, %v1189
    %v1191 = vlaneseq
    %v1192 = vshrl.u32 %v1191, 7
    %v1193 = vsub.s32 1, %v1192
    %v1194 = vrot.slane %v1149, %v1193
    %v1197 = vadd.f32 %v1184, %v1190
    %v1198 = vadd.f32 %v1185, %v1194
    %v1199 = vmul.f32 %v1197, 0.5
    %v1200 = vmul.f32 %v1198, 0.5
    %v1201 = vmul.f32 %v1197, 0.70710677
    %v1202 = vmul.f32 %v1198, 0.70710677
    %v1203 = verf.f32.pop %v1201
    %v1204 = verf.f32.pop %v1202
    %v1205 = vadd.f32 %v1203, 1.0
    %v1206 = vadd.f32 %v1204, 1.0
    %v1207 = vmul.f32 %v1199, %v1205
    %v1208 = vmul.f32 %v1200, %v1206
    %v1209 = vld [vmem:[%s41] sm:$0xff]
    %v1210 = vld [vmem:[%s41 + $0x8] sm:$0xff]
    %v1211 = vld [vmem:[%s41 + $0x10] sm:$0xff]
    %v1212 = vld [vmem:[%s41 + $0x18] sm:$0xff]
    %v1213 = vld [vmem:[%s41 + $0x20] sm:$0xff]
    %v1214 = vld [vmem:[%s41 + $0x28] sm:$0xff]
    %v1215 = vld [vmem:[%s41 + $0x30] sm:$0xff]
    %v1216 = vld [vmem:[%s41 + $0x38] sm:$0xff]
    %v1217 = vld [vmem:[%s41 + $0x40] sm:$0xff]
    %v1218 = vld [vmem:[%s41 + $0x48] sm:$0xff]
    %v1219 = vld [vmem:[%s41 + $0x50] sm:$0xff]
    %v1220 = vld [vmem:[%s41 + $0x58] sm:$0xff]
    %v1221 = vld [vmem:[%s41 + $0x60] sm:$0xff]
    %v1222 = vld [vmem:[%s41 + $0x68] sm:$0xff]
    %v1223 = vld [vmem:[%s41 + $0x70] sm:$0xff]
    %v1224 = vld [vmem:[%s41 + $0x78] sm:$0xff]
    %v1225 = vld [vmem:[%s41 + $0x80] sm:$0xff]
    %v1226 = vld [vmem:[%s41 + $0x88] sm:$0xff]
    %v1227 = vld [vmem:[%s41 + $0x90] sm:$0xff]
    %v1228 = vld [vmem:[%s41 + $0x98] sm:$0xff]
    %v1229 = vld [vmem:[%s41 + $0xa0] sm:$0xff]
    %v1230 = vld [vmem:[%s41 + $0xa8] sm:$0xff]
    %v1231 = vld [vmem:[%s41 + $0xb0] sm:$0xff]
    %v1232 = vld [vmem:[%s41 + $0xb8] sm:$0xff]
    %v1233 = vld [vmem:[%s41 + $0xc0] sm:$0xff]
    %v1234 = vld [vmem:[#allocation16] sm:$0x1]
    %v1236 = vlaneseq
    %v1237 = vshrl.u32 %v1236, 7
    %v1238 = vsub.s32 0, %v1237
    %v1239 = vrot.slane %v1234, %v1238
    %vm1241 = vcmask 588800
    %v1243 = vsel %vm1241, %v1208, 0
    %1245 = vmatprep.subr.mxu0 0.0
    %1246 = vmatpush1.msra.mxu0 %v1224
    %1247 = vmatprep.subr.mxu0 0.0
    %1248 = vmatpush1.msra.mxu0 %v1223
    %1249 = vmatprep.subr.mxu0 0.0
    %1250 = vmatpush1.msra.mxu0 %v1222
    %1251 = vmatprep.subr.mxu0 0.0
    %1252 = vmatpush1.msra.mxu0 %v1221
    %1253 = vmatprep.subr.mxu0 0.0
    %1254 = vmatpush1.msra.mxu0 %v1220
    %1255 = vmatprep.subr.mxu0 0.0
    %1256 = vmatpush1.msra.mxu0 %v1219
    %1257 = vmatprep.subr.mxu0 0.0
    %1258 = vmatpush1.msra.mxu0 %v1218
    %1259 = vmatprep.subr.mxu0 0.0
    %1260 = vmatpush1.msra.mxu0 %v1217
    %1261 = vmatprep.subr.mxu0 0.0
    %1262 = vmatpush1.msra.mxu0 %v1216
    %1263 = vmatprep.subr.mxu0 0.0
    %1264 = vmatpush1.msra.mxu0 %v1215
    %1265 = vmatprep.subr.mxu0 0.0
    %1266 = vmatpush1.msra.mxu0 %v1214
    %1267 = vmatprep.subr.mxu0 0.0
    %1268 = vmatpush1.msra.mxu0 %v1213
    %1269 = vmatprep.subr.mxu0 0.0
    %1270 = vmatpush1.msra.mxu0 %v1212
    %1271 = vmatprep.subr.mxu0 0.0
    %1272 = vmatpush1.msra.mxu0 %v1211
    %1273 = vmatprep.subr.mxu0 0.0
    %1274 = vmatpush1.msra.mxu0 %v1210
    %1275 = vmatprep.subr.mxu0 0.0
    %1276 = vmatpush1.msra.mxu0 %v1209
    %1277 = vmatprep.subr.mxu0 0.0
    %1278 = vmatpush2.msra.mxu0 0.0
    %1279 = vmatprep.subr.mxu0 0.0
    %1280 = vmatpush2.msra.mxu0 0.0
    %1281 = vmatprep.subr.mxu0 0.0
    %1282 = vmatpush2.msra.mxu0 0.0
    %1283 = vmatprep.subr.mxu0 0.0
    %1284 = vmatpush2.msra.mxu0 0.0
    %1285 = vmatprep.subr.mxu0 0.0
    %1286 = vmatpush2.msra.mxu0 0.0
    %1287 = vmatprep.subr.mxu0 0.0
    %1288 = vmatpush2.msra.mxu0 0.0
    %1289 = vmatprep.subr.mxu0 0.0
    %1290 = vmatpush2.msra.mxu0 0.0
    %1291 = vmatprep.subr.mxu0 0.0
    %1292 = vmatpush2.msra.mxu0 %v1233
    %1293 = vmatprep.subr.mxu0 0.0
    %1294 = vmatpush2.msra.mxu0 %v1232
    %1295 = vmatprep.subr.mxu0 0.0
    %1296 = vmatpush2.msra.mxu0 %v1231
    %1297 = vmatprep.subr.mxu0 0.0
    %1298 = vmatpush2.msra.mxu0 %v1230
    %1299 = vmatprep.subr.mxu0 0.0
    %1300 = vmatpush2.msra.mxu0 %v1229
    %1301 = vmatprep.subr.mxu0 0.0
    %1302 = vmatpush2.msra.mxu0 %v1228
    %1303 = vmatprep.subr.mxu0 0.0
    %1304 = vmatpush2.msra.mxu0 %v1227
    %1305 = vmatprep.subr.mxu0 0.0
    %1306 = vmatpush2.msra.mxu0 %v1226
    %1307 = vmatprep.subr.mxu0 0.0
    %1308 = vmatpush2.msra.mxu0 %v1225
    %1309 = vmatprep.mubr.f32.mxu0 %v1243
    %1310 = vmatmul.mubr.f32.gmra.mxu0 %v1207
    %v1311 = vpop.f32.mrf.mxu0
    %v1312 = vadd.f32 %v1239, %v1311
    %v1313 = vpop.f32.mrf.mxu0
    %1314 = vdwg.mxu0
    %v1315 = vld [vmem:[#allocation17] sm:$0x1]
    %v1316 = vld [vmem:[#allocation19] sm:$0x1]
    %vm1317 = vcmask 812032
    %v1318 = vsel %vm1317, %v1312, 0.0
    %1319 = vadd.xlane.f32.xlu0 %v1318
    %v1320 = vpop.xlane.xlu0 %1319
    %v1321 = vrcp.pop 100.0
    %v1322 = vmul.f32 %v1320, %v1321
    %v1323 = vsub.f32 %v1312, %v1322
    %v1324 = vmul.f32 %v1323, %v1323
    %v1325 = vsel %vm1317, %v1324, 0.0
    %1326 = vadd.xlane.f32.xlu0 %v1325
    %v1327 = vpop.xlane.xlu0 %1326
    %v1328 = vmul.f32 %v1327, %v1321
    %v1329 = vadd.f32 %v1328, 1e-05
    %v1330 = vrsqrt.pop %v1329
    %v1331 = vmul.f32 %v1323, %v1330
    %v1333 = vlaneseq
    %v1334 = vshrl.u32 %v1333, 7
    %v1335 = vsub.s32 0, %v1334
    %v1336 = vrot.slane %v1315, %v1335
    %v1338 = vmul.f32 %v1331, %v1336
    %v1340 = vlaneseq
    %v1341 = vshrl.u32 %v1340, 7
    %v1342 = vsub.s32 0, %v1341
    %v1343 = vrot.slane %v1316, %v1342
    %v1345 = vadd.f32 %v1338, %v1343
    %v1346 = vmul.f32 %v1345, 0.5
    %v1347 = vmul.f32 %v1345, 0.70710677
    %v1348 = verf.f32.pop %v1347
    %v1349 = vadd.f32 %v1348, 1.0
    %v1350 = vmul.f32 %v1346, %v1349
    %v1351 = vld [vmem:[%s49] sm:$0xff]
    %v1352 = vld [vmem:[%s49 + $0x8] sm:$0xff]
    %v1353 = vld [vmem:[%s49 + $0x10] sm:$0xff]
    %v1354 = vld [vmem:[%s49 + $0x18] sm:$0xff]
    %v1355 = vld [vmem:[%s49 + $0x20] sm:$0xff]
    %v1356 = vld [vmem:[%s49 + $0x28] sm:$0xff]
    %v1357 = vld [vmem:[%s49 + $0x30] sm:$0xff]
    %v1358 = vld [vmem:[%s49 + $0x38] sm:$0xff]
    %v1359 = vld [vmem:[%s49 + $0x40] sm:$0xff]
    %v1360 = vld [vmem:[%s49 + $0x48] sm:$0xff]
    %v1361 = vld [vmem:[%s49 + $0x50] sm:$0xff]
    %v1362 = vld [vmem:[%s49 + $0x58] sm:$0xff]
    %v1363 = vld [vmem:[%s49 + $0x60] sm:$0xf]
    %v1364 = vld [vmem:[#allocation20] sm:$0x1]
    %v1366 = vlaneseq
    %v1367 = vshrl.u32 %v1366, 7
    %v1368 = vsub.s32 0, %v1367
    %v1369 = vrot.slane %v1364, %v1368
    %vm1371 = vcmask 818176
    %v1373 = vsel %vm1371, %v1350, 0
    %v1376 = vsel %vm724, %v1363, 0
    %1378 = vmatprep.subr.mxu0 0.0
    %1379 = vmatpush1.msra.mxu0 0.0
    %1380 = vmatprep.subr.mxu0 0.0
    %1381 = vmatpush1.msra.mxu0 0.0
    %1382 = vmatprep.subr.mxu0 0.0
    %1383 = vmatpush1.msra.mxu0 0.0
    %1384 = vmatprep.subr.mxu0 0.0
    %1385 = vmatpush1.msra.mxu0 %v1376
    %1386 = vmatprep.subr.mxu0 0.0
    %1387 = vmatpush1.msra.mxu0 %v1362
    %1388 = vmatprep.subr.mxu0 0.0
    %1389 = vmatpush1.msra.mxu0 %v1361
    %1390 = vmatprep.subr.mxu0 0.0
    %1391 = vmatpush1.msra.mxu0 %v1360
    %1392 = vmatprep.subr.mxu0 0.0
    %1393 = vmatpush1.msra.mxu0 %v1359
    %1394 = vmatprep.subr.mxu0 0.0
    %1395 = vmatpush1.msra.mxu0 %v1358
    %1396 = vmatprep.subr.mxu0 0.0
    %1397 = vmatpush1.msra.mxu0 %v1357
    %1398 = vmatprep.subr.mxu0 0.0
    %1399 = vmatpush1.msra.mxu0 %v1356
    %1400 = vmatprep.subr.mxu0 0.0
    %1401 = vmatpush1.msra.mxu0 %v1355
    %1402 = vmatprep.subr.mxu0 0.0
    %1403 = vmatpush1.msra.mxu0 %v1354
    %1404 = vmatprep.subr.mxu0 0.0
    %1405 = vmatpush1.msra.mxu0 %v1353
    %1406 = vmatprep.subr.mxu0 0.0
    %1407 = vmatpush1.msra.mxu0 %v1352
    %1408 = vmatprep.subr.mxu0 0.0
    %1409 = vmatpush1.msra.mxu0 %v1351
    %1410 = vmatprep.subr.mxu0 0.0
    %1411 = vmatpush2.msra.mxu0 0.0
    %1412 = vmatprep.subr.mxu0 0.0
    %1413 = vmatpush2.msra.mxu0 0.0
    %1414 = vmatprep.subr.mxu0 0.0
    %1415 = vmatpush2.msra.mxu0 0.0
    %1416 = vmatprep.subr.mxu0 0.0
    %1417 = vmatpush2.msra.mxu0 0.0
    %1418 = vmatprep.subr.mxu0 0.0
    %1419 = vmatpush2.msra.mxu0 0.0
    %1420 = vmatprep.subr.mxu0 0.0
    %1421 = vmatpush2.msra.mxu0 0.0
    %1422 = vmatprep.subr.mxu0 0.0
    %1423 = vmatpush2.msra.mxu0 0.0
    %1424 = vmatprep.subr.mxu0 0.0
    %1425 = vmatpush2.msra.mxu0 0.0
    %1426 = vmatprep.subr.mxu0 0.0
    %1427 = vmatpush2.msra.mxu0 0.0
    %1428 = vmatprep.subr.mxu0 0.0
    %1429 = vmatpush2.msra.mxu0 0.0
    %1430 = vmatprep.subr.mxu0 0.0
    %1431 = vmatpush2.msra.mxu0 0.0
    %1432 = vmatprep.subr.mxu0 0.0
    %1433 = vmatpush2.msra.mxu0 0.0
    %1434 = vmatprep.subr.mxu0 0.0
    %1435 = vmatpush2.msra.mxu0 0.0
    %1436 = vmatprep.subr.mxu0 0.0
    %1437 = vmatpush2.msra.mxu0 0.0
    %1438 = vmatprep.subr.mxu0 0.0
    %1439 = vmatpush2.msra.mxu0 0.0
    %1440 = vmatprep.subr.mxu0 0.0
    %1441 = vmatpush2.msra.mxu0 0.0
    %1442 = vmatprep.mubr.f32.mxu0 0.0
    %1443 = vmatmul.mubr.f32.gmra.mxu0 %v1373
    %v1444 = vpop.f32.mrf.mxu0
    %v1445 = vadd.f32 %v1369, %v1444
    %v1446 = vpop.f32.mrf.mxu0
    %1447 = vdwg.mxu0
    %v1448 = vld [vmem:[%s53] sm:$0xf]
    %v1450 = vsel %vm724, %v1448, 0
    %1452 = vmatprep.subr.mxu0 0.0
    %1453 = vmatpush1.msra.mxu0 0.0
    %1454 = vmatprep.subr.mxu0 0.0
    %1455 = vmatpush1.msra.mxu0 0.0
    %1456 = vmatprep.subr.mxu0 0.0
    %1457 = vmatpush1.msra.mxu0 0.0
    %1458 = vmatprep.subr.mxu0 0.0
    %1459 = vmatpush1.msra.mxu0 0.0
    %1460 = vmatprep.subr.mxu0 0.0
    %1461 = vmatpush1.msra.mxu0 0.0
    %1462 = vmatprep.subr.mxu0 0.0
    %1463 = vmatpush1.msra.mxu0 0.0
    %1464 = vmatprep.subr.mxu0 0.0
    %1465 = vmatpush1.msra.mxu0 0.0
    %1466 = vmatprep.subr.mxu0 0.0
    %1467 = vmatpush1.msra.mxu0 0.0
    %1468 = vmatprep.subr.mxu0 0.0
    %1469 = vmatpush1.msra.mxu0 0.0
    %1470 = vmatprep.subr.mxu0 0.0
    %1471 = vmatpush1.msra.mxu0 0.0
    %1472 = vmatprep.subr.mxu0 0.0
    %1473 = vmatpush1.msra.mxu0 0.0
    %1474 = vmatprep.subr.mxu0 0.0
    %1475 = vmatpush1.msra.mxu0 0.0
    %1476 = vmatprep.subr.mxu0 0.0
    %1477 = vmatpush1.msra.mxu0 0.0
    %1478 = vmatprep.subr.mxu0 0.0
    %1479 = vmatpush1.msra.mxu0 0.0
    %1480 = vmatprep.subr.mxu0 0.0
    %1481 = vmatpush1.msra.mxu0 0.0
    %1482 = vmatprep.subr.mxu0 0.0
    %1483 = vmatpush1.msra.mxu0 %v1450
    %1484 = vmatprep.subr.mxu0 0.0
    %1485 = vmatpush2.msra.mxu0 0.0
    %1486 = vmatprep.subr.mxu0 0.0
    %1487 = vmatpush2.msra.mxu0 0.0
    %1488 = vmatprep.subr.mxu0 0.0
    %1489 = vmatpush2.msra.mxu0 0.0
    %1490 = vmatprep.subr.mxu0 0.0
    %1491 = vmatpush2.msra.mxu0 0.0
    %1492 = vmatprep.subr.mxu0 0.0
    %1493 = vmatpush2.msra.mxu0 0.0
    %1494 = vmatprep.subr.mxu0 0.0
    %1495 = vmatpush2.msra.mxu0 0.0
    %1496 = vmatprep.subr.mxu0 0.0
    %1497 = vmatpush2.msra.mxu0 0.0
    %1498 = vmatprep.subr.mxu0 0.0
    %1499 = vmatpush2.msra.mxu0 0.0
    %1500 = vmatprep.subr.mxu0 0.0
    %1501 = vmatpush2.msra.mxu0 0.0
    %1502 = vmatprep.subr.mxu0 0.0
    %1503 = vmatpush2.msra.mxu0 0.0
    %1504 = vmatprep.subr.mxu0 0.0
    %1505 = vmatpush2.msra.mxu0 0.0
    %1506 = vmatprep.subr.mxu0 0.0
    %1507 = vmatpush2.msra.mxu0 0.0
    %1508 = vmatprep.subr.mxu0 0.0
    %1509 = vmatpush2.msra.mxu0 0.0
    %1510 = vmatprep.subr.mxu0 0.0
    %1511 = vmatpush2.msra.mxu0 0.0
    %1512 = vmatprep.subr.mxu0 0.0
    %1513 = vmatpush2.msra.mxu0 0.0
    %1514 = vmatprep.subr.mxu0 0.0
    %1515 = vmatpush2.msra.mxu0 0.0
    %1516 = vmatprep.mubr.f32.mxu0 0.0
    %1517 = vmatmul.mubr.f32.gmra.mxu0 %v722
    %v1518 = vpop.f32.mrf.mxu0
    %v1519 = vadd.f32 0.0, %v1518
    %v1520 = vpop.f32.mrf.mxu0
    %1521 = vdwg.mxu0
    %v1522 = vadd.f32 %v1445, %v1519
    %v1523 = vld [vmem:[%s55] sm:$0x3]
    %1525 = vset.pattern.permute.xlu0 0
    %1526 = vperm.xlu0 %1525, %v887
    %v1527 = vpop.permute.xlu0 %1526
    %v1529 = vmul.f32 %v1523, %v1527
    %v1530 = vadd.f32 %v1522, %v1529
    %vm1531 = vcmask 58368
    %1532 = vst.msk [vmem:[%s57] sm:$0x3] %vm1531, %v1530
    %v1533 = vsel %vm1531, %v1522, -inf
    %1534 = vmax.xlane.f32.xlu0 %v1533
    %v1535 = vpop.xlane.xlu0 %1534
    %v1536 = vsub.f32 %v1522, %v1535
    %v1537 = vmul.f32 %v1536, 1.442695
    %v1538 = vpow.pop %v1537
    %v1539 = vsel %vm1531, %v1538, 0.0
    %1540 = vadd.xlane.f32.xlu0 %v1539
    %v1541 = vpop.xlane.xlu0 %1540
    %v1542 = vrcp.pop %v1541
    %v1543 = vmul.f32 %v1538, %v1542
    %1544 = vst.msk [vmem:[%s59] sm:$0x3] %vm1531, %v1543
    // Predicated region
    $region162: #{branch_1_fun.1} parent=1 // pred_check
      _
    $region163: #{branch_1_fun.1} parent=1 // pred_check_branch
      %1546 = sbr.rel (0) target = $region165
    $region164: #{branch_1_fun.1} parent=1 // pred_region
      _
    $region165: #{branch_1_fun.1} parent=1 // pred_fallthru
      _
    // Predicated region
    $region166: #{branch_1_fun.1} parent=1 // pred_check
      _
    $region167: #{branch_1_fun.1} parent=1 // pred_check_branch
      %1548 = sbr.rel (0) target = $region169
    $region168: #{branch_1_fun.1} parent=1 // pred_region
      _
    $region169: #{branch_1_fun.1} parent=1 // pred_fallthru
      _
    // Predicated region
    $region170: #{branch_1_fun.1} parent=1 // pred_check
      _
    $region171: #{branch_1_fun.1} parent=1 // pred_check_branch
      %1550 = sbr.rel (0) target = $region173
    $region172: #{branch_1_fun.1} parent=1 // pred_region
      _
    $region173: #{branch_1_fun.1} parent=1 // pred_fallthru
      _
    // Predicated region
    $region174: #{branch_1_fun.1} parent=1 // pred_check
      _
    $region175: #{branch_1_fun.1} parent=1 // pred_check_branch
      %1552 = sbr.rel (0) target = $region177
    $region176: #{branch_1_fun.1} parent=1 // pred_region
      _
    $region177: #{branch_1_fun.1} parent=1 // pred_fallthru
      _
    %1553 = vsyncpa [#allocation4], 1
    %1554 = vsyncpa [#allocation6], 1
    %1555 = vsyncpa [#allocation9], 1
    %1556 = vsyncpa [#allocation12], 1
    %1557 = vsyncpa [#allocation15], 1
    %1558 = vsyncpa [#allocation18], 1
    %1559 = vsyncpa [#allocation21], 1

</llo_original>
